<compile_context>
chip_gen: v7x
topology: tpu7x:2x2x1
jax: 0.10.0
libtpu: 0.0.40
codegen_flags: <defaults>
</compile_context>

<pallas_src>
import functools

import jax
import jax.numpy as jnp
from jax.experimental import pallas as pl
from jax.experimental.pallas import tpu as pltpu

N_ATOMS = 51
V_MAX = 10
V_MIN = -10
DELTA_Z = (V_MAX - V_MIN) / (N_ATOMS - 1)

CPAD = 128                       # conv Cout padded to a full lane
A_PAD = 128                      # q-values padded to a full lane
_X_TILE_BYTES = 2 * 1024 * 1024  # target bf16 x-tile size per grid step
_VMEM_LIMIT = 48 * 1024 * 1024   # > v5e 16MiB default, < v7x 64MiB physical


def _round_up(v, m):
    return ((v + m - 1) // m) * m


def _pick_tm(k_dim):
    """Rows per M tile so the bf16 x tile is ~2 MiB; multiple of 128."""
    tm = (_X_TILE_BYTES // (2 * k_dim)) // 128 * 128
    return int(max(512, min(2048, tm)))


# ----------------------------------------------------------------------------
# Pallas kernel: X @ W + b, optional ReLU.  bf16 operands, f32 accumulate.
# M-tiled grid ("parallel"); K and N resident (small and 128-aligned here).
# ----------------------------------------------------------------------------
def _matmul_bias_kernel(x_ref, w_ref, b_ref, o_ref, *, relu):
    y = jnp.dot(x_ref[...], w_ref[...], preferred_element_type=jnp.float32)
    y = y + b_ref[...]
    if relu:
        y = jnp.maximum(y, 0.0)
    o_ref[...] = y.astype(o_ref.dtype)


def matmul_bias(x, w, b, *, relu, out_dtype=jnp.bfloat16):
    """x: (M, K) bf16, w: (K, N) bf16, b: (N,) f32 -> (M, N) out_dtype."""
    M, K = x.shape
    K2, N = w.shape
    assert K == K2, (K, K2)

    tm_cap = _pick_tm(K)
    tm = M if M <= tm_cap else tm_cap          # full block for small M
    grid_m = pl.cdiv(M, tm)                    # ragged edge masked by Pallas

    kern = functools.partial(_matmul_bias_kernel, relu=relu)
    return pl.pallas_call(
        kern,
        out_shape=jax.ShapeDtypeStruct((M, N), out_dtype),
        grid=(grid_m,),
        in_specs=[
            pl.BlockSpec((tm, K), lambda i: (i, 0)),
            # weight / bias blocks never change across the grid -> 1 buffer
            pl.BlockSpec((K, N), lambda i: (0, 0),
                         pipeline_mode=pl.Buffered(1)),
            pl.BlockSpec((1, N), lambda i: (0, 0),
                         pipeline_mode=pl.Buffered(1)),
        ],
        out_specs=pl.BlockSpec((tm, N), lambda i: (i, 0)),
        compiler_params=pltpu.CompilerParams(
            dimension_semantics=("parallel",),
            vmem_limit_bytes=_VMEM_LIMIT,
            # allow XLA to fuse the im2col patch / reshape producer into the
            # x operand instead of materializing the patches in HBM.
            allow_input_fusion=[True, False, False]),
        cost_estimate=pl.CostEstimate(
            flops=2 * M * K * N,
            transcendentals=0,
            bytes_accessed=2 * (M * K + K * N + M * N) + 4 * N),
    )(x, w, b.reshape(1, N))


# ----------------------------------------------------------------------------
# Pallas kernel: fused fc1(ReLU) + fc2 head + per-action softmax expectation.
# The q-values are computed on the (tm, 384) logits while still in VMEM via
# two small matmuls against constant selection/support matrices.
# ----------------------------------------------------------------------------
def _fc_head_kernel(x_ref, w1_ref, b1_ref, w2_ref, b2_ref, sn_ref, sd_ref,
                    logits_ref, q_ref):
    h = jnp.dot(x_ref[...], w1_ref[...], preferred_element_type=jnp.float32)
    h = jnp.maximum(h + b1_ref[...], 0.0).astype(jnp.bfloat16)
    y = jnp.dot(h, w2_ref[...], preferred_element_type=jnp.float32)
    y = y + b2_ref[...]
    logits_ref[...] = y

    # Softmax over atoms + expectation, fused (lane-dense (tm, A_PAD) output).
    # Padded logit columns are exactly 0 and have zero rows in sn/sd, so the
    # plain row max is a valid (>= per-action max) stabilizing shift.
    m = jnp.max(y, axis=-1, keepdims=True)
    e = jnp.exp(y - m)
    num = jnp.dot(e, sn_ref[...], preferred_element_type=jnp.float32)
    den = jnp.dot(e, sd_ref[...], preferred_element_type=jnp.float32)
    q_ref[...] = num / den


def fc_head(x, w1, b1, w2, b2, s_num, s_den):
    """x: (M, K1) bf16 -> (logits (M, N2) f32, q (M, A_PAD) f32)."""
    M, K1 = x.shape
    N1 = w1.shape[1]
    N2 = w2.shape[1]

    if M <= 16:
        tm = M                                        # single full block
    else:
        # >= 2 blocks so v7x's two TensorCores both get work; 16-row align
        # for bf16 sublane packing; cap so big batches still pipeline.
        tm = min(512, _round_up(pl.cdiv(M, 2), 16))
    grid_m = pl.cdiv(M, tm)

    const = lambda i: (0, 0)
    resident = dict(pipeline_mode=pl.Buffered(1))     # invariant across grid

    logits, q = pl.pallas_call(
        _fc_head_kernel,
        out_shape=(jax.ShapeDtypeStruct((M, N2), jnp.float32),
                   jax.ShapeDtypeStruct((M, A_PAD), jnp.float32)),
        grid=(grid_m,),
        in_specs=[
            pl.BlockSpec((tm, K1), lambda i: (i, 0)),
            pl.BlockSpec((K1, N1), const, **resident),
            pl.BlockSpec((1, N1), const, **resident),
            pl.BlockSpec((N1, N2), const, **resident),
            pl.BlockSpec((1, N2), const, **resident),
            pl.BlockSpec((N2, A_PAD), const, **resident),
            pl.BlockSpec((N2, A_PAD), const, **resident),
        ],
        out_specs=(pl.BlockSpec((tm, N2), lambda i: (i, 0)),
                   pl.BlockSpec((tm, A_PAD), lambda i: (i, 0))),
        compiler_params=pltpu.CompilerParams(
            dimension_semantics=("parallel",),
            vmem_limit_bytes=_VMEM_LIMIT),
        cost_estimate=pl.CostEstimate(
            flops=2 * M * (K1 * N1 + N1 * N2 + 2 * N2 * A_PAD),
            transcendentals=M * N2,
            bytes_accessed=2 * (M * K1 + K1 * N1 + N1 * N2)
            + 4 * (M * N2 + M * A_PAD + 2 * N2 * A_PAD + N1 + N2)),
    )(x, w1, b1.reshape(1, N1), w2, b2.reshape(1, N2), s_num, s_den)
    return logits, q


# ----------------------------------------------------------------------------
# Glue: NHWC patch extraction (single XLA op, bf16).  Output feature order is
# (Cin, kh, kw), matching torch's weight.view(Cout, -1).
# ----------------------------------------------------------------------------
def conv2d_pallas(x_nhwc, wmat, b, k, stride, *, relu=True):
    n = x_nhwc.shape[0]
    patches = jax.lax.conv_general_dilated_patches(
        x_nhwc, filter_shape=(k, k), window_strides=(stride, stride),
        padding="VALID", dimension_numbers=("NHWC", "HWIO", "NHWC"))
    _, ho, wo, kk = patches.shape                      # kk == Cin * k * k
    cols = patches.reshape(n * ho * wo, kk)            # free row-major reshape
    y = matmul_bias(cols, wmat, b, relu=relu)          # bf16 out, Cout on lanes
    return y.reshape(n, ho, wo, wmat.shape[1])         # stays NHWC


# ----------------------------------------------------------------------------
# Parameter construction (deterministic, PyTorch-style uniform fan-in init).
# PyTorch layouts: conv w (Cout, Cin, k, k); linear w stored as (in, out).
# ----------------------------------------------------------------------------
def init_params(key, input_shape, n_actions, conv_out_size):
    c_in = input_shape[0]
    keys = jax.random.split(key, 10)

    def uinit(k, shape, fan_in):
        bound = 1.0 / float(fan_in) ** 0.5
        return jax.random.uniform(k, shape, jnp.float32, -bound, bound)

    return {
        "conv1_w": uinit(keys[0], (32, c_in, 8, 8), c_in * 8 * 8),
        "conv1_b": uinit(keys[1], (32,), c_in * 8 * 8),
        "conv2_w": uinit(keys[2], (64, 32, 4, 4), 32 * 4 * 4),
        "conv2_b": uinit(keys[3], (64,), 32 * 4 * 4),
        "conv3_w": uinit(keys[4], (64, 64, 3, 3), 64 * 3 * 3),
        "conv3_b": uinit(keys[5], (64,), 64 * 3 * 3),
        "fc1_w": uinit(keys[6], (conv_out_size, 512), conv_out_size),
        "fc1_b": uinit(keys[7], (512,), conv_out_size),
        "fc2_w": uinit(keys[8], (512, n_actions * N_ATOMS), 512),
        "fc2_b": uinit(keys[9], (n_actions * N_ATOMS,), 512),
    }


def _pad_cols(w, b, n_pad):
    n = w.shape[1]
    if n_pad == n:
        return w, b
    return jnp.pad(w, ((0, 0), (0, n_pad - n))), jnp.pad(b, (0, n_pad - n))


def _support_mats(n_out, n_out_pad):
    """Constant (n_out_pad, A_PAD) matrices: column c of the fc2 output maps
    to action c // 51 with support value supports[c % 51] (zero for pad)."""
    supports = jnp.linspace(V_MIN, V_MAX, N_ATOMS, dtype=jnp.float32)
    col = jnp.arange(n_out_pad)
    onehot = ((col[:, None] // N_ATOMS) == jnp.arange(A_PAD)[None, :]) \
        & (col[:, None] < n_out)
    s_den = onehot.astype(jnp.float32)
    s_num = s_den * supports[col % N_ATOMS][:, None]
    return s_num, s_den


def prep_params(params, input_shape):
    """One-time layout prep: (Cin,kh,kw)-ordered bf16 matmul weights, Cout
    padded to 128 (carried through the net), 1/255 folded into conv1, fc1 rows
    permuted for the NHWC flatten, fc2 N padded to 384, q-value support mats."""
    c_in, h_in, w_in = input_shape
    oh1, ow1 = (h_in - 8) // 4 + 1, (w_in - 8) // 4 + 1
    oh2, ow2 = (oh1 - 4) // 2 + 1, (ow1 - 4) // 2 + 1
    oh3, ow3 = (oh2 - 3) // 1 + 1, (ow2 - 3) // 1 + 1

    def conv_wmat(w, cin_pad):
        cout, cin, k, _ = w.shape
        wt = jnp.transpose(w, (1, 2, 3, 0))                    # (cin, k, k, cout)
        wt = jnp.pad(wt, ((0, cin_pad - cin), (0, 0), (0, 0), (0, 0)))
        return wt.reshape(cin_pad * k * k, cout)               # rows = (cin,kh,kw)

    w1m = conv_wmat(params["conv1_w"], c_in) * (1.0 / 255.0)   # fold /255
    w1m, b1 = _pad_cols(w1m, params["conv1_b"], CPAD)
    w2m, b2 = _pad_cols(conv_wmat(params["conv2_w"], CPAD),
                        params["conv2_b"], CPAD)
    w3m, b3 = _pad_cols(conv_wmat(params["conv3_w"], CPAD),
                        params["conv3_b"], CPAD)

    # fc1: rows ordered (c, h, w) for torch's NCHW flatten -> reorder (h, w, c_pad).
    fc1_w = params["fc1_w"]
    n_hidden = fc1_w.shape[1]
    fc1_r = fc1_w.reshape(64, oh3, ow3, n_hidden).transpose(1, 2, 0, 3)
    fc1_r = jnp.pad(fc1_r, ((0, 0), (0, 0), (0, CPAD - 64), (0, 0)))
    fc1_wp = fc1_r.reshape(oh3 * ow3 * CPAD, n_hidden)

    n_out = int(params["fc2_w"].shape[1])
    n_out_pad = _round_up(n_out, 128)
    fc2_wp, fc2_bp = _pad_cols(params["fc2_w"], params["fc2_b"], n_out_pad)

    n_actions = n_out // N_ATOMS
    assert n_actions <= A_PAD
    s_num, s_den = _support_mats(n_out, n_out_pad)

    bf = jnp.bfloat16
    return {
        "conv1": (w1m.astype(bf), b1),
        "conv2": (w2m.astype(bf), b2),
        "conv3": (w3m.astype(bf), b3),
        "fc1": (fc1_wp.astype(bf), params["fc1_b"]),
        "fc2": (fc2_wp.astype(bf), fc2_bp),
        "s_num": s_num, "s_den": s_den,
        "n_out": n_out, "n_actions": n_actions,     # python ints (static)
    }


# ----------------------------------------------------------------------------
# Forward pass (== DistributionalDQN.forward / .both / .qvals)
# ----------------------------------------------------------------------------
def _network(prep, x):
    batch = x.shape[0]
    # One transpose of the raw uint8 input; uint8 is exact in bf16.
    h = jnp.transpose(x, (0, 2, 3, 1)).astype(jnp.bfloat16)
    h = conv2d_pallas(h, *prep["conv1"], k=8, stride=4)
    h = conv2d_pallas(h, *prep["conv2"], k=4, stride=2)
    h = conv2d_pallas(h, *prep["conv3"], k=3, stride=1)
    h = h.reshape(batch, -1)                  # NHWC flatten (fc1 rows match)
    logits_pad, q_pad = fc_head(h, *prep["fc1"], *prep["fc2"],
                                prep["s_num"], prep["s_den"])
    cat_out = logits_pad[:, :prep["n_out"]].reshape(
        batch, prep["n_actions"], N_ATOMS)
    q = q_pad[:, :prep["n_actions"]]
    return cat_out, q


def distributional_dqn_forward(prep, x):
    """== DistributionalDQN.forward: (batch, n_actions, N_ATOMS) logits."""
    return _network(prep, x)[0]


def dqn_both(prep, x):
    """== DistributionalDQN.both: (cat_out, q-values)."""
    return _network(prep, x)


def qvals(prep, x):
    """== DistributionalDQN.qvals."""
    return _network(prep, x)[1]


# ----------------------------------------------------------------------------
# Plain-JAX reference of the PyTorch forward (for in-script validation).
# ----------------------------------------------------------------------------
def reference_forward(params, x):
    hi = jax.lax.Precision.HIGHEST
    fx = x.astype(jnp.float32) / 255.0

    def conv(h, w, b, s):
        y = jax.lax.conv_general_dilated(
            h, w, (s, s), "VALID",
            dimension_numbers=("NCHW", "OIHW", "NCHW"), precision=hi)
        return jnp.maximum(y + b[None, :, None, None], 0.0)

    h = conv(fx, params["conv1_w"], params["conv1_b"], 4)
    h = conv(h, params["conv2_w"], params["conv2_b"], 2)
    h = conv(h, params["conv3_w"], params["conv3_b"], 1)
    h = h.reshape(x.shape[0], -1)
    h = jnp.maximum(jnp.dot(h, params["fc1_w"], precision=hi) + params["fc1_b"], 0.0)
    out = jnp.dot(h, params["fc2_w"], precision=hi) + params["fc2_b"]
    return out.reshape(x.shape[0], -1, N_ATOMS)


if __name__ == "__main__":
    # Small-but-valid shapes: the conv stack needs H, W >= 36.
    input_shape = (4, 36, 36)     # (C, H, W), like the PyTorch input_shape arg
    n_actions = 6
    batch = 2

    # conv output size exactly as _get_conv_out would compute it
    oh1 = (36 - 8) // 4 + 1       # 8
    oh2 = (oh1 - 4) // 2 + 1      # 3
    oh3 = (oh2 - 3) // 1 + 1      # 1
    conv_out_size = 64 * oh3 * oh3

    key = jax.random.PRNGKey(0)
    kx, kp = jax.random.split(key)
    x = jax.random.randint(kx, (batch,) + input_shape, 0, 256,
                           dtype=jnp.int32).astype(jnp.uint8)
    params = init_params(kp, input_shape, n_actions, conv_out_size)
    prep = prep_params(params, input_shape)
    supports = jnp.linspace(V_MIN, V_MAX, N_ATOMS, dtype=jnp.float32)

    fwd = jax.jit(lambda xx: distributional_dqn_forward(prep, xx))
    both_fn = jax.jit(lambda xx: dqn_both(prep, xx))

    cat_out = jax.block_until_ready(fwd(x))
    assert cat_out.shape == (batch, n_actions, N_ATOMS), cat_out.shape
    cat2, q = jax.block_until_ready(both_fn(x))
    assert q.shape == (batch, n_actions), q.shape

    # Validate against the plain-JAX f32 reference of the PyTorch module.
    # Tolerance reflects the bf16 MXU path through 5 matmuls.
    ref_cat = reference_forward(params, x)
    ref_q = jnp.sum(jax.nn.softmax(ref_cat, axis=-1) * supports, axis=-1)
    assert jnp.all(jnp.isfinite(cat_out)) and jnp.all(jnp.isfinite(q))
    assert jnp.allclose(cat_out, ref_cat, rtol=3e-2, atol=3e-2), \
        float(jnp.max(jnp.abs(cat_out - ref_cat)))
    assert jnp.allclose(q, ref_q, rtol=3e-2, atol=3e-2), \
        float(jnp.max(jnp.abs(q - ref_q)))

    print("KERNEL_OK")
</pallas_src>

<mosaic_0001>
module attributes {stable_mosaic.version = 11 : i64} {
  func.func @_matmul_bias_kernel(%arg0: i32, %arg1: memref<128x256xbf16, #tpu.memory_space<vmem>>, %arg2: memref<256x128xbf16, #tpu.memory_space<vmem>>, %arg3: memref<1x128xf32, #tpu.memory_space<vmem>>, %arg4: memref<128x128xbf16, #tpu.memory_space<vmem>>) attributes {dimension_semantics = [#tpu.dimension_semantics<parallel>], iteration_bounds = array<i64: 1>, scalar_prefetch = 0 : i64, scratch_operands = 0 : i64, tpu.core_type = #tpu.core_type<tc>, window_params = [{transform_indices = @transform_0, window_bounds = array<i64: 128, 256>}, {pipeline_mode = #tpu.pipeline_mode<synchronous>, transform_indices = @transform_1, window_bounds = array<i64: 256, 128>}, {pipeline_mode = #tpu.pipeline_mode<synchronous>, transform_indices = @transform_2, window_bounds = array<i64: 1, 128>}, {transform_indices = @transform_3, window_bounds = array<i64: 128, 128>}]} {
    %c0 = arith.constant 0 : index
    %c0_0 = arith.constant 0 : index
    %0 = vector.load %arg1[%c0, %c0_0] : memref<128x256xbf16, #tpu.memory_space<vmem>>, vector<128x256xbf16>
    %c0_1 = arith.constant 0 : index
    %c0_2 = arith.constant 0 : index
    %1 = vector.load %arg2[%c0_1, %c0_2] : memref<256x128xbf16, #tpu.memory_space<vmem>>, vector<256x128xbf16>
    %cst = arith.constant dense<0.000000e+00> : vector<128x128xf32>
    %2 = tpu.matmul %0, %1, %cst {dimension_numbers = #tpu.dot_dimension_numbers<[1], [0], [0], [1], [0, 0, 1, 1], [], []>} : vector<128x256xbf16>, vector<256x128xbf16>, vector<128x128xf32> -> vector<128x128xf32>
    %c0_3 = arith.constant 0 : index
    %c0_4 = arith.constant 0 : index
    %3 = vector.load %arg3[%c0_3, %c0_4] : memref<1x128xf32, #tpu.memory_space<vmem>>, vector<1x128xf32>
    %4 = vector.broadcast %3 : vector<1x128xf32> to vector<128x128xf32>
    %5 = arith.addf %2, %4 : vector<128x128xf32>
    %cst_5 = arith.constant 0.000000e+00 : f32
    %6 = vector.broadcast %cst_5 : f32 to vector<128x128xf32>
    %7 = arith.maximumf %5, %6 : vector<128x128xf32>
    %8 = arith.truncf %7 : vector<128x128xf32> to vector<128x128xbf16>
    %c0_6 = arith.constant 0 : index
    %c0_7 = arith.constant 0 : index
    %9 = vector.load %arg4[%c0_6, %c0_7] : memref<128x128xbf16, #tpu.memory_space<vmem>>, vector<128x128xbf16>
    tpu.vector_store %arg4[%c0_6, %c0_7], %8 {strides = array<i32>} : memref<128x128xbf16, #tpu.memory_space<vmem>>, vector<128x128xbf16>,
    return
  }
  func.func @transform_0(%arg0: i32) -> (i32, i32) {
    %c0_i32 = arith.constant 0 : i32
    %c0_i32_0 = arith.constant 0 : i32
    return %arg0, %c0_i32 : i32, i32
  }
  func.func @transform_1(%arg0: i32) -> (i32, i32) {
    %c0_i32 = arith.constant 0 : i32
    %c0_i32_0 = arith.constant 0 : i32
    %c0_i32_1 = arith.constant 0 : i32
    return %c0_i32, %c0_i32_0 : i32, i32
  }
  func.func @transform_2(%arg0: i32) -> (i32, i32) {
    %c0_i32 = arith.constant 0 : i32
    %c0_i32_0 = arith.constant 0 : i32
    %c0_i32_1 = arith.constant 0 : i32
    return %c0_i32, %c0_i32_0 : i32, i32
  }
  func.func @transform_3(%arg0: i32) -> (i32, i32) {
    %c0_i32 = arith.constant 0 : i32
    %c0_i32_0 = arith.constant 0 : i32
    return %arg0, %c0_i32 : i32, i32
  }
}

module attributes {stable_mosaic.version = 11 : i64} {
  func.func @_matmul_bias_kernel(%arg0: i32, %arg1: memref<18x2048xbf16, #tpu.memory_space<vmem>>, %arg2: memref<2048x128xbf16, #tpu.memory_space<vmem>>, %arg3: memref<1x128xf32, #tpu.memory_space<vmem>>, %arg4: memref<18x128xbf16, #tpu.memory_space<vmem>>) attributes {dimension_semantics = [#tpu.dimension_semantics<parallel>], iteration_bounds = array<i64: 1>, scalar_prefetch = 0 : i64, scratch_operands = 0 : i64, tpu.core_type = #tpu.core_type<tc>, window_params = [{transform_indices = @transform_0, window_bounds = array<i64: 18, 2048>}, {pipeline_mode = #tpu.pipeline_mode<synchronous>, transform_indices = @transform_1, window_bounds = array<i64: 2048, 128>}, {pipeline_mode = #tpu.pipeline_mode<synchronous>, transform_indices = @transform_2, window_bounds = array<i64: 1, 128>}, {transform_indices = @transform_3, window_bounds = array<i64: 18, 128>}]} {
    %c0 = arith.constant 0 : index
    %c0_0 = arith.constant 0 : index
    %0 = vector.load %arg1[%c0, %c0_0] : memref<18x2048xbf16, #tpu.memory_space<vmem>>, vector<18x2048xbf16>
    %c0_1 = arith.constant 0 : index
    %c0_2 = arith.constant 0 : index
    %1 = vector.load %arg2[%c0_1, %c0_2] : memref<2048x128xbf16, #tpu.memory_space<vmem>>, vector<2048x128xbf16>
    %cst = arith.constant dense<0.000000e+00> : vector<18x128xf32>
    %2 = tpu.matmul %0, %1, %cst {dimension_numbers = #tpu.dot_dimension_numbers<[1], [0], [0], [1], [0, 0, 1, 1], [], []>} : vector<18x2048xbf16>, vector<2048x128xbf16>, vector<18x128xf32> -> vector<18x128xf32>
    %c0_3 = arith.constant 0 : index
    %c0_4 = arith.constant 0 : index
    %3 = vector.load %arg3[%c0_3, %c0_4] : memref<1x128xf32, #tpu.memory_space<vmem>>, vector<1x128xf32>
    %4 = vector.broadcast %3 : vector<1x128xf32> to vector<18x128xf32>
    %5 = arith.addf %2, %4 : vector<18x128xf32>
    %cst_5 = arith.constant 0.000000e+00 : f32
    %6 = vector.broadcast %cst_5 : f32 to vector<18x128xf32>
    %7 = arith.maximumf %5, %6 : vector<18x128xf32>
    %8 = arith.truncf %7 : vector<18x128xf32> to vector<18x128xbf16>
    %c0_6 = arith.constant 0 : index
    %c0_7 = arith.constant 0 : index
    %9 = vector.load %arg4[%c0_6, %c0_7] : memref<18x128xbf16, #tpu.memory_space<vmem>>, vector<18x128xbf16>
    tpu.vector_store %arg4[%c0_6, %c0_7], %8 {strides = array<i32>} : memref<18x128xbf16, #tpu.memory_space<vmem>>, vector<18x128xbf16>,
    return
  }
  func.func @transform_0(%arg0: i32) -> (i32, i32) {
    %c0_i32 = arith.constant 0 : i32
    %c0_i32_0 = arith.constant 0 : i32
    return %arg0, %c0_i32 : i32, i32
  }
  func.func @transform_1(%arg0: i32) -> (i32, i32) {
    %c0_i32 = arith.constant 0 : i32
    %c0_i32_0 = arith.constant 0 : i32
    %c0_i32_1 = arith.constant 0 : i32
    return %c0_i32, %c0_i32_0 : i32, i32
  }
  func.func @transform_2(%arg0: i32) -> (i32, i32) {
    %c0_i32 = arith.constant 0 : i32
    %c0_i32_0 = arith.constant 0 : i32
    %c0_i32_1 = arith.constant 0 : i32
    return %c0_i32, %c0_i32_0 : i32, i32
  }
  func.func @transform_3(%arg0: i32) -> (i32, i32) {
    %c0_i32 = arith.constant 0 : i32
    %c0_i32_0 = arith.constant 0 : i32
    return %arg0, %c0_i32 : i32, i32
  }
}

module attributes {stable_mosaic.version = 11 : i64} {
  func.func @_matmul_bias_kernel(%arg0: i32, %arg1: memref<2x1152xbf16, #tpu.memory_space<vmem>>, %arg2: memref<1152x128xbf16, #tpu.memory_space<vmem>>, %arg3: memref<1x128xf32, #tpu.memory_space<vmem>>, %arg4: memref<2x128xbf16, #tpu.memory_space<vmem>>) attributes {dimension_semantics = [#tpu.dimension_semantics<parallel>], iteration_bounds = array<i64: 1>, scalar_prefetch = 0 : i64, scratch_operands = 0 : i64, tpu.core_type = #tpu.core_type<tc>, window_params = [{transform_indices = @transform_0, window_bounds = array<i64: 2, 1152>}, {pipeline_mode = #tpu.pipeline_mode<synchronous>, transform_indices = @transform_1, window_bounds = array<i64: 1152, 128>}, {pipeline_mode = #tpu.pipeline_mode<synchronous>, transform_indices = @transform_2, window_bounds = array<i64: 1, 128>}, {transform_indices = @transform_3, window_bounds = array<i64: 2, 128>}]} {
    %c0 = arith.constant 0 : index
    %c0_0 = arith.constant 0 : index
    %0 = vector.load %arg1[%c0, %c0_0] : memref<2x1152xbf16, #tpu.memory_space<vmem>>, vector<2x1152xbf16>
    %c0_1 = arith.constant 0 : index
    %c0_2 = arith.constant 0 : index
    %1 = vector.load %arg2[%c0_1, %c0_2] : memref<1152x128xbf16, #tpu.memory_space<vmem>>, vector<1152x128xbf16>
    %cst = arith.constant dense<0.000000e+00> : vector<2x128xf32>
    %2 = tpu.matmul %0, %1, %cst {dimension_numbers = #tpu.dot_dimension_numbers<[1], [0], [0], [1], [0, 0, 1, 1], [], []>} : vector<2x1152xbf16>, vector<1152x128xbf16>, vector<2x128xf32> -> vector<2x128xf32>
    %c0_3 = arith.constant 0 : index
    %c0_4 = arith.constant 0 : index
    %3 = vector.load %arg3[%c0_3, %c0_4] : memref<1x128xf32, #tpu.memory_space<vmem>>, vector<1x128xf32>
    %4 = vector.broadcast %3 : vector<1x128xf32> to vector<2x128xf32>
    %5 = arith.addf %2, %4 : vector<2x128xf32>
    %cst_5 = arith.constant 0.000000e+00 : f32
    %6 = vector.broadcast %cst_5 : f32 to vector<2x128xf32>
    %7 = arith.maximumf %5, %6 : vector<2x128xf32>
    %8 = arith.truncf %7 : vector<2x128xf32> to vector<2x128xbf16>
    %c0_6 = arith.constant 0 : index
    %c0_7 = arith.constant 0 : index
    %9 = vector.load %arg4[%c0_6, %c0_7] : memref<2x128xbf16, #tpu.memory_space<vmem>>, vector<2x128xbf16>
    tpu.vector_store %arg4[%c0_6, %c0_7], %8 {strides = array<i32>} : memref<2x128xbf16, #tpu.memory_space<vmem>>, vector<2x128xbf16>,
    return
  }
  func.func @transform_0(%arg0: i32) -> (i32, i32) {
    %c0_i32 = arith.constant 0 : i32
    %c0_i32_0 = arith.constant 0 : i32
    return %arg0, %c0_i32 : i32, i32
  }
  func.func @transform_1(%arg0: i32) -> (i32, i32) {
    %c0_i32 = arith.constant 0 : i32
    %c0_i32_0 = arith.constant 0 : i32
    %c0_i32_1 = arith.constant 0 : i32
    return %c0_i32, %c0_i32_0 : i32, i32
  }
  func.func @transform_2(%arg0: i32) -> (i32, i32) {
    %c0_i32 = arith.constant 0 : i32
    %c0_i32_0 = arith.constant 0 : i32
    %c0_i32_1 = arith.constant 0 : i32
    return %c0_i32, %c0_i32_0 : i32, i32
  }
  func.func @transform_3(%arg0: i32) -> (i32, i32) {
    %c0_i32 = arith.constant 0 : i32
    %c0_i32_0 = arith.constant 0 : i32
    return %arg0, %c0_i32 : i32, i32
  }
}

module attributes {stable_mosaic.version = 11 : i64} {
  func.func @_fc_head_kernel(%arg0: i32, %arg1: memref<2x128xbf16, #tpu.memory_space<vmem>>, %arg2: memref<128x512xbf16, #tpu.memory_space<vmem>>, %arg3: memref<1x512xf32, #tpu.memory_space<vmem>>, %arg4: memref<512x384xbf16, #tpu.memory_space<vmem>>, %arg5: memref<1x384xf32, #tpu.memory_space<vmem>>, %arg6: memref<384x128xf32, #tpu.memory_space<vmem>>, %arg7: memref<384x128xf32, #tpu.memory_space<vmem>>, %arg8: memref<2x384xf32, #tpu.memory_space<vmem>>, %arg9: memref<2x128xf32, #tpu.memory_space<vmem>>) attributes {dimension_semantics = [#tpu.dimension_semantics<parallel>], iteration_bounds = array<i64: 1>, scalar_prefetch = 0 : i64, scratch_operands = 0 : i64, tpu.core_type = #tpu.core_type<tc>, window_params = [{transform_indices = @transform_0, window_bounds = array<i64: 2, 128>}, {pipeline_mode = #tpu.pipeline_mode<synchronous>, transform_indices = @transform_1, window_bounds = array<i64: 128, 512>}, {pipeline_mode = #tpu.pipeline_mode<synchronous>, transform_indices = @transform_2, window_bounds = array<i64: 1, 512>}, {pipeline_mode = #tpu.pipeline_mode<synchronous>, transform_indices = @transform_3, window_bounds = array<i64: 512, 384>}, {pipeline_mode = #tpu.pipeline_mode<synchronous>, transform_indices = @transform_4, window_bounds = array<i64: 1, 384>}, {pipeline_mode = #tpu.pipeline_mode<synchronous>, transform_indices = @transform_5, window_bounds = array<i64: 384, 128>}, {pipeline_mode = #tpu.pipeline_mode<synchronous>, transform_indices = @transform_6, window_bounds = array<i64: 384, 128>}, {transform_indices = @transform_7, window_bounds = array<i64: 2, 384>}, {transform_indices = @transform_8, window_bounds = array<i64: 2, 128>}]} {
    %c0 = arith.constant 0 : index
    %c0_0 = arith.constant 0 : index
    %0 = vector.load %arg1[%c0, %c0_0] : memref<2x128xbf16, #tpu.memory_space<vmem>>, vector<2x128xbf16>
    %c0_1 = arith.constant 0 : index
    %c0_2 = arith.constant 0 : index
    %1 = vector.load %arg2[%c0_1, %c0_2] : memref<128x512xbf16, #tpu.memory_space<vmem>>, vector<128x512xbf16>
    %cst = arith.constant dense<0.000000e+00> : vector<2x512xf32>
    %2 = tpu.matmul %0, %1, %cst {dimension_numbers = #tpu.dot_dimension_numbers<[1], [0], [0], [1], [0, 0, 1, 1], [], []>} : vector<2x128xbf16>, vector<128x512xbf16>, vector<2x512xf32> -> vector<2x512xf32>
    %c0_3 = arith.constant 0 : index
    %c0_4 = arith.constant 0 : index
    %3 = vector.load %arg3[%c0_3, %c0_4] : memref<1x512xf32, #tpu.memory_space<vmem>>, vector<1x512xf32>
    %4 = vector.broadcast %3 : vector<1x512xf32> to vector<2x512xf32>
    %5 = arith.addf %2, %4 : vector<2x512xf32>
    %cst_5 = arith.constant 0.000000e+00 : f32
    %6 = vector.broadcast %cst_5 : f32 to vector<2x512xf32>
    %7 = arith.maximumf %5, %6 : vector<2x512xf32>
    %8 = arith.truncf %7 : vector<2x512xf32> to vector<2x512xbf16>
    %c0_6 = arith.constant 0 : index
    %c0_7 = arith.constant 0 : index
    %9 = vector.load %arg4[%c0_6, %c0_7] : memref<512x384xbf16, #tpu.memory_space<vmem>>, vector<512x384xbf16>
    %cst_8 = arith.constant dense<0.000000e+00> : vector<2x384xf32>
    %10 = tpu.matmul %8, %9, %cst_8 {dimension_numbers = #tpu.dot_dimension_numbers<[1], [0], [0], [1], [0, 0, 1, 1], [], []>} : vector<2x512xbf16>, vector<512x384xbf16>, vector<2x384xf32> -> vector<2x384xf32>
    %c0_9 = arith.constant 0 : index
    %c0_10 = arith.constant 0 : index
    %11 = vector.load %arg5[%c0_9, %c0_10] : memref<1x384xf32, #tpu.memory_space<vmem>>, vector<1x384xf32>
    %12 = vector.broadcast %11 : vector<1x384xf32> to vector<2x384xf32>
    %13 = arith.addf %10, %12 : vector<2x384xf32>
    %c0_11 = arith.constant 0 : index
    %c0_12 = arith.constant 0 : index
    %14 = vector.load %arg8[%c0_11, %c0_12] : memref<2x384xf32, #tpu.memory_space<vmem>>, vector<2x384xf32>
    tpu.vector_store %arg8[%c0_11, %c0_12], %13 {strides = array<i32>} : memref<2x384xf32, #tpu.memory_space<vmem>>, vector<2x384xf32>,
    %cst_13 = arith.constant dense<0xFF800000> : vector<2xf32>
    %15 = vector.multi_reduction <maximumf>, %13, %cst_13 [1] : vector<2x384xf32> to vector<2xf32>
    %16 = vector.shape_cast %15 : vector<2xf32> to vector<2x1xf32>
    %17 = vector.broadcast %16 : vector<2x1xf32> to vector<2x384xf32>
    %18 = arith.subf %13, %17 : vector<2x384xf32>
    %19 = math.exp %18 : vector<2x384xf32>
    %c0_14 = arith.constant 0 : index
    %c0_15 = arith.constant 0 : index
    %20 = vector.load %arg6[%c0_14, %c0_15] : memref<384x128xf32, #tpu.memory_space<vmem>>, vector<384x128xf32>
    %cst_16 = arith.constant dense<0.000000e+00> : vector<2x128xf32>
    %21 = tpu.matmul %19, %20, %cst_16 {dimension_numbers = #tpu.dot_dimension_numbers<[1], [0], [0], [1], [0, 0, 1, 1], [], []>} : vector<2x384xf32>, vector<384x128xf32>, vector<2x128xf32> -> vector<2x128xf32>
    %c0_17 = arith.constant 0 : index
    %c0_18 = arith.constant 0 : index
    %22 = vector.load %arg7[%c0_17, %c0_18] : memref<384x128xf32, #tpu.memory_space<vmem>>, vector<384x128xf32>
    %cst_19 = arith.constant dense<0.000000e+00> : vector<2x128xf32>
    %23 = tpu.matmul %19, %22, %cst_19 {dimension_numbers = #tpu.dot_dimension_numbers<[1], [0], [0], [1], [0, 0, 1, 1], [], []>} : vector<2x384xf32>, vector<384x128xf32>, vector<2x128xf32> -> vector<2x128xf32>
    %24 = arith.divf %21, %23 : vector<2x128xf32>
    %c0_20 = arith.constant 0 : index
    %c0_21 = arith.constant 0 : index
    %25 = vector.load %arg9[%c0_20, %c0_21] : memref<2x128xf32, #tpu.memory_space<vmem>>, vector<2x128xf32>
    tpu.vector_store %arg9[%c0_20, %c0_21], %24 {strides = array<i32>} : memref<2x128xf32, #tpu.memory_space<vmem>>, vector<2x128xf32>,
    return
  }
  func.func @transform_0(%arg0: i32) -> (i32, i32) {
    %c0_i32 = arith.constant 0 : i32
    %c0_i32_0 = arith.constant 0 : i32
    return %arg0, %c0_i32 : i32, i32
  }
  func.func @transform_1(%arg0: i32) -> (i32, i32) {
    %c0_i32 = arith.constant 0 : i32
    %c0_i32_0 = arith.constant 0 : i32
    %c0_i32_1 = arith.constant 0 : i32
    return %c0_i32, %c0_i32_0 : i32, i32
  }
  func.func @transform_2(%arg0: i32) -> (i32, i32) {
    %c0_i32 = arith.constant 0 : i32
    %c0_i32_0 = arith.constant 0 : i32
    %c0_i32_1 = arith.constant 0 : i32
    return %c0_i32, %c0_i32_0 : i32, i32
  }
  func.func @transform_3(%arg0: i32) -> (i32, i32) {
    %c0_i32 = arith.constant 0 : i32
    %c0_i32_0 = arith.constant 0 : i32
    %c0_i32_1 = arith.constant 0 : i32
    return %c0_i32, %c0_i32_0 : i32, i32
  }
  func.func @transform_4(%arg0: i32) -> (i32, i32) {
    %c0_i32 = arith.constant 0 : i32
    %c0_i32_0 = arith.constant 0 : i32
    %c0_i32_1 = arith.constant 0 : i32
    return %c0_i32, %c0_i32_0 : i32, i32
  }
  func.func @transform_5(%arg0: i32) -> (i32, i32) {
    %c0_i32 = arith.constant 0 : i32
    %c0_i32_0 = arith.constant 0 : i32
    %c0_i32_1 = arith.constant 0 : i32
    return %c0_i32, %c0_i32_0 : i32, i32
  }
  func.func @transform_6(%arg0: i32) -> (i32, i32) {
    %c0_i32 = arith.constant 0 : i32
    %c0_i32_0 = arith.constant 0 : i32
    %c0_i32_1 = arith.constant 0 : i32
    return %c0_i32, %c0_i32_0 : i32, i32
  }
  func.func @transform_7(%arg0: i32) -> (i32, i32) {
    %c0_i32 = arith.constant 0 : i32
    %c0_i32_0 = arith.constant 0 : i32
    return %arg0, %c0_i32 : i32, i32
  }
  func.func @transform_8(%arg0: i32) -> (i32, i32) {
    %c0_i32 = arith.constant 0 : i32
    %c0_i32_0 = arith.constant 0 : i32
    return %arg0, %c0_i32 : i32, i32
  }
}

</mosaic_0001>

<llo_original>
// kernel: _lambda_.4
$region0: #{_lambda_.4}
  #allocation0 [shape = 'u32[]', space=smem, size = 0x4, offset = 0x4, fixed_abs, tag = 'smem constant byte address 0x4 - core index']
  #allocation1 [shape = 'u32[144,128]{1,0:T(1,128)}', space=vmem, size = 0x12000, scoped, tag = 'internal scratch']
  %s0 = inlined_call_operand.vmem [shape: bf16[128,256], index: 0, kind: input, shape index: {}]
  %s1 = inlined_call_operand.vmem [shape: bf16[256,128], index: 1, kind: input, shape index: {}]
  %s2 = inlined_call_operand.vmem [shape: f32[1,128], index: 2, kind: input, shape index: {}]
  %s3 = inlined_call_operand.vmem [shape: bf16[128,128], index: 3, kind: output, shape index: {}]
  %s4 = sld [smem:[#allocation0]]
  $region22: #{_lambda_.4} parent=0
    _
  %s6 = ssub.s32 1, %s4
  %s7 = scalar_select 0, %s6, %s4
  // Predicated region
  $region2: #{_lambda_.4} parent=0 // pred_check
    _
  $region3: #{_lambda_.4} parent=0 // pred_check_branch
    %9 = sbr.rel (0) target = $region5
  $region4: #{_lambda_.4} parent=0 // pred_region
    _
  $region5: #{_lambda_.4} parent=0 // pred_fallthru
    _
  // Predicated region
  $region6: #{_lambda_.4} parent=0 // pred_check
    _
  $region7: #{_lambda_.4} parent=0 // pred_check_branch
    %11 = sbr.rel (0) target = $region9
  $region8: #{_lambda_.4} parent=0 // pred_region
    _
  $region9: #{_lambda_.4} parent=0 // pred_fallthru
    _
  // Predicated region
  $region10: #{_lambda_.4} parent=0 // pred_check
    _
  $region11: #{_lambda_.4} parent=0 // pred_check_branch
    %13 = sbr.rel (0) target = $region13
  $region12: #{_lambda_.4} parent=0 // pred_region
    _
  $region13: #{_lambda_.4} parent=0 // pred_fallthru
    _
  %v15 = vld [vmem:[%s0] sm:$0xff]
  %v16 = vld [vmem:[%s0 + $0x8] sm:$0xff]
  %v17 = vld [vmem:[%s0 + $0x10] sm:$0xff]
  %v18 = vld [vmem:[%s0 + $0x18] sm:$0xff]
  %v19 = vld [vmem:[%s0 + $0x20] sm:$0xff]
  %v20 = vld [vmem:[%s0 + $0x28] sm:$0xff]
  %v21 = vld [vmem:[%s0 + $0x30] sm:$0xff]
  %v22 = vld [vmem:[%s0 + $0x38] sm:$0xff]
  %v23 = vld [vmem:[%s0 + $0x40] sm:$0xff]
  %v24 = vld [vmem:[%s0 + $0x48] sm:$0xff]
  %v25 = vld [vmem:[%s0 + $0x50] sm:$0xff]
  %v26 = vld [vmem:[%s0 + $0x58] sm:$0xff]
  %v27 = vld [vmem:[%s0 + $0x60] sm:$0xff]
  %v28 = vld [vmem:[%s0 + $0x68] sm:$0xff]
  %v29 = vld [vmem:[%s0 + $0x70] sm:$0xff]
  %v30 = vld [vmem:[%s0 + $0x78] sm:$0xff]
  %v31 = vld [vmem:[%s1] sm:$0xf]
  %v32 = vld [vmem:[%s1 + $0x4] sm:$0xf]
  %v33 = vld [vmem:[%s1 + $0x8] sm:$0xf]
  %v34 = vld [vmem:[%s1 + $0xc] sm:$0xf]
  %v35 = vld [vmem:[%s1 + $0x10] sm:$0xf]
  %v36 = vld [vmem:[%s1 + $0x14] sm:$0xf]
  %v37 = vld [vmem:[%s1 + $0x18] sm:$0xf]
  %v38 = vld [vmem:[%s1 + $0x1c] sm:$0xf]
  %v39 = vld [vmem:[%s1 + $0x20] sm:$0xf]
  %v40 = vld [vmem:[%s1 + $0x24] sm:$0xf]
  %v41 = vld [vmem:[%s1 + $0x28] sm:$0xf]
  %v42 = vld [vmem:[%s1 + $0x2c] sm:$0xf]
  %v43 = vld [vmem:[%s1 + $0x30] sm:$0xf]
  %v44 = vld [vmem:[%s1 + $0x34] sm:$0xf]
  %v45 = vld [vmem:[%s1 + $0x38] sm:$0xf]
  %v46 = vld [vmem:[%s1 + $0x3c] sm:$0xf]
  %v47 = vld [vmem:[%s1 + $0x40] sm:$0xf]
  %v48 = vld [vmem:[%s1 + $0x44] sm:$0xf]
  %v49 = vld [vmem:[%s1 + $0x48] sm:$0xf]
  %v50 = vld [vmem:[%s1 + $0x4c] sm:$0xf]
  %v51 = vld [vmem:[%s1 + $0x50] sm:$0xf]
  %v52 = vld [vmem:[%s1 + $0x54] sm:$0xf]
  %v53 = vld [vmem:[%s1 + $0x58] sm:$0xf]
  %v54 = vld [vmem:[%s1 + $0x5c] sm:$0xf]
  %v55 = vld [vmem:[%s1 + $0x60] sm:$0xf]
  %v56 = vld [vmem:[%s1 + $0x64] sm:$0xf]
  %v57 = vld [vmem:[%s1 + $0x68] sm:$0xf]
  %v58 = vld [vmem:[%s1 + $0x6c] sm:$0xf]
  %v59 = vld [vmem:[%s1 + $0x70] sm:$0xf]
  %v60 = vld [vmem:[%s1 + $0x74] sm:$0xf]
  %v61 = vld [vmem:[%s1 + $0x78] sm:$0xf]
  %v62 = vld [vmem:[%s1 + $0x7c] sm:$0xf]
  %v63 = vld [vmem:[%s2] sm:$0x1]
  %v65 = vlaneseq
  %v66 = vshrl.u32 %v65, 7
  %v67 = vsub.s32 0, %v66
  %v68 = vrot.slane %v63, %v67
  %v86 = vunpack.c.l.b16 %v15
  %v87 = vunpack.c.h.b16 %v15
  %v88 = vunpack.c.l.b16 %v16
  %v89 = vunpack.c.h.b16 %v16
  %v90 = vunpack.c.l.b16 %v17
  %v91 = vunpack.c.h.b16 %v17
  %v92 = vunpack.c.l.b16 %v18
  %v93 = vunpack.c.h.b16 %v18
  %v94 = vunpack.c.l.b16 %v19
  %v95 = vunpack.c.h.b16 %v19
  %v96 = vunpack.c.l.b16 %v20
  %v97 = vunpack.c.h.b16 %v20
  %v98 = vunpack.c.l.b16 %v21
  %v99 = vunpack.c.h.b16 %v21
  %v100 = vunpack.c.l.b16 %v22
  %v101 = vunpack.c.h.b16 %v22
  %v102 = vunpack.c.l.b16 %v23
  %v103 = vunpack.c.h.b16 %v23
  %v104 = vunpack.c.l.b16 %v24
  %v105 = vunpack.c.h.b16 %v24
  %v106 = vunpack.c.l.b16 %v25
  %v107 = vunpack.c.h.b16 %v25
  %v108 = vunpack.c.l.b16 %v26
  %v109 = vunpack.c.h.b16 %v26
  %v110 = vunpack.c.l.b16 %v27
  %v111 = vunpack.c.h.b16 %v27
  %v112 = vunpack.c.l.b16 %v28
  %v113 = vunpack.c.h.b16 %v28
  %v114 = vunpack.c.l.b16 %v29
  %v115 = vunpack.c.h.b16 %v29
  %v116 = vunpack.c.l.b16 %v30
  %v117 = vunpack.c.h.b16 %v30
  %v118 = vpack.c.b16 %v88, %v86
  %v119 = vpack.c.b16 %v89, %v87
  %v120 = vpack.c.b16 %v92, %v90
  %v121 = vpack.c.b16 %v93, %v91
  %v122 = vpack.c.b16 %v96, %v94
  %v123 = vpack.c.b16 %v97, %v95
  %v124 = vpack.c.b16 %v100, %v98
  %v125 = vpack.c.b16 %v101, %v99
  %v126 = vpack.c.b16 %v104, %v102
  %v127 = vpack.c.b16 %v105, %v103
  %v128 = vpack.c.b16 %v108, %v106
  %v129 = vpack.c.b16 %v109, %v107
  %v130 = vpack.c.b16 %v112, %v110
  %v131 = vpack.c.b16 %v113, %v111
  %v132 = vpack.c.b16 %v116, %v114
  %v133 = vpack.c.b16 %v117, %v115
  %v182 = vunpack.c.l.b16 %v31
  %v183 = vunpack.c.l.b16 %v32
  %v184 = vunpack.c.l.b16 %v33
  %v185 = vunpack.c.l.b16 %v34
  %v186 = vunpack.c.l.b16 %v35
  %v187 = vunpack.c.l.b16 %v36
  %v188 = vunpack.c.l.b16 %v37
  %v189 = vunpack.c.l.b16 %v38
  %v190 = vunpack.c.l.b16 %v39
  %v191 = vunpack.c.l.b16 %v40
  %v192 = vunpack.c.l.b16 %v41
  %v193 = vunpack.c.l.b16 %v42
  %v194 = vunpack.c.l.b16 %v43
  %v195 = vunpack.c.l.b16 %v44
  %v196 = vunpack.c.l.b16 %v45
  %v197 = vunpack.c.l.b16 %v46
  %v198 = vunpack.c.l.b16 %v47
  %v199 = vunpack.c.l.b16 %v48
  %v200 = vunpack.c.l.b16 %v49
  %v201 = vunpack.c.l.b16 %v50
  %v202 = vunpack.c.l.b16 %v51
  %v203 = vunpack.c.l.b16 %v52
  %v204 = vunpack.c.l.b16 %v53
  %v205 = vunpack.c.l.b16 %v54
  %v206 = vunpack.c.l.b16 %v55
  %v207 = vunpack.c.l.b16 %v56
  %v208 = vunpack.c.l.b16 %v57
  %v209 = vunpack.c.l.b16 %v58
  %v210 = vunpack.c.l.b16 %v59
  %v211 = vunpack.c.l.b16 %v60
  %v212 = vunpack.c.l.b16 %v61
  %v213 = vunpack.c.l.b16 %v62
  %v214 = vpack.c.b16 %v183, %v182
  %v215 = vpack.c.b16 %v185, %v184
  %v216 = vpack.c.b16 %v187, %v186
  %v217 = vpack.c.b16 %v189, %v188
  %v218 = vpack.c.b16 %v191, %v190
  %v219 = vpack.c.b16 %v193, %v192
  %v220 = vpack.c.b16 %v195, %v194
  %v221 = vpack.c.b16 %v197, %v196
  %v222 = vpack.c.b16 %v199, %v198
  %v223 = vpack.c.b16 %v201, %v200
  %v224 = vpack.c.b16 %v203, %v202
  %v225 = vpack.c.b16 %v205, %v204
  %v226 = vpack.c.b16 %v207, %v206
  %v227 = vpack.c.b16 %v209, %v208
  %v228 = vpack.c.b16 %v211, %v210
  %v229 = vpack.c.b16 %v213, %v212
  %246 = vmatprep.subr.bf16.mxu0 0
  %247 = vmatpush1.bf16.msra.mxu0 %v214
  %248 = vmatprep.subr.bf16.mxu0 0
  %249 = vmatpush1.bf16.msra.mxu0 %v215
  %250 = vmatprep.subr.bf16.mxu0 0
  %251 = vmatpush1.bf16.msra.mxu0 %v216
  %252 = vmatprep.subr.bf16.mxu0 0
  %253 = vmatpush1.bf16.msra.mxu0 %v217
  %254 = vmatprep.subr.bf16.mxu0 0
  %255 = vmatpush1.bf16.msra.mxu0 %v218
  %256 = vmatprep.subr.bf16.mxu0 0
  %257 = vmatpush1.bf16.msra.mxu0 %v219
  %258 = vmatprep.subr.bf16.mxu0 0
  %259 = vmatpush1.bf16.msra.mxu0 %v220
  %260 = vmatprep.subr.bf16.mxu0 0
  %261 = vmatpush1.bf16.msra.mxu0 %v221
  %262 = vmatprep.subr.bf16.mxu0 0
  %263 = vmatpush1.bf16.msra.mxu0 %v222
  %264 = vmatprep.subr.bf16.mxu0 0
  %265 = vmatpush1.bf16.msra.mxu0 %v223
  %266 = vmatprep.subr.bf16.mxu0 0
  %267 = vmatpush1.bf16.msra.mxu0 %v224
  %268 = vmatprep.subr.bf16.mxu0 0
  %269 = vmatpush1.bf16.msra.mxu0 %v225
  %270 = vmatprep.subr.bf16.mxu0 0
  %271 = vmatpush1.bf16.msra.mxu0 %v226
  %272 = vmatprep.subr.bf16.mxu0 0
  %273 = vmatpush1.bf16.msra.mxu0 %v227
  %274 = vmatprep.subr.bf16.mxu0 0
  %275 = vmatpush1.bf16.msra.mxu0 %v228
  %276 = vmatprep.subr.bf16.mxu0 0
  %277 = vmatpush1.bf16.msra.mxu0 %v229
  %278 = vmatprep.mubr.bf16.mxu0 %v119
  %279 = vmatmul.mubr.bf16.gmra.mrb[0].mxu0 %v118
  %v280 = vpop.f32.mrb[0].mxu0
  %v281 = vadd.f32 %v68, %v280
  %v282 = vpop.f32.mrb[0].mxu0
  %v283 = vpop.f32.mrb[0].mxu0
  %v284 = vadd.f32 %v68, %v283
  %v285 = vpop.f32.mrb[0].mxu0
  %286 = vmatprep.mubr.bf16.mxu0 %v121
  %287 = vmatmul.mubr.bf16.gmra.mrb[0].mxu0 %v120
  %v288 = vpop.f32.mrb[0].mxu0
  %v289 = vadd.f32 %v68, %v288
  %v290 = vpop.f32.mrb[0].mxu0
  %v291 = vpop.f32.mrb[0].mxu0
  %v292 = vadd.f32 %v68, %v291
  %v293 = vpop.f32.mrb[0].mxu0
  %294 = vmatprep.mubr.bf16.mxu0 %v123
  %295 = vmatmul.mubr.bf16.gmra.mrb[0].mxu0 %v122
  %v296 = vpop.f32.mrb[0].mxu0
  %v297 = vadd.f32 %v68, %v296
  %v298 = vpop.f32.mrb[0].mxu0
  %v299 = vpop.f32.mrb[0].mxu0
  %v300 = vadd.f32 %v68, %v299
  %v301 = vpop.f32.mrb[0].mxu0
  %302 = vmatprep.mubr.bf16.mxu0 %v125
  %303 = vmatmul.mubr.bf16.gmra.mrb[0].mxu0 %v124
  %v304 = vpop.f32.mrb[0].mxu0
  %v305 = vadd.f32 %v68, %v304
  %v306 = vpop.f32.mrb[0].mxu0
  %v307 = vpop.f32.mrb[0].mxu0
  %v308 = vadd.f32 %v68, %v307
  %v309 = vpop.f32.mrb[0].mxu0
  %310 = vmatprep.mubr.bf16.mxu0 %v127
  %311 = vmatmul.mubr.bf16.gmra.mrb[0].mxu0 %v126
  %v312 = vpop.f32.mrb[0].mxu0
  %v313 = vadd.f32 %v68, %v312
  %v314 = vpop.f32.mrb[0].mxu0
  %v315 = vpop.f32.mrb[0].mxu0
  %v316 = vadd.f32 %v68, %v315
  %v317 = vpop.f32.mrb[0].mxu0
  %318 = vmatprep.mubr.bf16.mxu0 %v129
  %319 = vmatmul.mubr.bf16.gmra.mrb[0].mxu0 %v128
  %v320 = vpop.f32.mrb[0].mxu0
  %v321 = vadd.f32 %v68, %v320
  %v322 = vpop.f32.mrb[0].mxu0
  %v323 = vpop.f32.mrb[0].mxu0
  %v324 = vadd.f32 %v68, %v323
  %v325 = vpop.f32.mrb[0].mxu0
  %326 = vmatprep.mubr.bf16.mxu0 %v131
  %327 = vmatmul.mubr.bf16.gmra.mrb[0].mxu0 %v130
  %v328 = vpop.f32.mrb[0].mxu0
  %v329 = vadd.f32 %v68, %v328
  %v330 = vpop.f32.mrb[0].mxu0
  %v331 = vpop.f32.mrb[0].mxu0
  %v332 = vadd.f32 %v68, %v331
  %v333 = vpop.f32.mrb[0].mxu0
  %334 = vmatprep.mubr.bf16.mxu0 %v133
  %335 = vmatmul.mubr.bf16.gmra.mrb[0].mxu0 %v132
  %v336 = vpop.f32.mrb[0].mxu0
  %v337 = vadd.f32 %v68, %v336
  %v338 = vpop.f32.mrb[0].mxu0
  %v339 = vpop.f32.mrb[0].mxu0
  %v340 = vadd.f32 %v68, %v339
  %v341 = vpop.f32.mrb[0].mxu0
  %342 = vdwg.mxu0
  %v343 = vmax.f32 %v281, 0.0
  %v344 = vmax.f32 %v284, 0.0
  %v345 = vmax.f32 %v289, 0.0
  %v346 = vmax.f32 %v292, 0.0
  %v347 = vmax.f32 %v297, 0.0
  %v348 = vmax.f32 %v300, 0.0
  %v349 = vmax.f32 %v305, 0.0
  %v350 = vmax.f32 %v308, 0.0
  %v351 = vmax.f32 %v313, 0.0
  %v352 = vmax.f32 %v316, 0.0
  %v353 = vmax.f32 %v321, 0.0
  %v354 = vmax.f32 %v324, 0.0
  %v355 = vmax.f32 %v329, 0.0
  %v356 = vmax.f32 %v332, 0.0
  %v357 = vmax.f32 %v337, 0.0
  %v358 = vmax.f32 %v340, 0.0
  %v359 = vpack.c.bf16 %v344, %v343
  %v360 = vpack.c.bf16 %v346, %v345
  %v361 = vpack.c.bf16 %v348, %v347
  %v362 = vpack.c.bf16 %v350, %v349
  %v363 = vpack.c.bf16 %v352, %v351
  %v364 = vpack.c.bf16 %v354, %v353
  %v365 = vpack.c.bf16 %v356, %v355
  %v366 = vpack.c.bf16 %v358, %v357
  %v375 = vunpack.c.l.b16 %v359
  %v376 = vunpack.c.h.b16 %v359
  %v377 = vunpack.c.l.b16 %v360
  %v378 = vunpack.c.h.b16 %v360
  %v379 = vunpack.c.l.b16 %v361
  %v380 = vunpack.c.h.b16 %v361
  %v381 = vunpack.c.l.b16 %v362
  %v382 = vunpack.c.h.b16 %v362
  %v383 = vunpack.c.l.b16 %v363
  %v384 = vunpack.c.h.b16 %v363
  %v385 = vunpack.c.l.b16 %v364
  %v386 = vunpack.c.h.b16 %v364
  %v387 = vunpack.c.l.b16 %v365
  %v388 = vunpack.c.h.b16 %v365
  %v389 = vunpack.c.l.b16 %v366
  %v390 = vunpack.c.h.b16 %v366
  %v391 = vpack.c.b16 %v375, %v375
  %v392 = vpack.c.b16 %v376, %v376
  %v393 = vpack.c.b16 %v377, %v377
  %v394 = vpack.c.b16 %v378, %v378
  %v395 = vpack.c.b16 %v379, %v379
  %v396 = vpack.c.b16 %v380, %v380
  %v397 = vpack.c.b16 %v381, %v381
  %v398 = vpack.c.b16 %v382, %v382
  %v399 = vpack.c.b16 %v383, %v383
  %v400 = vpack.c.b16 %v384, %v384
  %v401 = vpack.c.b16 %v385, %v385
  %v402 = vpack.c.b16 %v386, %v386
  %v403 = vpack.c.b16 %v387, %v387
  %v404 = vpack.c.b16 %v388, %v388
  %v405 = vpack.c.b16 %v389, %v389
  %v406 = vpack.c.b16 %v390, %v390
  %423 = vst [vmem:[%s3] sm:$0xf] %v391
  %424 = vst [vmem:[%s3 + $0x4] sm:$0xf] %v392
  %425 = vst [vmem:[%s3 + $0x8] sm:$0xf] %v393
  %426 = vst [vmem:[%s3 + $0xc] sm:$0xf] %v394
  %427 = vst [vmem:[%s3 + $0x10] sm:$0xf] %v395
  %428 = vst [vmem:[%s3 + $0x14] sm:$0xf] %v396
  %429 = vst [vmem:[%s3 + $0x18] sm:$0xf] %v397
  %430 = vst [vmem:[%s3 + $0x1c] sm:$0xf] %v398
  %431 = vst [vmem:[%s3 + $0x20] sm:$0xf] %v399
  %432 = vst [vmem:[%s3 + $0x24] sm:$0xf] %v400
  %433 = vst [vmem:[%s3 + $0x28] sm:$0xf] %v401
  %434 = vst [vmem:[%s3 + $0x2c] sm:$0xf] %v402
  %435 = vst [vmem:[%s3 + $0x30] sm:$0xf] %v403
  %436 = vst [vmem:[%s3 + $0x34] sm:$0xf] %v404
  %437 = vst [vmem:[%s3 + $0x38] sm:$0xf] %v405
  %438 = vst [vmem:[%s3 + $0x3c] sm:$0xf] %v406
  // Predicated region
  $region14: #{_lambda_.4} parent=0 // pred_check
    _
  $region15: #{_lambda_.4} parent=0 // pred_check_branch
    %440 = sbr.rel (0) target = $region17
  $region16: #{_lambda_.4} parent=0 // pred_region
    _
  $region17: #{_lambda_.4} parent=0 // pred_fallthru
    _
  // Predicated region
  $region18: #{_lambda_.4} parent=0 // pred_check
    _
  $region19: #{_lambda_.4} parent=0 // pred_check_branch
    %442 = sbr.rel (0) target = $region21
  $region20: #{_lambda_.4} parent=0 // pred_region
    _
  $region21: #{_lambda_.4} parent=0 // pred_fallthru
    _

// kernel: _lambda_.5
$region0: #{_lambda_.5}
  #allocation0 [shape = 'u32[]', space=smem, size = 0x4, offset = 0x4, fixed_abs, tag = 'smem constant byte address 0x4 - core index']
  #allocation1 [shape = 'u32[144,128]{1,0:T(1,128)}', space=vmem, size = 0x12000, scoped, tag = 'internal scratch']
  %s0 = inlined_call_operand.vmem [shape: bf16[18,2048], index: 0, kind: input, shape index: {}]
  %s1 = inlined_call_operand.vmem [shape: bf16[2048,128], index: 1, kind: input, shape index: {}]
  %s2 = inlined_call_operand.vmem [shape: f32[1,128], index: 2, kind: input, shape index: {}]
  %s3 = inlined_call_operand.vmem [shape: bf16[18,128], index: 3, kind: output, shape index: {}]
  %s4 = sld [smem:[#allocation0]]
  $region22: #{_lambda_.5} parent=0
    _
  %s6 = ssub.s32 1, %s4
  %s7 = scalar_select 0, %s6, %s4
  // Predicated region
  $region2: #{_lambda_.5} parent=0 // pred_check
    _
  $region3: #{_lambda_.5} parent=0 // pred_check_branch
    %9 = sbr.rel (0) target = $region5
  $region4: #{_lambda_.5} parent=0 // pred_region
    _
  $region5: #{_lambda_.5} parent=0 // pred_fallthru
    _
  // Predicated region
  $region6: #{_lambda_.5} parent=0 // pred_check
    _
  $region7: #{_lambda_.5} parent=0 // pred_check_branch
    %11 = sbr.rel (0) target = $region9
  $region8: #{_lambda_.5} parent=0 // pred_region
    _
  $region9: #{_lambda_.5} parent=0 // pred_fallthru
    _
  // Predicated region
  $region10: #{_lambda_.5} parent=0 // pred_check
    _
  $region11: #{_lambda_.5} parent=0 // pred_check_branch
    %13 = sbr.rel (0) target = $region13
  $region12: #{_lambda_.5} parent=0 // pred_region
    _
  $region13: #{_lambda_.5} parent=0 // pred_fallthru
    _
  %v15 = vld [vmem:[%s0] sm:$0xff]
  %v16 = vld [vmem:[%s0 + $0x8] sm:$0xff]
  %v17 = vld [vmem:[%s0 + $0x10] sm:$0xff]
  %v18 = vld [vmem:[%s0 + $0x18] sm:$0xff]
  %v19 = vld [vmem:[%s0 + $0x20] sm:$0xff]
  %v20 = vld [vmem:[%s0 + $0x28] sm:$0xff]
  %v21 = vld [vmem:[%s0 + $0x30] sm:$0xff]
  %v22 = vld [vmem:[%s0 + $0x38] sm:$0xff]
  %v23 = vld [vmem:[%s0 + $0x40] sm:$0xff]
  %v24 = vld [vmem:[%s0 + $0x48] sm:$0xff]
  %v25 = vld [vmem:[%s0 + $0x50] sm:$0xff]
  %v26 = vld [vmem:[%s0 + $0x58] sm:$0xff]
  %v27 = vld [vmem:[%s0 + $0x60] sm:$0xff]
  %v28 = vld [vmem:[%s0 + $0x68] sm:$0xff]
  %v29 = vld [vmem:[%s0 + $0x70] sm:$0xff]
  %v30 = vld [vmem:[%s0 + $0x78] sm:$0xff]
  %v31 = vld [vmem:[%s0 + $0x80] sm:$0x11]
  %v32 = vld [vmem:[%s0 + $0x88] sm:$0x11]
  %v33 = vld [vmem:[%s0 + $0x90] sm:$0x11]
  %v34 = vld [vmem:[%s0 + $0x98] sm:$0x11]
  %v35 = vld [vmem:[%s0 + $0xa0] sm:$0x11]
  %v36 = vld [vmem:[%s0 + $0xa8] sm:$0x11]
  %v37 = vld [vmem:[%s0 + $0xb0] sm:$0x11]
  %v38 = vld [vmem:[%s0 + $0xb8] sm:$0x11]
  %v39 = vld [vmem:[%s1] sm:$0xf]
  %v40 = vld [vmem:[%s1 + $0x4] sm:$0xf]
  %v41 = vld [vmem:[%s1 + $0x8] sm:$0xf]
  %v42 = vld [vmem:[%s1 + $0xc] sm:$0xf]
  %v43 = vld [vmem:[%s1 + $0x10] sm:$0xf]
  %v44 = vld [vmem:[%s1 + $0x14] sm:$0xf]
  %v45 = vld [vmem:[%s1 + $0x18] sm:$0xf]
  %v46 = vld [vmem:[%s1 + $0x1c] sm:$0xf]
  %v47 = vld [vmem:[%s1 + $0x20] sm:$0xf]
  %v48 = vld [vmem:[%s1 + $0x24] sm:$0xf]
  %v49 = vld [vmem:[%s1 + $0x28] sm:$0xf]
  %v50 = vld [vmem:[%s1 + $0x2c] sm:$0xf]
  %v51 = vld [vmem:[%s1 + $0x30] sm:$0xf]
  %v52 = vld [vmem:[%s1 + $0x34] sm:$0xf]
  %v53 = vld [vmem:[%s1 + $0x38] sm:$0xf]
  %v54 = vld [vmem:[%s1 + $0x3c] sm:$0xf]
  %v55 = vld [vmem:[%s1 + $0x40] sm:$0xf]
  %v56 = vld [vmem:[%s1 + $0x44] sm:$0xf]
  %v57 = vld [vmem:[%s1 + $0x48] sm:$0xf]
  %v58 = vld [vmem:[%s1 + $0x4c] sm:$0xf]
  %v59 = vld [vmem:[%s1 + $0x50] sm:$0xf]
  %v60 = vld [vmem:[%s1 + $0x54] sm:$0xf]
  %v61 = vld [vmem:[%s1 + $0x58] sm:$0xf]
  %v62 = vld [vmem:[%s1 + $0x5c] sm:$0xf]
  %v63 = vld [vmem:[%s1 + $0x60] sm:$0xf]
  %v64 = vld [vmem:[%s1 + $0x64] sm:$0xf]
  %v65 = vld [vmem:[%s1 + $0x68] sm:$0xf]
  %v66 = vld [vmem:[%s1 + $0x6c] sm:$0xf]
  %v67 = vld [vmem:[%s1 + $0x70] sm:$0xf]
  %v68 = vld [vmem:[%s1 + $0x74] sm:$0xf]
  %v69 = vld [vmem:[%s1 + $0x78] sm:$0xf]
  %v70 = vld [vmem:[%s1 + $0x7c] sm:$0xf]
  %v71 = vld [vmem:[%s1 + $0x80] sm:$0xf]
  %v72 = vld [vmem:[%s1 + $0x84] sm:$0xf]
  %v73 = vld [vmem:[%s1 + $0x88] sm:$0xf]
  %v74 = vld [vmem:[%s1 + $0x8c] sm:$0xf]
  %v75 = vld [vmem:[%s1 + $0x90] sm:$0xf]
  %v76 = vld [vmem:[%s1 + $0x94] sm:$0xf]
  %v77 = vld [vmem:[%s1 + $0x98] sm:$0xf]
  %v78 = vld [vmem:[%s1 + $0x9c] sm:$0xf]
  %v79 = vld [vmem:[%s1 + $0xa0] sm:$0xf]
  %v80 = vld [vmem:[%s1 + $0xa4] sm:$0xf]
  %v81 = vld [vmem:[%s1 + $0xa8] sm:$0xf]
  %v82 = vld [vmem:[%s1 + $0xac] sm:$0xf]
  %v83 = vld [vmem:[%s1 + $0xb0] sm:$0xf]
  %v84 = vld [vmem:[%s1 + $0xb4] sm:$0xf]
  %v85 = vld [vmem:[%s1 + $0xb8] sm:$0xf]
  %v86 = vld [vmem:[%s1 + $0xbc] sm:$0xf]
  %v87 = vld [vmem:[%s1 + $0xc0] sm:$0xf]
  %v88 = vld [vmem:[%s1 + $0xc4] sm:$0xf]
  %v89 = vld [vmem:[%s1 + $0xc8] sm:$0xf]
  %v90 = vld [vmem:[%s1 + $0xcc] sm:$0xf]
  %v91 = vld [vmem:[%s1 + $0xd0] sm:$0xf]
  %v92 = vld [vmem:[%s1 + $0xd4] sm:$0xf]
  %v93 = vld [vmem:[%s1 + $0xd8] sm:$0xf]
  %v94 = vld [vmem:[%s1 + $0xdc] sm:$0xf]
  %v95 = vld [vmem:[%s1 + $0xe0] sm:$0xf]
  %v96 = vld [vmem:[%s1 + $0xe4] sm:$0xf]
  %v97 = vld [vmem:[%s1 + $0xe8] sm:$0xf]
  %v98 = vld [vmem:[%s1 + $0xec] sm:$0xf]
  %v99 = vld [vmem:[%s1 + $0xf0] sm:$0xf]
  %v100 = vld [vmem:[%s1 + $0xf4] sm:$0xf]
  %v101 = vld [vmem:[%s1 + $0xf8] sm:$0xf]
  %v102 = vld [vmem:[%s1 + $0xfc] sm:$0xf]
  %v103 = vld [vmem:[%s1 + $0x100] sm:$0xf]
  %v104 = vld [vmem:[%s1 + $0x104] sm:$0xf]
  %v105 = vld [vmem:[%s1 + $0x108] sm:$0xf]
  %v106 = vld [vmem:[%s1 + $0x10c] sm:$0xf]
  %v107 = vld [vmem:[%s1 + $0x110] sm:$0xf]
  %v108 = vld [vmem:[%s1 + $0x114] sm:$0xf]
  %v109 = vld [vmem:[%s1 + $0x118] sm:$0xf]
  %v110 = vld [vmem:[%s1 + $0x11c] sm:$0xf]
  %v111 = vld [vmem:[%s1 + $0x120] sm:$0xf]
  %v112 = vld [vmem:[%s1 + $0x124] sm:$0xf]
  %v113 = vld [vmem:[%s1 + $0x128] sm:$0xf]
  %v114 = vld [vmem:[%s1 + $0x12c] sm:$0xf]
  %v115 = vld [vmem:[%s1 + $0x130] sm:$0xf]
  %v116 = vld [vmem:[%s1 + $0x134] sm:$0xf]
  %v117 = vld [vmem:[%s1 + $0x138] sm:$0xf]
  %v118 = vld [vmem:[%s1 + $0x13c] sm:$0xf]
  %v119 = vld [vmem:[%s1 + $0x140] sm:$0xf]
  %v120 = vld [vmem:[%s1 + $0x144] sm:$0xf]
  %v121 = vld [vmem:[%s1 + $0x148] sm:$0xf]
  %v122 = vld [vmem:[%s1 + $0x14c] sm:$0xf]
  %v123 = vld [vmem:[%s1 + $0x150] sm:$0xf]
  %v124 = vld [vmem:[%s1 + $0x154] sm:$0xf]
  %v125 = vld [vmem:[%s1 + $0x158] sm:$0xf]
  %v126 = vld [vmem:[%s1 + $0x15c] sm:$0xf]
  %v127 = vld [vmem:[%s1 + $0x160] sm:$0xf]
  %v128 = vld [vmem:[%s1 + $0x164] sm:$0xf]
  %v129 = vld [vmem:[%s1 + $0x168] sm:$0xf]
  %v130 = vld [vmem:[%s1 + $0x16c] sm:$0xf]
  %v131 = vld [vmem:[%s1 + $0x170] sm:$0xf]
  %v132 = vld [vmem:[%s1 + $0x174] sm:$0xf]
  %v133 = vld [vmem:[%s1 + $0x178] sm:$0xf]
  %v134 = vld [vmem:[%s1 + $0x17c] sm:$0xf]
  %v135 = vld [vmem:[%s1 + $0x180] sm:$0xf]
  %v136 = vld [vmem:[%s1 + $0x184] sm:$0xf]
  %v137 = vld [vmem:[%s1 + $0x188] sm:$0xf]
  %v138 = vld [vmem:[%s1 + $0x18c] sm:$0xf]
  %v139 = vld [vmem:[%s1 + $0x190] sm:$0xf]
  %v140 = vld [vmem:[%s1 + $0x194] sm:$0xf]
  %v141 = vld [vmem:[%s1 + $0x198] sm:$0xf]
  %v142 = vld [vmem:[%s1 + $0x19c] sm:$0xf]
  %v143 = vld [vmem:[%s1 + $0x1a0] sm:$0xf]
  %v144 = vld [vmem:[%s1 + $0x1a4] sm:$0xf]
  %v145 = vld [vmem:[%s1 + $0x1a8] sm:$0xf]
  %v146 = vld [vmem:[%s1 + $0x1ac] sm:$0xf]
  %v147 = vld [vmem:[%s1 + $0x1b0] sm:$0xf]
  %v148 = vld [vmem:[%s1 + $0x1b4] sm:$0xf]
  %v149 = vld [vmem:[%s1 + $0x1b8] sm:$0xf]
  %v150 = vld [vmem:[%s1 + $0x1bc] sm:$0xf]
  %v151 = vld [vmem:[%s1 + $0x1c0] sm:$0xf]
  %v152 = vld [vmem:[%s1 + $0x1c4] sm:$0xf]
  %v153 = vld [vmem:[%s1 + $0x1c8] sm:$0xf]
  %v154 = vld [vmem:[%s1 + $0x1cc] sm:$0xf]
  %v155 = vld [vmem:[%s1 + $0x1d0] sm:$0xf]
  %v156 = vld [vmem:[%s1 + $0x1d4] sm:$0xf]
  %v157 = vld [vmem:[%s1 + $0x1d8] sm:$0xf]
  %v158 = vld [vmem:[%s1 + $0x1dc] sm:$0xf]
  %v159 = vld [vmem:[%s1 + $0x1e0] sm:$0xf]
  %v160 = vld [vmem:[%s1 + $0x1e4] sm:$0xf]
  %v161 = vld [vmem:[%s1 + $0x1e8] sm:$0xf]
  %v162 = vld [vmem:[%s1 + $0x1ec] sm:$0xf]
  %v163 = vld [vmem:[%s1 + $0x1f0] sm:$0xf]
  %v164 = vld [vmem:[%s1 + $0x1f4] sm:$0xf]
  %v165 = vld [vmem:[%s1 + $0x1f8] sm:$0xf]
  %v166 = vld [vmem:[%s1 + $0x1fc] sm:$0xf]
  %v167 = vld [vmem:[%s1 + $0x200] sm:$0xf]
  %v168 = vld [vmem:[%s1 + $0x204] sm:$0xf]
  %v169 = vld [vmem:[%s1 + $0x208] sm:$0xf]
  %v170 = vld [vmem:[%s1 + $0x20c] sm:$0xf]
  %v171 = vld [vmem:[%s1 + $0x210] sm:$0xf]
  %v172 = vld [vmem:[%s1 + $0x214] sm:$0xf]
  %v173 = vld [vmem:[%s1 + $0x218] sm:$0xf]
  %v174 = vld [vmem:[%s1 + $0x21c] sm:$0xf]
  %v175 = vld [vmem:[%s1 + $0x220] sm:$0xf]
  %v176 = vld [vmem:[%s1 + $0x224] sm:$0xf]
  %v177 = vld [vmem:[%s1 + $0x228] sm:$0xf]
  %v178 = vld [vmem:[%s1 + $0x22c] sm:$0xf]
  %v179 = vld [vmem:[%s1 + $0x230] sm:$0xf]
  %v180 = vld [vmem:[%s1 + $0x234] sm:$0xf]
  %v181 = vld [vmem:[%s1 + $0x238] sm:$0xf]
  %v182 = vld [vmem:[%s1 + $0x23c] sm:$0xf]
  %v183 = vld [vmem:[%s1 + $0x240] sm:$0xf]
  %v184 = vld [vmem:[%s1 + $0x244] sm:$0xf]
  %v185 = vld [vmem:[%s1 + $0x248] sm:$0xf]
  %v186 = vld [vmem:[%s1 + $0x24c] sm:$0xf]
  %v187 = vld [vmem:[%s1 + $0x250] sm:$0xf]
  %v188 = vld [vmem:[%s1 + $0x254] sm:$0xf]
  %v189 = vld [vmem:[%s1 + $0x258] sm:$0xf]
  %v190 = vld [vmem:[%s1 + $0x25c] sm:$0xf]
  %v191 = vld [vmem:[%s1 + $0x260] sm:$0xf]
  %v192 = vld [vmem:[%s1 + $0x264] sm:$0xf]
  %v193 = vld [vmem:[%s1 + $0x268] sm:$0xf]
  %v194 = vld [vmem:[%s1 + $0x26c] sm:$0xf]
  %v195 = vld [vmem:[%s1 + $0x270] sm:$0xf]
  %v196 = vld [vmem:[%s1 + $0x274] sm:$0xf]
  %v197 = vld [vmem:[%s1 + $0x278] sm:$0xf]
  %v198 = vld [vmem:[%s1 + $0x27c] sm:$0xf]
  %v199 = vld [vmem:[%s1 + $0x280] sm:$0xf]
  %v200 = vld [vmem:[%s1 + $0x284] sm:$0xf]
  %v201 = vld [vmem:[%s1 + $0x288] sm:$0xf]
  %v202 = vld [vmem:[%s1 + $0x28c] sm:$0xf]
  %v203 = vld [vmem:[%s1 + $0x290] sm:$0xf]
  %v204 = vld [vmem:[%s1 + $0x294] sm:$0xf]
  %v205 = vld [vmem:[%s1 + $0x298] sm:$0xf]
  %v206 = vld [vmem:[%s1 + $0x29c] sm:$0xf]
  %v207 = vld [vmem:[%s1 + $0x2a0] sm:$0xf]
  %v208 = vld [vmem:[%s1 + $0x2a4] sm:$0xf]
  %v209 = vld [vmem:[%s1 + $0x2a8] sm:$0xf]
  %v210 = vld [vmem:[%s1 + $0x2ac] sm:$0xf]
  %v211 = vld [vmem:[%s1 + $0x2b0] sm:$0xf]
  %v212 = vld [vmem:[%s1 + $0x2b4] sm:$0xf]
  %v213 = vld [vmem:[%s1 + $0x2b8] sm:$0xf]
  %v214 = vld [vmem:[%s1 + $0x2bc] sm:$0xf]
  %v215 = vld [vmem:[%s1 + $0x2c0] sm:$0xf]
  %v216 = vld [vmem:[%s1 + $0x2c4] sm:$0xf]
  %v217 = vld [vmem:[%s1 + $0x2c8] sm:$0xf]
  %v218 = vld [vmem:[%s1 + $0x2cc] sm:$0xf]
  %v219 = vld [vmem:[%s1 + $0x2d0] sm:$0xf]
  %v220 = vld [vmem:[%s1 + $0x2d4] sm:$0xf]
  %v221 = vld [vmem:[%s1 + $0x2d8] sm:$0xf]
  %v222 = vld [vmem:[%s1 + $0x2dc] sm:$0xf]
  %v223 = vld [vmem:[%s1 + $0x2e0] sm:$0xf]
  %v224 = vld [vmem:[%s1 + $0x2e4] sm:$0xf]
  %v225 = vld [vmem:[%s1 + $0x2e8] sm:$0xf]
  %v226 = vld [vmem:[%s1 + $0x2ec] sm:$0xf]
  %v227 = vld [vmem:[%s1 + $0x2f0] sm:$0xf]
  %v228 = vld [vmem:[%s1 + $0x2f4] sm:$0xf]
  %v229 = vld [vmem:[%s1 + $0x2f8] sm:$0xf]
  %v230 = vld [vmem:[%s1 + $0x2fc] sm:$0xf]
  %v231 = vld [vmem:[%s1 + $0x300] sm:$0xf]
  %v232 = vld [vmem:[%s1 + $0x304] sm:$0xf]
  %v233 = vld [vmem:[%s1 + $0x308] sm:$0xf]
  %v234 = vld [vmem:[%s1 + $0x30c] sm:$0xf]
  %v235 = vld [vmem:[%s1 + $0x310] sm:$0xf]
  %v236 = vld [vmem:[%s1 + $0x314] sm:$0xf]
  %v237 = vld [vmem:[%s1 + $0x318] sm:$0xf]
  %v238 = vld [vmem:[%s1 + $0x31c] sm:$0xf]
  %v239 = vld [vmem:[%s1 + $0x320] sm:$0xf]
  %v240 = vld [vmem:[%s1 + $0x324] sm:$0xf]
  %v241 = vld [vmem:[%s1 + $0x328] sm:$0xf]
  %v242 = vld [vmem:[%s1 + $0x32c] sm:$0xf]
  %v243 = vld [vmem:[%s1 + $0x330] sm:$0xf]
  %v244 = vld [vmem:[%s1 + $0x334] sm:$0xf]
  %v245 = vld [vmem:[%s1 + $0x338] sm:$0xf]
  %v246 = vld [vmem:[%s1 + $0x33c] sm:$0xf]
  %v247 = vld [vmem:[%s1 + $0x340] sm:$0xf]
  %v248 = vld [vmem:[%s1 + $0x344] sm:$0xf]
  %v249 = vld [vmem:[%s1 + $0x348] sm:$0xf]
  %v250 = vld [vmem:[%s1 + $0x34c] sm:$0xf]
  %v251 = vld [vmem:[%s1 + $0x350] sm:$0xf]
  %v252 = vld [vmem:[%s1 + $0x354] sm:$0xf]
  %v253 = vld [vmem:[%s1 + $0x358] sm:$0xf]
  %v254 = vld [vmem:[%s1 + $0x35c] sm:$0xf]
  %v255 = vld [vmem:[%s1 + $0x360] sm:$0xf]
  %v256 = vld [vmem:[%s1 + $0x364] sm:$0xf]
  %v257 = vld [vmem:[%s1 + $0x368] sm:$0xf]
  %v258 = vld [vmem:[%s1 + $0x36c] sm:$0xf]
  %v259 = vld [vmem:[%s1 + $0x370] sm:$0xf]
  %v260 = vld [vmem:[%s1 + $0x374] sm:$0xf]
  %v261 = vld [vmem:[%s1 + $0x378] sm:$0xf]
  %v262 = vld [vmem:[%s1 + $0x37c] sm:$0xf]
  %v263 = vld [vmem:[%s1 + $0x380] sm:$0xf]
  %v264 = vld [vmem:[%s1 + $0x384] sm:$0xf]
  %v265 = vld [vmem:[%s1 + $0x388] sm:$0xf]
  %v266 = vld [vmem:[%s1 + $0x38c] sm:$0xf]
  %v267 = vld [vmem:[%s1 + $0x390] sm:$0xf]
  %v268 = vld [vmem:[%s1 + $0x394] sm:$0xf]
  %v269 = vld [vmem:[%s1 + $0x398] sm:$0xf]
  %v270 = vld [vmem:[%s1 + $0x39c] sm:$0xf]
  %v271 = vld [vmem:[%s1 + $0x3a0] sm:$0xf]
  %v272 = vld [vmem:[%s1 + $0x3a4] sm:$0xf]
  %v273 = vld [vmem:[%s1 + $0x3a8] sm:$0xf]
  %v274 = vld [vmem:[%s1 + $0x3ac] sm:$0xf]
  %v275 = vld [vmem:[%s1 + $0x3b0] sm:$0xf]
  %v276 = vld [vmem:[%s1 + $0x3b4] sm:$0xf]
  %v277 = vld [vmem:[%s1 + $0x3b8] sm:$0xf]
  %v278 = vld [vmem:[%s1 + $0x3bc] sm:$0xf]
  %v279 = vld [vmem:[%s1 + $0x3c0] sm:$0xf]
  %v280 = vld [vmem:[%s1 + $0x3c4] sm:$0xf]
  %v281 = vld [vmem:[%s1 + $0x3c8] sm:$0xf]
  %v282 = vld [vmem:[%s1 + $0x3cc] sm:$0xf]
  %v283 = vld [vmem:[%s1 + $0x3d0] sm:$0xf]
  %v284 = vld [vmem:[%s1 + $0x3d4] sm:$0xf]
  %v285 = vld [vmem:[%s1 + $0x3d8] sm:$0xf]
  %v286 = vld [vmem:[%s1 + $0x3dc] sm:$0xf]
  %v287 = vld [vmem:[%s1 + $0x3e0] sm:$0xf]
  %v288 = vld [vmem:[%s1 + $0x3e4] sm:$0xf]
  %v289 = vld [vmem:[%s1 + $0x3e8] sm:$0xf]
  %v290 = vld [vmem:[%s1 + $0x3ec] sm:$0xf]
  %v291 = vld [vmem:[%s1 + $0x3f0] sm:$0xf]
  %v292 = vld [vmem:[%s1 + $0x3f4] sm:$0xf]
  %v293 = vld [vmem:[%s1 + $0x3f8] sm:$0xf]
  %v294 = vld [vmem:[%s1 + $0x3fc] sm:$0xf]
  %v295 = vld [vmem:[%s2] sm:$0x1]
  %v297 = vlaneseq
  %v298 = vshrl.u32 %v297, 7
  %v299 = vsub.s32 0, %v298
  %v300 = vrot.slane %v295, %v299
  %v326 = vunpack.c.l.b16 %v15
  %v327 = vunpack.c.h.b16 %v15
  %v328 = vunpack.c.l.b16 %v16
  %v329 = vunpack.c.h.b16 %v16
  %v330 = vunpack.c.l.b16 %v17
  %v331 = vunpack.c.h.b16 %v17
  %v332 = vunpack.c.l.b16 %v18
  %v333 = vunpack.c.h.b16 %v18
  %v334 = vunpack.c.l.b16 %v19
  %v335 = vunpack.c.h.b16 %v19
  %v336 = vunpack.c.l.b16 %v20
  %v337 = vunpack.c.h.b16 %v20
  %v338 = vunpack.c.l.b16 %v21
  %v339 = vunpack.c.h.b16 %v21
  %v340 = vunpack.c.l.b16 %v22
  %v341 = vunpack.c.h.b16 %v22
  %v342 = vunpack.c.l.b16 %v23
  %v343 = vunpack.c.h.b16 %v23
  %v344 = vunpack.c.l.b16 %v24
  %v345 = vunpack.c.h.b16 %v24
  %v346 = vunpack.c.l.b16 %v25
  %v347 = vunpack.c.h.b16 %v25
  %v348 = vunpack.c.l.b16 %v26
  %v349 = vunpack.c.h.b16 %v26
  %v350 = vunpack.c.l.b16 %v27
  %v351 = vunpack.c.h.b16 %v27
  %v352 = vunpack.c.l.b16 %v28
  %v353 = vunpack.c.h.b16 %v28
  %v354 = vunpack.c.l.b16 %v29
  %v355 = vunpack.c.h.b16 %v29
  %v356 = vunpack.c.l.b16 %v30
  %v357 = vunpack.c.h.b16 %v30
  %v358 = vunpack.c.l.b16 %v31
  %v359 = vunpack.c.h.b16 %v31
  %v360 = vunpack.c.l.b16 %v32
  %v361 = vunpack.c.h.b16 %v32
  %v362 = vunpack.c.l.b16 %v33
  %v363 = vunpack.c.h.b16 %v33
  %v364 = vunpack.c.l.b16 %v34
  %v365 = vunpack.c.h.b16 %v34
  %v366 = vunpack.c.l.b16 %v35
  %v367 = vunpack.c.h.b16 %v35
  %v368 = vunpack.c.l.b16 %v36
  %v369 = vunpack.c.h.b16 %v36
  %v370 = vunpack.c.l.b16 %v37
  %v371 = vunpack.c.h.b16 %v37
  %v372 = vunpack.c.l.b16 %v38
  %v373 = vunpack.c.h.b16 %v38
  %v374 = vpack.c.b16 %v342, %v326
  %v375 = vpack.c.b16 %v343, %v327
  %v376 = vpack.c.b16 %v344, %v328
  %v377 = vpack.c.b16 %v345, %v329
  %v378 = vpack.c.b16 %v346, %v330
  %v379 = vpack.c.b16 %v347, %v331
  %v380 = vpack.c.b16 %v348, %v332
  %v381 = vpack.c.b16 %v349, %v333
  %v382 = vpack.c.b16 %v350, %v334
  %v383 = vpack.c.b16 %v351, %v335
  %v384 = vpack.c.b16 %v352, %v336
  %v385 = vpack.c.b16 %v353, %v337
  %v386 = vpack.c.b16 %v354, %v338
  %v387 = vpack.c.b16 %v355, %v339
  %v388 = vpack.c.b16 %v356, %v340
  %v389 = vpack.c.b16 %v357, %v341
  %v390 = vpack.c.b16 %v358, %v358
  %v391 = vpack.c.b16 %v359, %v359
  %v392 = vpack.c.b16 %v360, %v360
  %v393 = vpack.c.b16 %v361, %v361
  %v394 = vpack.c.b16 %v362, %v362
  %v395 = vpack.c.b16 %v363, %v363
  %v396 = vpack.c.b16 %v364, %v364
  %v397 = vpack.c.b16 %v365, %v365
  %v398 = vpack.c.b16 %v366, %v366
  %v399 = vpack.c.b16 %v367, %v367
  %v400 = vpack.c.b16 %v368, %v368
  %v401 = vpack.c.b16 %v369, %v369
  %v402 = vpack.c.b16 %v370, %v370
  %v403 = vpack.c.b16 %v371, %v371
  %v404 = vpack.c.b16 %v372, %v372
  %v405 = vpack.c.b16 %v373, %v373
  %v694 = vunpack.c.l.b16 %v39
  %v695 = vunpack.c.l.b16 %v40
  %v696 = vunpack.c.l.b16 %v41
  %v697 = vunpack.c.l.b16 %v42
  %v698 = vunpack.c.l.b16 %v43
  %v699 = vunpack.c.l.b16 %v44
  %v700 = vunpack.c.l.b16 %v45
  %v701 = vunpack.c.l.b16 %v46
  %v702 = vunpack.c.l.b16 %v47
  %v703 = vunpack.c.l.b16 %v48
  %v704 = vunpack.c.l.b16 %v49
  %v705 = vunpack.c.l.b16 %v50
  %v706 = vunpack.c.l.b16 %v51
  %v707 = vunpack.c.l.b16 %v52
  %v708 = vunpack.c.l.b16 %v53
  %v709 = vunpack.c.l.b16 %v54
  %v710 = vunpack.c.l.b16 %v55
  %v711 = vunpack.c.l.b16 %v56
  %v712 = vunpack.c.l.b16 %v57
  %v713 = vunpack.c.l.b16 %v58
  %v714 = vunpack.c.l.b16 %v59
  %v715 = vunpack.c.l.b16 %v60
  %v716 = vunpack.c.l.b16 %v61
  %v717 = vunpack.c.l.b16 %v62
  %v718 = vunpack.c.l.b16 %v63
  %v719 = vunpack.c.l.b16 %v64
  %v720 = vunpack.c.l.b16 %v65
  %v721 = vunpack.c.l.b16 %v66
  %v722 = vunpack.c.l.b16 %v67
  %v723 = vunpack.c.l.b16 %v68
  %v724 = vunpack.c.l.b16 %v69
  %v725 = vunpack.c.l.b16 %v70
  %v726 = vunpack.c.l.b16 %v71
  %v727 = vunpack.c.l.b16 %v72
  %v728 = vunpack.c.l.b16 %v73
  %v729 = vunpack.c.l.b16 %v74
  %v730 = vunpack.c.l.b16 %v75
  %v731 = vunpack.c.l.b16 %v76
  %v732 = vunpack.c.l.b16 %v77
  %v733 = vunpack.c.l.b16 %v78
  %v734 = vunpack.c.l.b16 %v79
  %v735 = vunpack.c.l.b16 %v80
  %v736 = vunpack.c.l.b16 %v81
  %v737 = vunpack.c.l.b16 %v82
  %v738 = vunpack.c.l.b16 %v83
  %v739 = vunpack.c.l.b16 %v84
  %v740 = vunpack.c.l.b16 %v85
  %v741 = vunpack.c.l.b16 %v86
  %v742 = vunpack.c.l.b16 %v87
  %v743 = vunpack.c.l.b16 %v88
  %v744 = vunpack.c.l.b16 %v89
  %v745 = vunpack.c.l.b16 %v90
  %v746 = vunpack.c.l.b16 %v91
  %v747 = vunpack.c.l.b16 %v92
  %v748 = vunpack.c.l.b16 %v93
  %v749 = vunpack.c.l.b16 %v94
  %v750 = vunpack.c.l.b16 %v95
  %v751 = vunpack.c.l.b16 %v96
  %v752 = vunpack.c.l.b16 %v97
  %v753 = vunpack.c.l.b16 %v98
  %v754 = vunpack.c.l.b16 %v99
  %v755 = vunpack.c.l.b16 %v100
  %v756 = vunpack.c.l.b16 %v101
  %v757 = vunpack.c.l.b16 %v102
  %v758 = vunpack.c.l.b16 %v103
  %v759 = vunpack.c.l.b16 %v104
  %v760 = vunpack.c.l.b16 %v105
  %v761 = vunpack.c.l.b16 %v106
  %v762 = vunpack.c.l.b16 %v107
  %v763 = vunpack.c.l.b16 %v108
  %v764 = vunpack.c.l.b16 %v109
  %v765 = vunpack.c.l.b16 %v110
  %v766 = vunpack.c.l.b16 %v111
  %v767 = vunpack.c.l.b16 %v112
  %v768 = vunpack.c.l.b16 %v113
  %v769 = vunpack.c.l.b16 %v114
  %v770 = vunpack.c.l.b16 %v115
  %v771 = vunpack.c.l.b16 %v116
  %v772 = vunpack.c.l.b16 %v117
  %v773 = vunpack.c.l.b16 %v118
  %v774 = vunpack.c.l.b16 %v119
  %v775 = vunpack.c.l.b16 %v120
  %v776 = vunpack.c.l.b16 %v121
  %v777 = vunpack.c.l.b16 %v122
  %v778 = vunpack.c.l.b16 %v123
  %v779 = vunpack.c.l.b16 %v124
  %v780 = vunpack.c.l.b16 %v125
  %v781 = vunpack.c.l.b16 %v126
  %v782 = vunpack.c.l.b16 %v127
  %v783 = vunpack.c.l.b16 %v128
  %v784 = vunpack.c.l.b16 %v129
  %v785 = vunpack.c.l.b16 %v130
  %v786 = vunpack.c.l.b16 %v131
  %v787 = vunpack.c.l.b16 %v132
  %v788 = vunpack.c.l.b16 %v133
  %v789 = vunpack.c.l.b16 %v134
  %v790 = vunpack.c.l.b16 %v135
  %v791 = vunpack.c.l.b16 %v136
  %v792 = vunpack.c.l.b16 %v137
  %v793 = vunpack.c.l.b16 %v138
  %v794 = vunpack.c.l.b16 %v139
  %v795 = vunpack.c.l.b16 %v140
  %v796 = vunpack.c.l.b16 %v141
  %v797 = vunpack.c.l.b16 %v142
  %v798 = vunpack.c.l.b16 %v143
  %v799 = vunpack.c.l.b16 %v144
  %v800 = vunpack.c.l.b16 %v145
  %v801 = vunpack.c.l.b16 %v146
  %v802 = vunpack.c.l.b16 %v147
  %v803 = vunpack.c.l.b16 %v148
  %v804 = vunpack.c.l.b16 %v149
  %v805 = vunpack.c.l.b16 %v150
  %v806 = vunpack.c.l.b16 %v151
  %v807 = vunpack.c.l.b16 %v152
  %v808 = vunpack.c.l.b16 %v153
  %v809 = vunpack.c.l.b16 %v154
  %v810 = vunpack.c.l.b16 %v155
  %v811 = vunpack.c.l.b16 %v156
  %v812 = vunpack.c.l.b16 %v157
  %v813 = vunpack.c.l.b16 %v158
  %v814 = vunpack.c.l.b16 %v159
  %v815 = vunpack.c.l.b16 %v160
  %v816 = vunpack.c.l.b16 %v161
  %v817 = vunpack.c.l.b16 %v162
  %v818 = vunpack.c.l.b16 %v163
  %v819 = vunpack.c.l.b16 %v164
  %v820 = vunpack.c.l.b16 %v165
  %v821 = vunpack.c.l.b16 %v166
  %v822 = vunpack.c.l.b16 %v167
  %v823 = vunpack.c.l.b16 %v168
  %v824 = vunpack.c.l.b16 %v169
  %v825 = vunpack.c.l.b16 %v170
  %v826 = vunpack.c.l.b16 %v171
  %v827 = vunpack.c.l.b16 %v172
  %v828 = vunpack.c.l.b16 %v173
  %v829 = vunpack.c.l.b16 %v174
  %v830 = vunpack.c.l.b16 %v175
  %v831 = vunpack.c.l.b16 %v176
  %v832 = vunpack.c.l.b16 %v177
  %v833 = vunpack.c.l.b16 %v178
  %v834 = vunpack.c.l.b16 %v179
  %v835 = vunpack.c.l.b16 %v180
  %v836 = vunpack.c.l.b16 %v181
  %v837 = vunpack.c.l.b16 %v182
  %v838 = vunpack.c.l.b16 %v183
  %v839 = vunpack.c.l.b16 %v184
  %v840 = vunpack.c.l.b16 %v185
  %v841 = vunpack.c.l.b16 %v186
  %v842 = vunpack.c.l.b16 %v187
  %v843 = vunpack.c.l.b16 %v188
  %v844 = vunpack.c.l.b16 %v189
  %v845 = vunpack.c.l.b16 %v190
  %v846 = vunpack.c.l.b16 %v191
  %v847 = vunpack.c.l.b16 %v192
  %v848 = vunpack.c.l.b16 %v193
  %v849 = vunpack.c.l.b16 %v194
  %v850 = vunpack.c.l.b16 %v195
  %v851 = vunpack.c.l.b16 %v196
  %v852 = vunpack.c.l.b16 %v197
  %v853 = vunpack.c.l.b16 %v198
  %v854 = vunpack.c.l.b16 %v199
  %v855 = vunpack.c.l.b16 %v200
  %v856 = vunpack.c.l.b16 %v201
  %v857 = vunpack.c.l.b16 %v202
  %v858 = vunpack.c.l.b16 %v203
  %v859 = vunpack.c.l.b16 %v204
  %v860 = vunpack.c.l.b16 %v205
  %v861 = vunpack.c.l.b16 %v206
  %v862 = vunpack.c.l.b16 %v207
  %v863 = vunpack.c.l.b16 %v208
  %v864 = vunpack.c.l.b16 %v209
  %v865 = vunpack.c.l.b16 %v210
  %v866 = vunpack.c.l.b16 %v211
  %v867 = vunpack.c.l.b16 %v212
  %v868 = vunpack.c.l.b16 %v213
  %v869 = vunpack.c.l.b16 %v214
  %v870 = vunpack.c.l.b16 %v215
  %v871 = vunpack.c.l.b16 %v216
  %v872 = vunpack.c.l.b16 %v217
  %v873 = vunpack.c.l.b16 %v218
  %v874 = vunpack.c.l.b16 %v219
  %v875 = vunpack.c.l.b16 %v220
  %v876 = vunpack.c.l.b16 %v221
  %v877 = vunpack.c.l.b16 %v222
  %v878 = vunpack.c.l.b16 %v223
  %v879 = vunpack.c.l.b16 %v224
  %v880 = vunpack.c.l.b16 %v225
  %v881 = vunpack.c.l.b16 %v226
  %v882 = vunpack.c.l.b16 %v227
  %v883 = vunpack.c.l.b16 %v228
  %v884 = vunpack.c.l.b16 %v229
  %v885 = vunpack.c.l.b16 %v230
  %v886 = vunpack.c.l.b16 %v231
  %v887 = vunpack.c.l.b16 %v232
  %v888 = vunpack.c.l.b16 %v233
  %v889 = vunpack.c.l.b16 %v234
  %v890 = vunpack.c.l.b16 %v235
  %v891 = vunpack.c.l.b16 %v236
  %v892 = vunpack.c.l.b16 %v237
  %v893 = vunpack.c.l.b16 %v238
  %v894 = vunpack.c.l.b16 %v239
  %v895 = vunpack.c.l.b16 %v240
  %v896 = vunpack.c.l.b16 %v241
  %v897 = vunpack.c.l.b16 %v242
  %v898 = vunpack.c.l.b16 %v243
  %v899 = vunpack.c.l.b16 %v244
  %v900 = vunpack.c.l.b16 %v245
  %v901 = vunpack.c.l.b16 %v246
  %v902 = vunpack.c.l.b16 %v247
  %v903 = vunpack.c.l.b16 %v248
  %v904 = vunpack.c.l.b16 %v249
  %v905 = vunpack.c.l.b16 %v250
  %v906 = vunpack.c.l.b16 %v251
  %v907 = vunpack.c.l.b16 %v252
  %v908 = vunpack.c.l.b16 %v253
  %v909 = vunpack.c.l.b16 %v254
  %v910 = vunpack.c.l.b16 %v255
  %v911 = vunpack.c.l.b16 %v256
  %v912 = vunpack.c.l.b16 %v257
  %v913 = vunpack.c.l.b16 %v258
  %v914 = vunpack.c.l.b16 %v259
  %v915 = vunpack.c.l.b16 %v260
  %v916 = vunpack.c.l.b16 %v261
  %v917 = vunpack.c.l.b16 %v262
  %v918 = vunpack.c.l.b16 %v263
  %v919 = vunpack.c.l.b16 %v264
  %v920 = vunpack.c.l.b16 %v265
  %v921 = vunpack.c.l.b16 %v266
  %v922 = vunpack.c.l.b16 %v267
  %v923 = vunpack.c.l.b16 %v268
  %v924 = vunpack.c.l.b16 %v269
  %v925 = vunpack.c.l.b16 %v270
  %v926 = vunpack.c.l.b16 %v271
  %v927 = vunpack.c.l.b16 %v272
  %v928 = vunpack.c.l.b16 %v273
  %v929 = vunpack.c.l.b16 %v274
  %v930 = vunpack.c.l.b16 %v275
  %v931 = vunpack.c.l.b16 %v276
  %v932 = vunpack.c.l.b16 %v277
  %v933 = vunpack.c.l.b16 %v278
  %v934 = vunpack.c.l.b16 %v279
  %v935 = vunpack.c.l.b16 %v280
  %v936 = vunpack.c.l.b16 %v281
  %v937 = vunpack.c.l.b16 %v282
  %v938 = vunpack.c.l.b16 %v283
  %v939 = vunpack.c.l.b16 %v284
  %v940 = vunpack.c.l.b16 %v285
  %v941 = vunpack.c.l.b16 %v286
  %v942 = vunpack.c.l.b16 %v287
  %v943 = vunpack.c.l.b16 %v288
  %v944 = vunpack.c.l.b16 %v289
  %v945 = vunpack.c.l.b16 %v290
  %v946 = vunpack.c.l.b16 %v291
  %v947 = vunpack.c.l.b16 %v292
  %v948 = vunpack.c.l.b16 %v293
  %v949 = vunpack.c.l.b16 %v294
  %v950 = vpack.c.b16 %v695, %v694
  %v951 = vpack.c.b16 %v697, %v696
  %v952 = vpack.c.b16 %v699, %v698
  %v953 = vpack.c.b16 %v701, %v700
  %v954 = vpack.c.b16 %v703, %v702
  %v955 = vpack.c.b16 %v705, %v704
  %v956 = vpack.c.b16 %v707, %v706
  %v957 = vpack.c.b16 %v709, %v708
  %v958 = vpack.c.b16 %v711, %v710
  %v959 = vpack.c.b16 %v713, %v712
  %v960 = vpack.c.b16 %v715, %v714
  %v961 = vpack.c.b16 %v717, %v716
  %v962 = vpack.c.b16 %v719, %v718
  %v963 = vpack.c.b16 %v721, %v720
  %v964 = vpack.c.b16 %v723, %v722
  %v965 = vpack.c.b16 %v725, %v724
  %v966 = vpack.c.b16 %v727, %v726
  %v967 = vpack.c.b16 %v729, %v728
  %v968 = vpack.c.b16 %v731, %v730
  %v969 = vpack.c.b16 %v733, %v732
  %v970 = vpack.c.b16 %v735, %v734
  %v971 = vpack.c.b16 %v737, %v736
  %v972 = vpack.c.b16 %v739, %v738
  %v973 = vpack.c.b16 %v741, %v740
  %v974 = vpack.c.b16 %v743, %v742
  %v975 = vpack.c.b16 %v745, %v744
  %v976 = vpack.c.b16 %v747, %v746
  %v977 = vpack.c.b16 %v749, %v748
  %v978 = vpack.c.b16 %v751, %v750
  %v979 = vpack.c.b16 %v753, %v752
  %v980 = vpack.c.b16 %v755, %v754
  %v981 = vpack.c.b16 %v757, %v756
  %v982 = vpack.c.b16 %v759, %v758
  %v983 = vpack.c.b16 %v761, %v760
  %v984 = vpack.c.b16 %v763, %v762
  %v985 = vpack.c.b16 %v765, %v764
  %v986 = vpack.c.b16 %v767, %v766
  %v987 = vpack.c.b16 %v769, %v768
  %v988 = vpack.c.b16 %v771, %v770
  %v989 = vpack.c.b16 %v773, %v772
  %v990 = vpack.c.b16 %v775, %v774
  %v991 = vpack.c.b16 %v777, %v776
  %v992 = vpack.c.b16 %v779, %v778
  %v993 = vpack.c.b16 %v781, %v780
  %v994 = vpack.c.b16 %v783, %v782
  %v995 = vpack.c.b16 %v785, %v784
  %v996 = vpack.c.b16 %v787, %v786
  %v997 = vpack.c.b16 %v789, %v788
  %v998 = vpack.c.b16 %v791, %v790
  %v999 = vpack.c.b16 %v793, %v792
  %v1000 = vpack.c.b16 %v795, %v794
  %v1001 = vpack.c.b16 %v797, %v796
  %v1002 = vpack.c.b16 %v799, %v798
  %v1003 = vpack.c.b16 %v801, %v800
  %v1004 = vpack.c.b16 %v803, %v802
  %v1005 = vpack.c.b16 %v805, %v804
  %v1006 = vpack.c.b16 %v807, %v806
  %v1007 = vpack.c.b16 %v809, %v808
  %v1008 = vpack.c.b16 %v811, %v810
  %v1009 = vpack.c.b16 %v813, %v812
  %v1010 = vpack.c.b16 %v815, %v814
  %v1011 = vpack.c.b16 %v817, %v816
  %v1012 = vpack.c.b16 %v819, %v818
  %v1013 = vpack.c.b16 %v821, %v820
  %v1014 = vpack.c.b16 %v823, %v822
  %v1015 = vpack.c.b16 %v825, %v824
  %v1016 = vpack.c.b16 %v827, %v826
  %v1017 = vpack.c.b16 %v829, %v828
  %v1018 = vpack.c.b16 %v831, %v830
  %v1019 = vpack.c.b16 %v833, %v832
  %v1020 = vpack.c.b16 %v835, %v834
  %v1021 = vpack.c.b16 %v837, %v836
  %v1022 = vpack.c.b16 %v839, %v838
  %v1023 = vpack.c.b16 %v841, %v840
  %v1024 = vpack.c.b16 %v843, %v842
  %v1025 = vpack.c.b16 %v845, %v844
  %v1026 = vpack.c.b16 %v847, %v846
  %v1027 = vpack.c.b16 %v849, %v848
  %v1028 = vpack.c.b16 %v851, %v850
  %v1029 = vpack.c.b16 %v853, %v852
  %v1030 = vpack.c.b16 %v855, %v854
  %v1031 = vpack.c.b16 %v857, %v856
  %v1032 = vpack.c.b16 %v859, %v858
  %v1033 = vpack.c.b16 %v861, %v860
  %v1034 = vpack.c.b16 %v863, %v862
  %v1035 = vpack.c.b16 %v865, %v864
  %v1036 = vpack.c.b16 %v867, %v866
  %v1037 = vpack.c.b16 %v869, %v868
  %v1038 = vpack.c.b16 %v871, %v870
  %v1039 = vpack.c.b16 %v873, %v872
  %v1040 = vpack.c.b16 %v875, %v874
  %v1041 = vpack.c.b16 %v877, %v876
  %v1042 = vpack.c.b16 %v879, %v878
  %v1043 = vpack.c.b16 %v881, %v880
  %v1044 = vpack.c.b16 %v883, %v882
  %v1045 = vpack.c.b16 %v885, %v884
  %v1046 = vpack.c.b16 %v887, %v886
  %v1047 = vpack.c.b16 %v889, %v888
  %v1048 = vpack.c.b16 %v891, %v890
  %v1049 = vpack.c.b16 %v893, %v892
  %v1050 = vpack.c.b16 %v895, %v894
  %v1051 = vpack.c.b16 %v897, %v896
  %v1052 = vpack.c.b16 %v899, %v898
  %v1053 = vpack.c.b16 %v901, %v900
  %v1054 = vpack.c.b16 %v903, %v902
  %v1055 = vpack.c.b16 %v905, %v904
  %v1056 = vpack.c.b16 %v907, %v906
  %v1057 = vpack.c.b16 %v909, %v908
  %v1058 = vpack.c.b16 %v911, %v910
  %v1059 = vpack.c.b16 %v913, %v912
  %v1060 = vpack.c.b16 %v915, %v914
  %v1061 = vpack.c.b16 %v917, %v916
  %v1062 = vpack.c.b16 %v919, %v918
  %v1063 = vpack.c.b16 %v921, %v920
  %v1064 = vpack.c.b16 %v923, %v922
  %v1065 = vpack.c.b16 %v925, %v924
  %v1066 = vpack.c.b16 %v927, %v926
  %v1067 = vpack.c.b16 %v929, %v928
  %v1068 = vpack.c.b16 %v931, %v930
  %v1069 = vpack.c.b16 %v933, %v932
  %v1070 = vpack.c.b16 %v935, %v934
  %v1071 = vpack.c.b16 %v937, %v936
  %v1072 = vpack.c.b16 %v939, %v938
  %v1073 = vpack.c.b16 %v941, %v940
  %v1074 = vpack.c.b16 %v943, %v942
  %v1075 = vpack.c.b16 %v945, %v944
  %v1076 = vpack.c.b16 %v947, %v946
  %v1077 = vpack.c.b16 %v949, %v948
  %1206 = vmatprep.subr.bf16.mxu0 0
  %1207 = vmatpush1.bf16.msra.mxu0 %v950
  %1208 = vmatprep.subr.bf16.mxu0 0
  %1209 = vmatpush1.bf16.msra.mxu0 %v951
  %1210 = vmatprep.subr.bf16.mxu0 0
  %1211 = vmatpush1.bf16.msra.mxu0 %v952
  %1212 = vmatprep.subr.bf16.mxu0 0
  %1213 = vmatpush1.bf16.msra.mxu0 %v953
  %1214 = vmatprep.subr.bf16.mxu0 0
  %1215 = vmatpush1.bf16.msra.mxu0 %v954
  %1216 = vmatprep.subr.bf16.mxu0 0
  %1217 = vmatpush1.bf16.msra.mxu0 %v955
  %1218 = vmatprep.subr.bf16.mxu0 0
  %1219 = vmatpush1.bf16.msra.mxu0 %v956
  %1220 = vmatprep.subr.bf16.mxu0 0
  %1221 = vmatpush1.bf16.msra.mxu0 %v957
  %1222 = vmatprep.subr.bf16.mxu0 0
  %1223 = vmatpush1.bf16.msra.mxu0 %v958
  %1224 = vmatprep.subr.bf16.mxu0 0
  %1225 = vmatpush1.bf16.msra.mxu0 %v959
  %1226 = vmatprep.subr.bf16.mxu0 0
  %1227 = vmatpush1.bf16.msra.mxu0 %v960
  %1228 = vmatprep.subr.bf16.mxu0 0
  %1229 = vmatpush1.bf16.msra.mxu0 %v961
  %1230 = vmatprep.subr.bf16.mxu0 0
  %1231 = vmatpush1.bf16.msra.mxu0 %v962
  %1232 = vmatprep.subr.bf16.mxu0 0
  %1233 = vmatpush1.bf16.msra.mxu0 %v963
  %1234 = vmatprep.subr.bf16.mxu0 0
  %1235 = vmatpush1.bf16.msra.mxu0 %v964
  %1236 = vmatprep.subr.bf16.mxu0 0
  %1237 = vmatpush1.bf16.msra.mxu0 %v965
  %1238 = vmatprep.mubr.bf16.mxu0 %v375
  %1239 = vmatmul.mubr.bf16.gmra.mrb[0].mxu0 %v374
  %v1240 = vpop.f32.mrb[0].mxu0
  %v1241 = vadd.f32 %v300, %v1240
  %v1242 = vpop.f32.mrb[0].mxu0
  %v1243 = vpop.f32.mrb[0].mxu0
  %v1244 = vadd.f32 %v300, %v1243
  %v1245 = vpop.f32.mrb[0].mxu0
  %1246 = vmatprep.mubr.bf16.mxu0 %v391
  %1247 = vmatmul.mubr.bf16.gmra.mrb[0].mxu0 %v390
  %v1248 = vpop.f32.mrb[0].mxu0
  %v1249 = vadd.f32 %v300, %v1248
  %v1250 = vpop.f32.mrb[0].mxu0
  %v1251 = vpop.f32.mrb[0].mxu0
  %v1252 = vpop.f32.mrb[0].mxu0
  %1253 = vdwg.mxu0
  %1254 = vmatprep.subr.bf16.mxu0 0
  %1255 = vmatpush1.bf16.msra.mxu0 %v966
  %1256 = vmatprep.subr.bf16.mxu0 0
  %1257 = vmatpush1.bf16.msra.mxu0 %v967
  %1258 = vmatprep.subr.bf16.mxu0 0
  %1259 = vmatpush1.bf16.msra.mxu0 %v968
  %1260 = vmatprep.subr.bf16.mxu0 0
  %1261 = vmatpush1.bf16.msra.mxu0 %v969
  %1262 = vmatprep.subr.bf16.mxu0 0
  %1263 = vmatpush1.bf16.msra.mxu0 %v970
  %1264 = vmatprep.subr.bf16.mxu0 0
  %1265 = vmatpush1.bf16.msra.mxu0 %v971
  %1266 = vmatprep.subr.bf16.mxu0 0
  %1267 = vmatpush1.bf16.msra.mxu0 %v972
  %1268 = vmatprep.subr.bf16.mxu0 0
  %1269 = vmatpush1.bf16.msra.mxu0 %v973
  %1270 = vmatprep.subr.bf16.mxu0 0
  %1271 = vmatpush1.bf16.msra.mxu0 %v974
  %1272 = vmatprep.subr.bf16.mxu0 0
  %1273 = vmatpush1.bf16.msra.mxu0 %v975
  %1274 = vmatprep.subr.bf16.mxu0 0
  %1275 = vmatpush1.bf16.msra.mxu0 %v976
  %1276 = vmatprep.subr.bf16.mxu0 0
  %1277 = vmatpush1.bf16.msra.mxu0 %v977
  %1278 = vmatprep.subr.bf16.mxu0 0
  %1279 = vmatpush1.bf16.msra.mxu0 %v978
  %1280 = vmatprep.subr.bf16.mxu0 0
  %1281 = vmatpush1.bf16.msra.mxu0 %v979
  %1282 = vmatprep.subr.bf16.mxu0 0
  %1283 = vmatpush1.bf16.msra.mxu0 %v980
  %1284 = vmatprep.subr.bf16.mxu0 0
  %1285 = vmatpush1.bf16.msra.mxu0 %v981
  %1286 = vmatprep.mubr.bf16.mxu0 %v377
  %1287 = vmatmul.mubr.bf16.gmra.mrb[0].mxu0 %v376
  %v1288 = vpop.f32.mrb[0].mxu0
  %v1289 = vadd.f32 %v1241, %v1288
  %v1290 = vpop.f32.mrb[0].mxu0
  %v1291 = vpop.f32.mrb[0].mxu0
  %v1292 = vadd.f32 %v1244, %v1291
  %v1293 = vpop.f32.mrb[0].mxu0
  %1294 = vmatprep.mubr.bf16.mxu0 %v393
  %1295 = vmatmul.mubr.bf16.gmra.mrb[0].mxu0 %v392
  %v1296 = vpop.f32.mrb[0].mxu0
  %v1297 = vadd.f32 %v1249, %v1296
  %v1298 = vpop.f32.mrb[0].mxu0
  %v1299 = vpop.f32.mrb[0].mxu0
  %v1300 = vpop.f32.mrb[0].mxu0
  %1301 = vdwg.mxu0
  %1302 = vmatprep.subr.bf16.mxu0 0
  %1303 = vmatpush1.bf16.msra.mxu0 %v982
  %1304 = vmatprep.subr.bf16.mxu0 0
  %1305 = vmatpush1.bf16.msra.mxu0 %v983
  %1306 = vmatprep.subr.bf16.mxu0 0
  %1307 = vmatpush1.bf16.msra.mxu0 %v984
  %1308 = vmatprep.subr.bf16.mxu0 0
  %1309 = vmatpush1.bf16.msra.mxu0 %v985
  %1310 = vmatprep.subr.bf16.mxu0 0
  %1311 = vmatpush1.bf16.msra.mxu0 %v986
  %1312 = vmatprep.subr.bf16.mxu0 0
  %1313 = vmatpush1.bf16.msra.mxu0 %v987
  %1314 = vmatprep.subr.bf16.mxu0 0
  %1315 = vmatpush1.bf16.msra.mxu0 %v988
  %1316 = vmatprep.subr.bf16.mxu0 0
  %1317 = vmatpush1.bf16.msra.mxu0 %v989
  %1318 = vmatprep.subr.bf16.mxu0 0
  %1319 = vmatpush1.bf16.msra.mxu0 %v990
  %1320 = vmatprep.subr.bf16.mxu0 0
  %1321 = vmatpush1.bf16.msra.mxu0 %v991
  %1322 = vmatprep.subr.bf16.mxu0 0
  %1323 = vmatpush1.bf16.msra.mxu0 %v992
  %1324 = vmatprep.subr.bf16.mxu0 0
  %1325 = vmatpush1.bf16.msra.mxu0 %v993
  %1326 = vmatprep.subr.bf16.mxu0 0
  %1327 = vmatpush1.bf16.msra.mxu0 %v994
  %1328 = vmatprep.subr.bf16.mxu0 0
  %1329 = vmatpush1.bf16.msra.mxu0 %v995
  %1330 = vmatprep.subr.bf16.mxu0 0
  %1331 = vmatpush1.bf16.msra.mxu0 %v996
  %1332 = vmatprep.subr.bf16.mxu0 0
  %1333 = vmatpush1.bf16.msra.mxu0 %v997
  %1334 = vmatprep.mubr.bf16.mxu0 %v379
  %1335 = vmatmul.mubr.bf16.gmra.mrb[0].mxu0 %v378
  %v1336 = vpop.f32.mrb[0].mxu0
  %v1337 = vadd.f32 %v1289, %v1336
  %v1338 = vpop.f32.mrb[0].mxu0
  %v1339 = vpop.f32.mrb[0].mxu0
  %v1340 = vadd.f32 %v1292, %v1339
  %v1341 = vpop.f32.mrb[0].mxu0
  %1342 = vmatprep.mubr.bf16.mxu0 %v395
  %1343 = vmatmul.mubr.bf16.gmra.mrb[0].mxu0 %v394
  %v1344 = vpop.f32.mrb[0].mxu0
  %v1345 = vadd.f32 %v1297, %v1344
  %v1346 = vpop.f32.mrb[0].mxu0
  %v1347 = vpop.f32.mrb[0].mxu0
  %v1348 = vpop.f32.mrb[0].mxu0
  %1349 = vdwg.mxu0
  %1350 = vmatprep.subr.bf16.mxu0 0
  %1351 = vmatpush1.bf16.msra.mxu0 %v998
  %1352 = vmatprep.subr.bf16.mxu0 0
  %1353 = vmatpush1.bf16.msra.mxu0 %v999
  %1354 = vmatprep.subr.bf16.mxu0 0
  %1355 = vmatpush1.bf16.msra.mxu0 %v1000
  %1356 = vmatprep.subr.bf16.mxu0 0
  %1357 = vmatpush1.bf16.msra.mxu0 %v1001
  %1358 = vmatprep.subr.bf16.mxu0 0
  %1359 = vmatpush1.bf16.msra.mxu0 %v1002
  %1360 = vmatprep.subr.bf16.mxu0 0
  %1361 = vmatpush1.bf16.msra.mxu0 %v1003
  %1362 = vmatprep.subr.bf16.mxu0 0
  %1363 = vmatpush1.bf16.msra.mxu0 %v1004
  %1364 = vmatprep.subr.bf16.mxu0 0
  %1365 = vmatpush1.bf16.msra.mxu0 %v1005
  %1366 = vmatprep.subr.bf16.mxu0 0
  %1367 = vmatpush1.bf16.msra.mxu0 %v1006
  %1368 = vmatprep.subr.bf16.mxu0 0
  %1369 = vmatpush1.bf16.msra.mxu0 %v1007
  %1370 = vmatprep.subr.bf16.mxu0 0
  %1371 = vmatpush1.bf16.msra.mxu0 %v1008
  %1372 = vmatprep.subr.bf16.mxu0 0
  %1373 = vmatpush1.bf16.msra.mxu0 %v1009
  %1374 = vmatprep.subr.bf16.mxu0 0
  %1375 = vmatpush1.bf16.msra.mxu0 %v1010
  %1376 = vmatprep.subr.bf16.mxu0 0
  %1377 = vmatpush1.bf16.msra.mxu0 %v1011
  %1378 = vmatprep.subr.bf16.mxu0 0
  %1379 = vmatpush1.bf16.msra.mxu0 %v1012
  %1380 = vmatprep.subr.bf16.mxu0 0
  %1381 = vmatpush1.bf16.msra.mxu0 %v1013
  %1382 = vmatprep.mubr.bf16.mxu0 %v381
  %1383 = vmatmul.mubr.bf16.gmra.mrb[0].mxu0 %v380
  %v1384 = vpop.f32.mrb[0].mxu0
  %v1385 = vadd.f32 %v1337, %v1384
  %v1386 = vpop.f32.mrb[0].mxu0
  %v1387 = vpop.f32.mrb[0].mxu0
  %v1388 = vadd.f32 %v1340, %v1387
  %v1389 = vpop.f32.mrb[0].mxu0
  %1390 = vmatprep.mubr.bf16.mxu0 %v397
  %1391 = vmatmul.mubr.bf16.gmra.mrb[0].mxu0 %v396
  %v1392 = vpop.f32.mrb[0].mxu0
  %v1393 = vadd.f32 %v1345, %v1392
  %v1394 = vpop.f32.mrb[0].mxu0
  %v1395 = vpop.f32.mrb[0].mxu0
  %v1396 = vpop.f32.mrb[0].mxu0
  %1397 = vdwg.mxu0
  %1398 = vmatprep.subr.bf16.mxu0 0
  %1399 = vmatpush1.bf16.msra.mxu0 %v1014
  %1400 = vmatprep.subr.bf16.mxu0 0
  %1401 = vmatpush1.bf16.msra.mxu0 %v1015
  %1402 = vmatprep.subr.bf16.mxu0 0
  %1403 = vmatpush1.bf16.msra.mxu0 %v1016
  %1404 = vmatprep.subr.bf16.mxu0 0
  %1405 = vmatpush1.bf16.msra.mxu0 %v1017
  %1406 = vmatprep.subr.bf16.mxu0 0
  %1407 = vmatpush1.bf16.msra.mxu0 %v1018
  %1408 = vmatprep.subr.bf16.mxu0 0
  %1409 = vmatpush1.bf16.msra.mxu0 %v1019
  %1410 = vmatprep.subr.bf16.mxu0 0
  %1411 = vmatpush1.bf16.msra.mxu0 %v1020
  %1412 = vmatprep.subr.bf16.mxu0 0
  %1413 = vmatpush1.bf16.msra.mxu0 %v1021
  %1414 = vmatprep.subr.bf16.mxu0 0
  %1415 = vmatpush1.bf16.msra.mxu0 %v1022
  %1416 = vmatprep.subr.bf16.mxu0 0
  %1417 = vmatpush1.bf16.msra.mxu0 %v1023
  %1418 = vmatprep.subr.bf16.mxu0 0
  %1419 = vmatpush1.bf16.msra.mxu0 %v1024
  %1420 = vmatprep.subr.bf16.mxu0 0
  %1421 = vmatpush1.bf16.msra.mxu0 %v1025
  %1422 = vmatprep.subr.bf16.mxu0 0
  %1423 = vmatpush1.bf16.msra.mxu0 %v1026
  %1424 = vmatprep.subr.bf16.mxu0 0
  %1425 = vmatpush1.bf16.msra.mxu0 %v1027
  %1426 = vmatprep.subr.bf16.mxu0 0
  %1427 = vmatpush1.bf16.msra.mxu0 %v1028
  %1428 = vmatprep.subr.bf16.mxu0 0
  %1429 = vmatpush1.bf16.msra.mxu0 %v1029
  %1430 = vmatprep.mubr.bf16.mxu0 %v383
  %1431 = vmatmul.mubr.bf16.gmra.mrb[0].mxu0 %v382
  %v1432 = vpop.f32.mrb[0].mxu0
  %v1433 = vadd.f32 %v1385, %v1432
  %v1434 = vpop.f32.mrb[0].mxu0
  %v1435 = vpop.f32.mrb[0].mxu0
  %v1436 = vadd.f32 %v1388, %v1435
  %v1437 = vpop.f32.mrb[0].mxu0
  %1438 = vmatprep.mubr.bf16.mxu0 %v399
  %1439 = vmatmul.mubr.bf16.gmra.mrb[0].mxu0 %v398
  %v1440 = vpop.f32.mrb[0].mxu0
  %v1441 = vadd.f32 %v1393, %v1440
  %v1442 = vpop.f32.mrb[0].mxu0
  %v1443 = vpop.f32.mrb[0].mxu0
  %v1444 = vpop.f32.mrb[0].mxu0
  %1445 = vdwg.mxu0
  %1446 = vmatprep.subr.bf16.mxu0 0
  %1447 = vmatpush1.bf16.msra.mxu0 %v1030
  %1448 = vmatprep.subr.bf16.mxu0 0
  %1449 = vmatpush1.bf16.msra.mxu0 %v1031
  %1450 = vmatprep.subr.bf16.mxu0 0
  %1451 = vmatpush1.bf16.msra.mxu0 %v1032
  %1452 = vmatprep.subr.bf16.mxu0 0
  %1453 = vmatpush1.bf16.msra.mxu0 %v1033
  %1454 = vmatprep.subr.bf16.mxu0 0
  %1455 = vmatpush1.bf16.msra.mxu0 %v1034
  %1456 = vmatprep.subr.bf16.mxu0 0
  %1457 = vmatpush1.bf16.msra.mxu0 %v1035
  %1458 = vmatprep.subr.bf16.mxu0 0
  %1459 = vmatpush1.bf16.msra.mxu0 %v1036
  %1460 = vmatprep.subr.bf16.mxu0 0
  %1461 = vmatpush1.bf16.msra.mxu0 %v1037
  %1462 = vmatprep.subr.bf16.mxu0 0
  %1463 = vmatpush1.bf16.msra.mxu0 %v1038
  %1464 = vmatprep.subr.bf16.mxu0 0
  %1465 = vmatpush1.bf16.msra.mxu0 %v1039
  %1466 = vmatprep.subr.bf16.mxu0 0
  %1467 = vmatpush1.bf16.msra.mxu0 %v1040
  %1468 = vmatprep.subr.bf16.mxu0 0
  %1469 = vmatpush1.bf16.msra.mxu0 %v1041
  %1470 = vmatprep.subr.bf16.mxu0 0
  %1471 = vmatpush1.bf16.msra.mxu0 %v1042
  %1472 = vmatprep.subr.bf16.mxu0 0
  %1473 = vmatpush1.bf16.msra.mxu0 %v1043
  %1474 = vmatprep.subr.bf16.mxu0 0
  %1475 = vmatpush1.bf16.msra.mxu0 %v1044
  %1476 = vmatprep.subr.bf16.mxu0 0
  %1477 = vmatpush1.bf16.msra.mxu0 %v1045
  %1478 = vmatprep.mubr.bf16.mxu0 %v385
  %1479 = vmatmul.mubr.bf16.gmra.mrb[0].mxu0 %v384
  %v1480 = vpop.f32.mrb[0].mxu0
  %v1481 = vadd.f32 %v1433, %v1480
  %v1482 = vpop.f32.mrb[0].mxu0
  %v1483 = vpop.f32.mrb[0].mxu0
  %v1484 = vadd.f32 %v1436, %v1483
  %v1485 = vpop.f32.mrb[0].mxu0
  %1486 = vmatprep.mubr.bf16.mxu0 %v401
  %1487 = vmatmul.mubr.bf16.gmra.mrb[0].mxu0 %v400
  %v1488 = vpop.f32.mrb[0].mxu0
  %v1489 = vadd.f32 %v1441, %v1488
  %v1490 = vpop.f32.mrb[0].mxu0
  %v1491 = vpop.f32.mrb[0].mxu0
  %v1492 = vpop.f32.mrb[0].mxu0
  %1493 = vdwg.mxu0
  %1494 = vmatprep.subr.bf16.mxu0 0
  %1495 = vmatpush1.bf16.msra.mxu0 %v1046
  %1496 = vmatprep.subr.bf16.mxu0 0
  %1497 = vmatpush1.bf16.msra.mxu0 %v1047
  %1498 = vmatprep.subr.bf16.mxu0 0
  %1499 = vmatpush1.bf16.msra.mxu0 %v1048
  %1500 = vmatprep.subr.bf16.mxu0 0
  %1501 = vmatpush1.bf16.msra.mxu0 %v1049
  %1502 = vmatprep.subr.bf16.mxu0 0
  %1503 = vmatpush1.bf16.msra.mxu0 %v1050
  %1504 = vmatprep.subr.bf16.mxu0 0
  %1505 = vmatpush1.bf16.msra.mxu0 %v1051
  %1506 = vmatprep.subr.bf16.mxu0 0
  %1507 = vmatpush1.bf16.msra.mxu0 %v1052
  %1508 = vmatprep.subr.bf16.mxu0 0
  %1509 = vmatpush1.bf16.msra.mxu0 %v1053
  %1510 = vmatprep.subr.bf16.mxu0 0
  %1511 = vmatpush1.bf16.msra.mxu0 %v1054
  %1512 = vmatprep.subr.bf16.mxu0 0
  %1513 = vmatpush1.bf16.msra.mxu0 %v1055
  %1514 = vmatprep.subr.bf16.mxu0 0
  %1515 = vmatpush1.bf16.msra.mxu0 %v1056
  %1516 = vmatprep.subr.bf16.mxu0 0
  %1517 = vmatpush1.bf16.msra.mxu0 %v1057
  %1518 = vmatprep.subr.bf16.mxu0 0
  %1519 = vmatpush1.bf16.msra.mxu0 %v1058
  %1520 = vmatprep.subr.bf16.mxu0 0
  %1521 = vmatpush1.bf16.msra.mxu0 %v1059
  %1522 = vmatprep.subr.bf16.mxu0 0
  %1523 = vmatpush1.bf16.msra.mxu0 %v1060
  %1524 = vmatprep.subr.bf16.mxu0 0
  %1525 = vmatpush1.bf16.msra.mxu0 %v1061
  %1526 = vmatprep.mubr.bf16.mxu0 %v387
  %1527 = vmatmul.mubr.bf16.gmra.mrb[0].mxu0 %v386
  %v1528 = vpop.f32.mrb[0].mxu0
  %v1529 = vadd.f32 %v1481, %v1528
  %v1530 = vpop.f32.mrb[0].mxu0
  %v1531 = vpop.f32.mrb[0].mxu0
  %v1532 = vadd.f32 %v1484, %v1531
  %v1533 = vpop.f32.mrb[0].mxu0
  %1534 = vmatprep.mubr.bf16.mxu0 %v403
  %1535 = vmatmul.mubr.bf16.gmra.mrb[0].mxu0 %v402
  %v1536 = vpop.f32.mrb[0].mxu0
  %v1537 = vadd.f32 %v1489, %v1536
  %v1538 = vpop.f32.mrb[0].mxu0
  %v1539 = vpop.f32.mrb[0].mxu0
  %v1540 = vpop.f32.mrb[0].mxu0
  %1541 = vdwg.mxu0
  %1542 = vmatprep.subr.bf16.mxu0 0
  %1543 = vmatpush1.bf16.msra.mxu0 %v1062
  %1544 = vmatprep.subr.bf16.mxu0 0
  %1545 = vmatpush1.bf16.msra.mxu0 %v1063
  %1546 = vmatprep.subr.bf16.mxu0 0
  %1547 = vmatpush1.bf16.msra.mxu0 %v1064
  %1548 = vmatprep.subr.bf16.mxu0 0
  %1549 = vmatpush1.bf16.msra.mxu0 %v1065
  %1550 = vmatprep.subr.bf16.mxu0 0
  %1551 = vmatpush1.bf16.msra.mxu0 %v1066
  %1552 = vmatprep.subr.bf16.mxu0 0
  %1553 = vmatpush1.bf16.msra.mxu0 %v1067
  %1554 = vmatprep.subr.bf16.mxu0 0
  %1555 = vmatpush1.bf16.msra.mxu0 %v1068
  %1556 = vmatprep.subr.bf16.mxu0 0
  %1557 = vmatpush1.bf16.msra.mxu0 %v1069
  %1558 = vmatprep.subr.bf16.mxu0 0
  %1559 = vmatpush1.bf16.msra.mxu0 %v1070
  %1560 = vmatprep.subr.bf16.mxu0 0
  %1561 = vmatpush1.bf16.msra.mxu0 %v1071
  %1562 = vmatprep.subr.bf16.mxu0 0
  %1563 = vmatpush1.bf16.msra.mxu0 %v1072
  %1564 = vmatprep.subr.bf16.mxu0 0
  %1565 = vmatpush1.bf16.msra.mxu0 %v1073
  %1566 = vmatprep.subr.bf16.mxu0 0
  %1567 = vmatpush1.bf16.msra.mxu0 %v1074
  %1568 = vmatprep.subr.bf16.mxu0 0
  %1569 = vmatpush1.bf16.msra.mxu0 %v1075
  %1570 = vmatprep.subr.bf16.mxu0 0
  %1571 = vmatpush1.bf16.msra.mxu0 %v1076
  %1572 = vmatprep.subr.bf16.mxu0 0
  %1573 = vmatpush1.bf16.msra.mxu0 %v1077
  %1574 = vmatprep.mubr.bf16.mxu0 %v389
  %1575 = vmatmul.mubr.bf16.gmra.mrb[0].mxu0 %v388
  %v1576 = vpop.f32.mrb[0].mxu0
  %v1577 = vadd.f32 %v1529, %v1576
  %v1578 = vpop.f32.mrb[0].mxu0
  %v1579 = vpop.f32.mrb[0].mxu0
  %v1580 = vadd.f32 %v1532, %v1579
  %v1581 = vpop.f32.mrb[0].mxu0
  %1582 = vmatprep.mubr.bf16.mxu0 %v405
  %1583 = vmatmul.mubr.bf16.gmra.mrb[0].mxu0 %v404
  %v1584 = vpop.f32.mrb[0].mxu0
  %v1585 = vadd.f32 %v1537, %v1584
  %v1586 = vpop.f32.mrb[0].mxu0
  %v1587 = vpop.f32.mrb[0].mxu0
  %v1588 = vpop.f32.mrb[0].mxu0
  %1589 = vdwg.mxu0
  %v1590 = vmax.f32 %v1577, 0.0
  %v1591 = vmax.f32 %v1580, 0.0
  %v1592 = vmax.f32 %v1585, 0.0
  %v1593 = vpack.c.bf16 %v1591, %v1590
  %v1594 = vpack.c.bf16 %v1592, %v1592
  %v1597 = vunpack.c.l.b16 %v1593
  %v1598 = vunpack.c.h.b16 %v1593
  %v1599 = vunpack.c.l.b16 %v1594
  %v1600 = vpack.c.b16 %v1597, %v1597
  %v1601 = vpack.c.b16 %v1598, %v1598
  %v1602 = vpack.c.b16 %v1599, %v1599
  %1606 = vst [vmem:[%s3] sm:$0xf] %v1600
  %1607 = vst [vmem:[%s3 + $0x4] sm:$0xf] %v1601
  %1608 = vst [vmem:[%s3 + $0x8] sm:$0x1] %v1602
  // Predicated region
  $region14: #{_lambda_.5} parent=0 // pred_check
    _
  $region15: #{_lambda_.5} parent=0 // pred_check_branch
    %1610 = sbr.rel (0) target = $region17
  $region16: #{_lambda_.5} parent=0 // pred_region
    _
  $region17: #{_lambda_.5} parent=0 // pred_fallthru
    _
  // Predicated region
  $region18: #{_lambda_.5} parent=0 // pred_check
    _
  $region19: #{_lambda_.5} parent=0 // pred_check_branch
    %1612 = sbr.rel (0) target = $region21
  $region20: #{_lambda_.5} parent=0 // pred_region
    _
  $region21: #{_lambda_.5} parent=0 // pred_fallthru
    _

// kernel: _lambda_.6
$region0: #{_lambda_.6}
  #allocation0 [shape = 'u32[]', space=smem, size = 0x4, offset = 0x4, fixed_abs, tag = 'smem constant byte address 0x4 - core index']
  #allocation1 [shape = 'u32[144,128]{1,0:T(1,128)}', space=vmem, size = 0x12000, scoped, tag = 'internal scratch']
  %s0 = inlined_call_operand.vmem [shape: bf16[2,1152], index: 0, kind: input, shape index: {}]
  %s1 = inlined_call_operand.vmem [shape: bf16[1152,128], index: 1, kind: input, shape index: {}]
  %s2 = inlined_call_operand.vmem [shape: f32[1,128], index: 2, kind: input, shape index: {}]
  %s3 = inlined_call_operand.vmem [shape: bf16[2,128], index: 3, kind: output, shape index: {}]
  %s4 = sld [smem:[#allocation0]]
  $region22: #{_lambda_.6} parent=0
    _
  %s6 = ssub.s32 1, %s4
  %s7 = scalar_select 0, %s6, %s4
  // Predicated region
  $region2: #{_lambda_.6} parent=0 // pred_check
    _
  $region3: #{_lambda_.6} parent=0 // pred_check_branch
    %9 = sbr.rel (0) target = $region5
  $region4: #{_lambda_.6} parent=0 // pred_region
    _
  $region5: #{_lambda_.6} parent=0 // pred_fallthru
    _
  // Predicated region
  $region6: #{_lambda_.6} parent=0 // pred_check
    _
  $region7: #{_lambda_.6} parent=0 // pred_check_branch
    %11 = sbr.rel (0) target = $region9
  $region8: #{_lambda_.6} parent=0 // pred_region
    _
  $region9: #{_lambda_.6} parent=0 // pred_fallthru
    _
  // Predicated region
  $region10: #{_lambda_.6} parent=0 // pred_check
    _
  $region11: #{_lambda_.6} parent=0 // pred_check_branch
    %13 = sbr.rel (0) target = $region13
  $region12: #{_lambda_.6} parent=0 // pred_region
    _
  $region13: #{_lambda_.6} parent=0 // pred_fallthru
    _
  %v15 = vld [vmem:[%s0] sm:$0xff]
  %v16 = vld [vmem:[%s0 + $0x8] sm:$0x1]
  %v17 = vld [vmem:[%s1] sm:$0xf]
  %v18 = vld [vmem:[%s1 + $0x4] sm:$0xf]
  %v19 = vld [vmem:[%s1 + $0x8] sm:$0xf]
  %v20 = vld [vmem:[%s1 + $0xc] sm:$0xf]
  %v21 = vld [vmem:[%s1 + $0x10] sm:$0xf]
  %v22 = vld [vmem:[%s1 + $0x14] sm:$0xf]
  %v23 = vld [vmem:[%s1 + $0x18] sm:$0xf]
  %v24 = vld [vmem:[%s1 + $0x1c] sm:$0xf]
  %v25 = vld [vmem:[%s1 + $0x20] sm:$0xf]
  %v26 = vld [vmem:[%s1 + $0x24] sm:$0xf]
  %v27 = vld [vmem:[%s1 + $0x28] sm:$0xf]
  %v28 = vld [vmem:[%s1 + $0x2c] sm:$0xf]
  %v29 = vld [vmem:[%s1 + $0x30] sm:$0xf]
  %v30 = vld [vmem:[%s1 + $0x34] sm:$0xf]
  %v31 = vld [vmem:[%s1 + $0x38] sm:$0xf]
  %v32 = vld [vmem:[%s1 + $0x3c] sm:$0xf]
  %v33 = vld [vmem:[%s1 + $0x40] sm:$0xf]
  %v34 = vld [vmem:[%s1 + $0x44] sm:$0xf]
  %v35 = vld [vmem:[%s1 + $0x48] sm:$0xf]
  %v36 = vld [vmem:[%s1 + $0x4c] sm:$0xf]
  %v37 = vld [vmem:[%s1 + $0x50] sm:$0xf]
  %v38 = vld [vmem:[%s1 + $0x54] sm:$0xf]
  %v39 = vld [vmem:[%s1 + $0x58] sm:$0xf]
  %v40 = vld [vmem:[%s1 + $0x5c] sm:$0xf]
  %v41 = vld [vmem:[%s1 + $0x60] sm:$0xf]
  %v42 = vld [vmem:[%s1 + $0x64] sm:$0xf]
  %v43 = vld [vmem:[%s1 + $0x68] sm:$0xf]
  %v44 = vld [vmem:[%s1 + $0x6c] sm:$0xf]
  %v45 = vld [vmem:[%s1 + $0x70] sm:$0xf]
  %v46 = vld [vmem:[%s1 + $0x74] sm:$0xf]
  %v47 = vld [vmem:[%s1 + $0x78] sm:$0xf]
  %v48 = vld [vmem:[%s1 + $0x7c] sm:$0xf]
  %v49 = vld [vmem:[%s1 + $0x80] sm:$0xf]
  %v50 = vld [vmem:[%s1 + $0x84] sm:$0xf]
  %v51 = vld [vmem:[%s1 + $0x88] sm:$0xf]
  %v52 = vld [vmem:[%s1 + $0x8c] sm:$0xf]
  %v53 = vld [vmem:[%s1 + $0x90] sm:$0xf]
  %v54 = vld [vmem:[%s1 + $0x94] sm:$0xf]
  %v55 = vld [vmem:[%s1 + $0x98] sm:$0xf]
  %v56 = vld [vmem:[%s1 + $0x9c] sm:$0xf]
  %v57 = vld [vmem:[%s1 + $0xa0] sm:$0xf]
  %v58 = vld [vmem:[%s1 + $0xa4] sm:$0xf]
  %v59 = vld [vmem:[%s1 + $0xa8] sm:$0xf]
  %v60 = vld [vmem:[%s1 + $0xac] sm:$0xf]
  %v61 = vld [vmem:[%s1 + $0xb0] sm:$0xf]
  %v62 = vld [vmem:[%s1 + $0xb4] sm:$0xf]
  %v63 = vld [vmem:[%s1 + $0xb8] sm:$0xf]
  %v64 = vld [vmem:[%s1 + $0xbc] sm:$0xf]
  %v65 = vld [vmem:[%s1 + $0xc0] sm:$0xf]
  %v66 = vld [vmem:[%s1 + $0xc4] sm:$0xf]
  %v67 = vld [vmem:[%s1 + $0xc8] sm:$0xf]
  %v68 = vld [vmem:[%s1 + $0xcc] sm:$0xf]
  %v69 = vld [vmem:[%s1 + $0xd0] sm:$0xf]
  %v70 = vld [vmem:[%s1 + $0xd4] sm:$0xf]
  %v71 = vld [vmem:[%s1 + $0xd8] sm:$0xf]
  %v72 = vld [vmem:[%s1 + $0xdc] sm:$0xf]
  %v73 = vld [vmem:[%s1 + $0xe0] sm:$0xf]
  %v74 = vld [vmem:[%s1 + $0xe4] sm:$0xf]
  %v75 = vld [vmem:[%s1 + $0xe8] sm:$0xf]
  %v76 = vld [vmem:[%s1 + $0xec] sm:$0xf]
  %v77 = vld [vmem:[%s1 + $0xf0] sm:$0xf]
  %v78 = vld [vmem:[%s1 + $0xf4] sm:$0xf]
  %v79 = vld [vmem:[%s1 + $0xf8] sm:$0xf]
  %v80 = vld [vmem:[%s1 + $0xfc] sm:$0xf]
  %v81 = vld [vmem:[%s1 + $0x100] sm:$0xf]
  %v82 = vld [vmem:[%s1 + $0x104] sm:$0xf]
  %v83 = vld [vmem:[%s1 + $0x108] sm:$0xf]
  %v84 = vld [vmem:[%s1 + $0x10c] sm:$0xf]
  %v85 = vld [vmem:[%s1 + $0x110] sm:$0xf]
  %v86 = vld [vmem:[%s1 + $0x114] sm:$0xf]
  %v87 = vld [vmem:[%s1 + $0x118] sm:$0xf]
  %v88 = vld [vmem:[%s1 + $0x11c] sm:$0xf]
  %v89 = vld [vmem:[%s1 + $0x120] sm:$0xf]
  %v90 = vld [vmem:[%s1 + $0x124] sm:$0xf]
  %v91 = vld [vmem:[%s1 + $0x128] sm:$0xf]
  %v92 = vld [vmem:[%s1 + $0x12c] sm:$0xf]
  %v93 = vld [vmem:[%s1 + $0x130] sm:$0xf]
  %v94 = vld [vmem:[%s1 + $0x134] sm:$0xf]
  %v95 = vld [vmem:[%s1 + $0x138] sm:$0xf]
  %v96 = vld [vmem:[%s1 + $0x13c] sm:$0xf]
  %v97 = vld [vmem:[%s1 + $0x140] sm:$0xf]
  %v98 = vld [vmem:[%s1 + $0x144] sm:$0xf]
  %v99 = vld [vmem:[%s1 + $0x148] sm:$0xf]
  %v100 = vld [vmem:[%s1 + $0x14c] sm:$0xf]
  %v101 = vld [vmem:[%s1 + $0x150] sm:$0xf]
  %v102 = vld [vmem:[%s1 + $0x154] sm:$0xf]
  %v103 = vld [vmem:[%s1 + $0x158] sm:$0xf]
  %v104 = vld [vmem:[%s1 + $0x15c] sm:$0xf]
  %v105 = vld [vmem:[%s1 + $0x160] sm:$0xf]
  %v106 = vld [vmem:[%s1 + $0x164] sm:$0xf]
  %v107 = vld [vmem:[%s1 + $0x168] sm:$0xf]
  %v108 = vld [vmem:[%s1 + $0x16c] sm:$0xf]
  %v109 = vld [vmem:[%s1 + $0x170] sm:$0xf]
  %v110 = vld [vmem:[%s1 + $0x174] sm:$0xf]
  %v111 = vld [vmem:[%s1 + $0x178] sm:$0xf]
  %v112 = vld [vmem:[%s1 + $0x17c] sm:$0xf]
  %v113 = vld [vmem:[%s1 + $0x180] sm:$0xf]
  %v114 = vld [vmem:[%s1 + $0x184] sm:$0xf]
  %v115 = vld [vmem:[%s1 + $0x188] sm:$0xf]
  %v116 = vld [vmem:[%s1 + $0x18c] sm:$0xf]
  %v117 = vld [vmem:[%s1 + $0x190] sm:$0xf]
  %v118 = vld [vmem:[%s1 + $0x194] sm:$0xf]
  %v119 = vld [vmem:[%s1 + $0x198] sm:$0xf]
  %v120 = vld [vmem:[%s1 + $0x19c] sm:$0xf]
  %v121 = vld [vmem:[%s1 + $0x1a0] sm:$0xf]
  %v122 = vld [vmem:[%s1 + $0x1a4] sm:$0xf]
  %v123 = vld [vmem:[%s1 + $0x1a8] sm:$0xf]
  %v124 = vld [vmem:[%s1 + $0x1ac] sm:$0xf]
  %v125 = vld [vmem:[%s1 + $0x1b0] sm:$0xf]
  %v126 = vld [vmem:[%s1 + $0x1b4] sm:$0xf]
  %v127 = vld [vmem:[%s1 + $0x1b8] sm:$0xf]
  %v128 = vld [vmem:[%s1 + $0x1bc] sm:$0xf]
  %v129 = vld [vmem:[%s1 + $0x1c0] sm:$0xf]
  %v130 = vld [vmem:[%s1 + $0x1c4] sm:$0xf]
  %v131 = vld [vmem:[%s1 + $0x1c8] sm:$0xf]
  %v132 = vld [vmem:[%s1 + $0x1cc] sm:$0xf]
  %v133 = vld [vmem:[%s1 + $0x1d0] sm:$0xf]
  %v134 = vld [vmem:[%s1 + $0x1d4] sm:$0xf]
  %v135 = vld [vmem:[%s1 + $0x1d8] sm:$0xf]
  %v136 = vld [vmem:[%s1 + $0x1dc] sm:$0xf]
  %v137 = vld [vmem:[%s1 + $0x1e0] sm:$0xf]
  %v138 = vld [vmem:[%s1 + $0x1e4] sm:$0xf]
  %v139 = vld [vmem:[%s1 + $0x1e8] sm:$0xf]
  %v140 = vld [vmem:[%s1 + $0x1ec] sm:$0xf]
  %v141 = vld [vmem:[%s1 + $0x1f0] sm:$0xf]
  %v142 = vld [vmem:[%s1 + $0x1f4] sm:$0xf]
  %v143 = vld [vmem:[%s1 + $0x1f8] sm:$0xf]
  %v144 = vld [vmem:[%s1 + $0x1fc] sm:$0xf]
  %v145 = vld [vmem:[%s1 + $0x200] sm:$0xf]
  %v146 = vld [vmem:[%s1 + $0x204] sm:$0xf]
  %v147 = vld [vmem:[%s1 + $0x208] sm:$0xf]
  %v148 = vld [vmem:[%s1 + $0x20c] sm:$0xf]
  %v149 = vld [vmem:[%s1 + $0x210] sm:$0xf]
  %v150 = vld [vmem:[%s1 + $0x214] sm:$0xf]
  %v151 = vld [vmem:[%s1 + $0x218] sm:$0xf]
  %v152 = vld [vmem:[%s1 + $0x21c] sm:$0xf]
  %v153 = vld [vmem:[%s1 + $0x220] sm:$0xf]
  %v154 = vld [vmem:[%s1 + $0x224] sm:$0xf]
  %v155 = vld [vmem:[%s1 + $0x228] sm:$0xf]
  %v156 = vld [vmem:[%s1 + $0x22c] sm:$0xf]
  %v157 = vld [vmem:[%s1 + $0x230] sm:$0xf]
  %v158 = vld [vmem:[%s1 + $0x234] sm:$0xf]
  %v159 = vld [vmem:[%s1 + $0x238] sm:$0xf]
  %v160 = vld [vmem:[%s1 + $0x23c] sm:$0xf]
  %v161 = vld [vmem:[%s2] sm:$0x1]
  %v163 = vlaneseq
  %v164 = vshrl.u32 %v163, 7
  %v165 = vsub.s32 0, %v164
  %v166 = vrot.slane %v161, %v165
  %v170 = vcombine.high %v15, %v15
  %v172 = vunpack.c.l.s4 1966171168
  %v173 = vunpack.c.0.s8 %v172
  %v174 = vlaneseq
  %v175 = vshrl.u32 %v174, 7
  %v176 = vsub.s32 %v173, %v175
  %v177 = vrot.slane %v15, %v176
  %v179 = vunpack.c.l.s4 1966171168
  %v180 = vunpack.c.0.s8 %v179
  %v181 = vlaneseq
  %v182 = vshrl.u32 %v181, 7
  %v183 = vsub.s32 %v180, %v182
  %v184 = vrot.slane %v170, %v183
  %v185 = vcombine.high %v177, %v177
  %v186 = vcombine.high %v184, %v184
  %v188 = vunpack.c.l.s4 1966171168
  %v189 = vunpack.c.0.s8 %v188
  %v190 = vlaneseq
  %v191 = vshrl.u32 %v190, 7
  %v192 = vsub.s32 %v189, %v191
  %v193 = vrot.slane %v177, %v192
  %v195 = vunpack.c.l.s4 1966171168
  %v196 = vunpack.c.0.s8 %v195
  %v197 = vlaneseq
  %v198 = vshrl.u32 %v197, 7
  %v199 = vsub.s32 %v196, %v198
  %v200 = vrot.slane %v184, %v199
  %v202 = vunpack.c.l.s4 1966171168
  %v203 = vunpack.c.0.s8 %v202
  %v204 = vlaneseq
  %v205 = vshrl.u32 %v204, 7
  %v206 = vsub.s32 %v203, %v205
  %v207 = vrot.slane %v185, %v206
  %v209 = vunpack.c.l.s4 1966171168
  %v210 = vunpack.c.0.s8 %v209
  %v211 = vlaneseq
  %v212 = vshrl.u32 %v211, 7
  %v213 = vsub.s32 %v210, %v212
  %v214 = vrot.slane %v186, %v213
  %v215 = vcombine.high %v193, %v193
  %v216 = vcombine.high %v200, %v200
  %v217 = vcombine.high %v207, %v207
  %v218 = vcombine.high %v214, %v214
  %v220 = vunpack.c.l.s4 1966171168
  %v221 = vunpack.c.0.s8 %v220
  %v222 = vlaneseq
  %v223 = vshrl.u32 %v222, 7
  %v224 = vsub.s32 %v221, %v223
  %v225 = vrot.slane %v16, %v224
  %v227 = vunpack.c.l.s4 1966171168
  %v228 = vunpack.c.0.s8 %v227
  %v229 = vlaneseq
  %v230 = vshrl.u32 %v229, 7
  %v231 = vsub.s32 %v228, %v230
  %v232 = vrot.slane %v225, %v231
  %v386 = vunpack.c.l.b16 %v17
  %v387 = vunpack.c.l.b16 %v18
  %v388 = vunpack.c.l.b16 %v19
  %v389 = vunpack.c.l.b16 %v20
  %v390 = vunpack.c.l.b16 %v21
  %v391 = vunpack.c.l.b16 %v22
  %v392 = vunpack.c.l.b16 %v23
  %v393 = vunpack.c.l.b16 %v24
  %v394 = vunpack.c.l.b16 %v25
  %v395 = vunpack.c.l.b16 %v26
  %v396 = vunpack.c.l.b16 %v27
  %v397 = vunpack.c.l.b16 %v28
  %v398 = vunpack.c.l.b16 %v29
  %v399 = vunpack.c.l.b16 %v30
  %v400 = vunpack.c.l.b16 %v31
  %v401 = vunpack.c.l.b16 %v32
  %v402 = vunpack.c.l.b16 %v33
  %v403 = vunpack.c.l.b16 %v34
  %v404 = vunpack.c.l.b16 %v35
  %v405 = vunpack.c.l.b16 %v36
  %v406 = vunpack.c.l.b16 %v37
  %v407 = vunpack.c.l.b16 %v38
  %v408 = vunpack.c.l.b16 %v39
  %v409 = vunpack.c.l.b16 %v40
  %v410 = vunpack.c.l.b16 %v41
  %v411 = vunpack.c.l.b16 %v42
  %v412 = vunpack.c.l.b16 %v43
  %v413 = vunpack.c.l.b16 %v44
  %v414 = vunpack.c.l.b16 %v45
  %v415 = vunpack.c.l.b16 %v46
  %v416 = vunpack.c.l.b16 %v47
  %v417 = vunpack.c.l.b16 %v48
  %v418 = vunpack.c.l.b16 %v49
  %v419 = vunpack.c.l.b16 %v50
  %v420 = vunpack.c.l.b16 %v51
  %v421 = vunpack.c.l.b16 %v52
  %v422 = vunpack.c.l.b16 %v53
  %v423 = vunpack.c.l.b16 %v54
  %v424 = vunpack.c.l.b16 %v55
  %v425 = vunpack.c.l.b16 %v56
  %v426 = vunpack.c.l.b16 %v57
  %v427 = vunpack.c.l.b16 %v58
  %v428 = vunpack.c.l.b16 %v59
  %v429 = vunpack.c.l.b16 %v60
  %v430 = vunpack.c.l.b16 %v61
  %v431 = vunpack.c.l.b16 %v62
  %v432 = vunpack.c.l.b16 %v63
  %v433 = vunpack.c.l.b16 %v64
  %v434 = vunpack.c.l.b16 %v65
  %v435 = vunpack.c.l.b16 %v66
  %v436 = vunpack.c.l.b16 %v67
  %v437 = vunpack.c.l.b16 %v68
  %v438 = vunpack.c.l.b16 %v69
  %v439 = vunpack.c.l.b16 %v70
  %v440 = vunpack.c.l.b16 %v71
  %v441 = vunpack.c.l.b16 %v72
  %v442 = vunpack.c.l.b16 %v73
  %v443 = vunpack.c.l.b16 %v74
  %v444 = vunpack.c.l.b16 %v75
  %v445 = vunpack.c.l.b16 %v76
  %v446 = vunpack.c.l.b16 %v77
  %v447 = vunpack.c.l.b16 %v78
  %v448 = vunpack.c.l.b16 %v79
  %v449 = vunpack.c.l.b16 %v80
  %v450 = vunpack.c.l.b16 %v81
  %v451 = vunpack.c.l.b16 %v82
  %v452 = vunpack.c.l.b16 %v83
  %v453 = vunpack.c.l.b16 %v84
  %v454 = vunpack.c.l.b16 %v85
  %v455 = vunpack.c.l.b16 %v86
  %v456 = vunpack.c.l.b16 %v87
  %v457 = vunpack.c.l.b16 %v88
  %v458 = vunpack.c.l.b16 %v89
  %v459 = vunpack.c.l.b16 %v90
  %v460 = vunpack.c.l.b16 %v91
  %v461 = vunpack.c.l.b16 %v92
  %v462 = vunpack.c.l.b16 %v93
  %v463 = vunpack.c.l.b16 %v94
  %v464 = vunpack.c.l.b16 %v95
  %v465 = vunpack.c.l.b16 %v96
  %v466 = vunpack.c.l.b16 %v97
  %v467 = vunpack.c.l.b16 %v98
  %v468 = vunpack.c.l.b16 %v99
  %v469 = vunpack.c.l.b16 %v100
  %v470 = vunpack.c.l.b16 %v101
  %v471 = vunpack.c.l.b16 %v102
  %v472 = vunpack.c.l.b16 %v103
  %v473 = vunpack.c.l.b16 %v104
  %v474 = vunpack.c.l.b16 %v105
  %v475 = vunpack.c.l.b16 %v106
  %v476 = vunpack.c.l.b16 %v107
  %v477 = vunpack.c.l.b16 %v108
  %v478 = vunpack.c.l.b16 %v109
  %v479 = vunpack.c.l.b16 %v110
  %v480 = vunpack.c.l.b16 %v111
  %v481 = vunpack.c.l.b16 %v112
  %v482 = vunpack.c.l.b16 %v113
  %v483 = vunpack.c.l.b16 %v114
  %v484 = vunpack.c.l.b16 %v115
  %v485 = vunpack.c.l.b16 %v116
  %v486 = vunpack.c.l.b16 %v117
  %v487 = vunpack.c.l.b16 %v118
  %v488 = vunpack.c.l.b16 %v119
  %v489 = vunpack.c.l.b16 %v120
  %v490 = vunpack.c.l.b16 %v121
  %v491 = vunpack.c.l.b16 %v122
  %v492 = vunpack.c.l.b16 %v123
  %v493 = vunpack.c.l.b16 %v124
  %v494 = vunpack.c.l.b16 %v125
  %v495 = vunpack.c.l.b16 %v126
  %v496 = vunpack.c.l.b16 %v127
  %v497 = vunpack.c.l.b16 %v128
  %v498 = vunpack.c.l.b16 %v129
  %v499 = vunpack.c.l.b16 %v130
  %v500 = vunpack.c.l.b16 %v131
  %v501 = vunpack.c.l.b16 %v132
  %v502 = vunpack.c.l.b16 %v133
  %v503 = vunpack.c.l.b16 %v134
  %v504 = vunpack.c.l.b16 %v135
  %v505 = vunpack.c.l.b16 %v136
  %v506 = vunpack.c.l.b16 %v137
  %v507 = vunpack.c.l.b16 %v138
  %v508 = vunpack.c.l.b16 %v139
  %v509 = vunpack.c.l.b16 %v140
  %v510 = vunpack.c.l.b16 %v141
  %v511 = vunpack.c.l.b16 %v142
  %v512 = vunpack.c.l.b16 %v143
  %v513 = vunpack.c.l.b16 %v144
  %v514 = vunpack.c.l.b16 %v145
  %v515 = vunpack.c.l.b16 %v146
  %v516 = vunpack.c.l.b16 %v147
  %v517 = vunpack.c.l.b16 %v148
  %v518 = vunpack.c.l.b16 %v149
  %v519 = vunpack.c.l.b16 %v150
  %v520 = vunpack.c.l.b16 %v151
  %v521 = vunpack.c.l.b16 %v152
  %v522 = vunpack.c.l.b16 %v153
  %v523 = vunpack.c.l.b16 %v154
  %v524 = vunpack.c.l.b16 %v155
  %v525 = vunpack.c.l.b16 %v156
  %v526 = vunpack.c.l.b16 %v157
  %v527 = vunpack.c.l.b16 %v158
  %v528 = vunpack.c.l.b16 %v159
  %v529 = vunpack.c.l.b16 %v160
  %v530 = vpack.c.b16 %v387, %v386
  %v531 = vpack.c.b16 %v389, %v388
  %v532 = vpack.c.b16 %v391, %v390
  %v533 = vpack.c.b16 %v393, %v392
  %v534 = vpack.c.b16 %v395, %v394
  %v535 = vpack.c.b16 %v397, %v396
  %v536 = vpack.c.b16 %v399, %v398
  %v537 = vpack.c.b16 %v401, %v400
  %v538 = vpack.c.b16 %v403, %v402
  %v539 = vpack.c.b16 %v405, %v404
  %v540 = vpack.c.b16 %v407, %v406
  %v541 = vpack.c.b16 %v409, %v408
  %v542 = vpack.c.b16 %v411, %v410
  %v543 = vpack.c.b16 %v413, %v412
  %v544 = vpack.c.b16 %v415, %v414
  %v545 = vpack.c.b16 %v417, %v416
  %v546 = vpack.c.b16 %v419, %v418
  %v547 = vpack.c.b16 %v421, %v420
  %v548 = vpack.c.b16 %v423, %v422
  %v549 = vpack.c.b16 %v425, %v424
  %v550 = vpack.c.b16 %v427, %v426
  %v551 = vpack.c.b16 %v429, %v428
  %v552 = vpack.c.b16 %v431, %v430
  %v553 = vpack.c.b16 %v433, %v432
  %v554 = vpack.c.b16 %v435, %v434
  %v555 = vpack.c.b16 %v437, %v436
  %v556 = vpack.c.b16 %v439, %v438
  %v557 = vpack.c.b16 %v441, %v440
  %v558 = vpack.c.b16 %v443, %v442
  %v559 = vpack.c.b16 %v445, %v444
  %v560 = vpack.c.b16 %v447, %v446
  %v561 = vpack.c.b16 %v449, %v448
  %v562 = vpack.c.b16 %v451, %v450
  %v563 = vpack.c.b16 %v453, %v452
  %v564 = vpack.c.b16 %v455, %v454
  %v565 = vpack.c.b16 %v457, %v456
  %v566 = vpack.c.b16 %v459, %v458
  %v567 = vpack.c.b16 %v461, %v460
  %v568 = vpack.c.b16 %v463, %v462
  %v569 = vpack.c.b16 %v465, %v464
  %v570 = vpack.c.b16 %v467, %v466
  %v571 = vpack.c.b16 %v469, %v468
  %v572 = vpack.c.b16 %v471, %v470
  %v573 = vpack.c.b16 %v473, %v472
  %v574 = vpack.c.b16 %v475, %v474
  %v575 = vpack.c.b16 %v477, %v476
  %v576 = vpack.c.b16 %v479, %v478
  %v577 = vpack.c.b16 %v481, %v480
  %v578 = vpack.c.b16 %v483, %v482
  %v579 = vpack.c.b16 %v485, %v484
  %v580 = vpack.c.b16 %v487, %v486
  %v581 = vpack.c.b16 %v489, %v488
  %v582 = vpack.c.b16 %v491, %v490
  %v583 = vpack.c.b16 %v493, %v492
  %v584 = vpack.c.b16 %v495, %v494
  %v585 = vpack.c.b16 %v497, %v496
  %v586 = vpack.c.b16 %v499, %v498
  %v587 = vpack.c.b16 %v501, %v500
  %v588 = vpack.c.b16 %v503, %v502
  %v589 = vpack.c.b16 %v505, %v504
  %v590 = vpack.c.b16 %v507, %v506
  %v591 = vpack.c.b16 %v509, %v508
  %v592 = vpack.c.b16 %v511, %v510
  %v593 = vpack.c.b16 %v513, %v512
  %v594 = vpack.c.b16 %v515, %v514
  %v595 = vpack.c.b16 %v517, %v516
  %v596 = vpack.c.b16 %v519, %v518
  %v597 = vpack.c.b16 %v521, %v520
  %v598 = vpack.c.b16 %v523, %v522
  %v599 = vpack.c.b16 %v525, %v524
  %v600 = vpack.c.b16 %v527, %v526
  %v601 = vpack.c.b16 %v529, %v528
  %674 = vmatprep.subr.bf16.mxu0 0
  %675 = vmatpush1.bf16.msra.mxu0 %v530
  %676 = vmatprep.subr.bf16.mxu0 0
  %677 = vmatpush1.bf16.msra.mxu0 %v531
  %678 = vmatprep.subr.bf16.mxu0 0
  %679 = vmatpush1.bf16.msra.mxu0 %v532
  %680 = vmatprep.subr.bf16.mxu0 0
  %681 = vmatpush1.bf16.msra.mxu0 %v533
  %682 = vmatprep.subr.bf16.mxu0 0
  %683 = vmatpush1.bf16.msra.mxu0 %v534
  %684 = vmatprep.subr.bf16.mxu0 0
  %685 = vmatpush1.bf16.msra.mxu0 %v535
  %686 = vmatprep.subr.bf16.mxu0 0
  %687 = vmatpush1.bf16.msra.mxu0 %v536
  %688 = vmatprep.subr.bf16.mxu0 0
  %689 = vmatpush1.bf16.msra.mxu0 %v537
  %690 = vmatprep.subr.bf16.mxu0 0
  %691 = vmatpush1.bf16.msra.mxu0 %v538
  %692 = vmatprep.subr.bf16.mxu0 0
  %693 = vmatpush1.bf16.msra.mxu0 %v539
  %694 = vmatprep.subr.bf16.mxu0 0
  %695 = vmatpush1.bf16.msra.mxu0 %v540
  %696 = vmatprep.subr.bf16.mxu0 0
  %697 = vmatpush1.bf16.msra.mxu0 %v541
  %698 = vmatprep.subr.bf16.mxu0 0
  %699 = vmatpush1.bf16.msra.mxu0 %v542
  %700 = vmatprep.subr.bf16.mxu0 0
  %701 = vmatpush1.bf16.msra.mxu0 %v543
  %702 = vmatprep.subr.bf16.mxu0 0
  %703 = vmatpush1.bf16.msra.mxu0 %v544
  %704 = vmatprep.subr.bf16.mxu0 0
  %705 = vmatpush1.bf16.msra.mxu0 %v545
  %706 = vmatprep.mubr.bf16.mxu0 %v207
  %707 = vmatmul.mubr.bf16.gmra.mrb[0].mxu0 %v193
  %v708 = vpop.f32.mrb[0].mxu0
  %v709 = vadd.f32 %v166, %v708
  %v710 = vpop.f32.mrb[0].mxu0
  %v711 = vpop.f32.mrb[0].mxu0
  %v712 = vpop.f32.mrb[0].mxu0
  %713 = vdwg.mxu0
  %714 = vmatprep.subr.bf16.mxu0 0
  %715 = vmatpush1.bf16.msra.mxu0 %v546
  %716 = vmatprep.subr.bf16.mxu0 0
  %717 = vmatpush1.bf16.msra.mxu0 %v547
  %718 = vmatprep.subr.bf16.mxu0 0
  %719 = vmatpush1.bf16.msra.mxu0 %v548
  %720 = vmatprep.subr.bf16.mxu0 0
  %721 = vmatpush1.bf16.msra.mxu0 %v549
  %722 = vmatprep.subr.bf16.mxu0 0
  %723 = vmatpush1.bf16.msra.mxu0 %v550
  %724 = vmatprep.subr.bf16.mxu0 0
  %725 = vmatpush1.bf16.msra.mxu0 %v551
  %726 = vmatprep.subr.bf16.mxu0 0
  %727 = vmatpush1.bf16.msra.mxu0 %v552
  %728 = vmatprep.subr.bf16.mxu0 0
  %729 = vmatpush1.bf16.msra.mxu0 %v553
  %730 = vmatprep.subr.bf16.mxu0 0
  %731 = vmatpush1.bf16.msra.mxu0 %v554
  %732 = vmatprep.subr.bf16.mxu0 0
  %733 = vmatpush1.bf16.msra.mxu0 %v555
  %734 = vmatprep.subr.bf16.mxu0 0
  %735 = vmatpush1.bf16.msra.mxu0 %v556
  %736 = vmatprep.subr.bf16.mxu0 0
  %737 = vmatpush1.bf16.msra.mxu0 %v557
  %738 = vmatprep.subr.bf16.mxu0 0
  %739 = vmatpush1.bf16.msra.mxu0 %v558
  %740 = vmatprep.subr.bf16.mxu0 0
  %741 = vmatpush1.bf16.msra.mxu0 %v559
  %742 = vmatprep.subr.bf16.mxu0 0
  %743 = vmatpush1.bf16.msra.mxu0 %v560
  %744 = vmatprep.subr.bf16.mxu0 0
  %745 = vmatpush1.bf16.msra.mxu0 %v561
  %746 = vmatprep.mubr.bf16.mxu0 %v217
  %747 = vmatmul.mubr.bf16.gmra.mrb[0].mxu0 %v215
  %v748 = vpop.f32.mrb[0].mxu0
  %v749 = vadd.f32 %v709, %v748
  %v750 = vpop.f32.mrb[0].mxu0
  %v751 = vpop.f32.mrb[0].mxu0
  %v752 = vpop.f32.mrb[0].mxu0
  %753 = vdwg.mxu0
  %754 = vmatprep.subr.bf16.mxu0 0
  %755 = vmatpush1.bf16.msra.mxu0 %v562
  %756 = vmatprep.subr.bf16.mxu0 0
  %757 = vmatpush1.bf16.msra.mxu0 %v563
  %758 = vmatprep.subr.bf16.mxu0 0
  %759 = vmatpush1.bf16.msra.mxu0 %v564
  %760 = vmatprep.subr.bf16.mxu0 0
  %761 = vmatpush1.bf16.msra.mxu0 %v565
  %762 = vmatprep.subr.bf16.mxu0 0
  %763 = vmatpush1.bf16.msra.mxu0 %v566
  %764 = vmatprep.subr.bf16.mxu0 0
  %765 = vmatpush1.bf16.msra.mxu0 %v567
  %766 = vmatprep.subr.bf16.mxu0 0
  %767 = vmatpush1.bf16.msra.mxu0 %v568
  %768 = vmatprep.subr.bf16.mxu0 0
  %769 = vmatpush1.bf16.msra.mxu0 %v569
  %770 = vmatprep.subr.bf16.mxu0 0
  %771 = vmatpush1.bf16.msra.mxu0 %v570
  %772 = vmatprep.subr.bf16.mxu0 0
  %773 = vmatpush1.bf16.msra.mxu0 %v571
  %774 = vmatprep.subr.bf16.mxu0 0
  %775 = vmatpush1.bf16.msra.mxu0 %v572
  %776 = vmatprep.subr.bf16.mxu0 0
  %777 = vmatpush1.bf16.msra.mxu0 %v573
  %778 = vmatprep.subr.bf16.mxu0 0
  %779 = vmatpush1.bf16.msra.mxu0 %v574
  %780 = vmatprep.subr.bf16.mxu0 0
  %781 = vmatpush1.bf16.msra.mxu0 %v575
  %782 = vmatprep.subr.bf16.mxu0 0
  %783 = vmatpush1.bf16.msra.mxu0 %v576
  %784 = vmatprep.subr.bf16.mxu0 0
  %785 = vmatpush1.bf16.msra.mxu0 %v577
  %786 = vmatprep.mubr.bf16.mxu0 %v214
  %787 = vmatmul.mubr.bf16.gmra.mrb[0].mxu0 %v200
  %v788 = vpop.f32.mrb[0].mxu0
  %v789 = vadd.f32 %v749, %v788
  %v790 = vpop.f32.mrb[0].mxu0
  %v791 = vpop.f32.mrb[0].mxu0
  %v792 = vpop.f32.mrb[0].mxu0
  %793 = vdwg.mxu0
  %794 = vmatprep.subr.bf16.mxu0 0
  %795 = vmatpush1.bf16.msra.mxu0 %v578
  %796 = vmatprep.subr.bf16.mxu0 0
  %797 = vmatpush1.bf16.msra.mxu0 %v579
  %798 = vmatprep.subr.bf16.mxu0 0
  %799 = vmatpush1.bf16.msra.mxu0 %v580
  %800 = vmatprep.subr.bf16.mxu0 0
  %801 = vmatpush1.bf16.msra.mxu0 %v581
  %802 = vmatprep.subr.bf16.mxu0 0
  %803 = vmatpush1.bf16.msra.mxu0 %v582
  %804 = vmatprep.subr.bf16.mxu0 0
  %805 = vmatpush1.bf16.msra.mxu0 %v583
  %806 = vmatprep.subr.bf16.mxu0 0
  %807 = vmatpush1.bf16.msra.mxu0 %v584
  %808 = vmatprep.subr.bf16.mxu0 0
  %809 = vmatpush1.bf16.msra.mxu0 %v585
  %810 = vmatprep.subr.bf16.mxu0 0
  %811 = vmatpush1.bf16.msra.mxu0 %v586
  %812 = vmatprep.subr.bf16.mxu0 0
  %813 = vmatpush1.bf16.msra.mxu0 %v587
  %814 = vmatprep.subr.bf16.mxu0 0
  %815 = vmatpush1.bf16.msra.mxu0 %v588
  %816 = vmatprep.subr.bf16.mxu0 0
  %817 = vmatpush1.bf16.msra.mxu0 %v589
  %818 = vmatprep.subr.bf16.mxu0 0
  %819 = vmatpush1.bf16.msra.mxu0 %v590
  %820 = vmatprep.subr.bf16.mxu0 0
  %821 = vmatpush1.bf16.msra.mxu0 %v591
  %822 = vmatprep.subr.bf16.mxu0 0
  %823 = vmatpush1.bf16.msra.mxu0 %v592
  %824 = vmatprep.subr.bf16.mxu0 0
  %825 = vmatpush1.bf16.msra.mxu0 %v593
  %826 = vmatprep.mubr.bf16.mxu0 %v218
  %827 = vmatmul.mubr.bf16.gmra.mrb[0].mxu0 %v216
  %v828 = vpop.f32.mrb[0].mxu0
  %v829 = vadd.f32 %v789, %v828
  %v830 = vpop.f32.mrb[0].mxu0
  %v831 = vpop.f32.mrb[0].mxu0
  %v832 = vpop.f32.mrb[0].mxu0
  %833 = vdwg.mxu0
  %834 = vmatprep.subr.bf16.mxu0 0
  %835 = vmatpush1.bf16.msra.mxu0 %v594
  %836 = vmatprep.subr.bf16.mxu0 0
  %837 = vmatpush1.bf16.msra.mxu0 %v595
  %838 = vmatprep.subr.bf16.mxu0 0
  %839 = vmatpush1.bf16.msra.mxu0 %v596
  %840 = vmatprep.subr.bf16.mxu0 0
  %841 = vmatpush1.bf16.msra.mxu0 %v597
  %842 = vmatprep.subr.bf16.mxu0 0
  %843 = vmatpush1.bf16.msra.mxu0 %v598
  %844 = vmatprep.subr.bf16.mxu0 0
  %845 = vmatpush1.bf16.msra.mxu0 %v599
  %846 = vmatprep.subr.bf16.mxu0 0
  %847 = vmatpush1.bf16.msra.mxu0 %v600
  %848 = vmatprep.subr.bf16.mxu0 0
  %849 = vmatpush1.bf16.msra.mxu0 %v601
  %850 = vmatprep.subr.bf16.mxu0 0
  %851 = vmatpush1.bf16.msra.mxu0 0
  %852 = vmatprep.subr.bf16.mxu0 0
  %853 = vmatpush1.bf16.msra.mxu0 0
  %854 = vmatprep.subr.bf16.mxu0 0
  %855 = vmatpush1.bf16.msra.mxu0 0
  %856 = vmatprep.subr.bf16.mxu0 0
  %857 = vmatpush1.bf16.msra.mxu0 0
  %858 = vmatprep.subr.bf16.mxu0 0
  %859 = vmatpush1.bf16.msra.mxu0 0
  %860 = vmatprep.subr.bf16.mxu0 0
  %861 = vmatpush1.bf16.msra.mxu0 0
  %862 = vmatprep.subr.bf16.mxu0 0
  %863 = vmatpush1.bf16.msra.mxu0 0
  %864 = vmatprep.subr.bf16.mxu0 0
  %865 = vmatpush1.bf16.msra.mxu0 0
  %866 = vmatprep.mubr.bf16.mxu0 0
  %867 = vmatmul.mubr.bf16.gmra.mrb[0].mxu0 %v232
  %v868 = vpop.f32.mrb[0].mxu0
  %v869 = vadd.f32 %v829, %v868
  %v870 = vpop.f32.mrb[0].mxu0
  %v871 = vpop.f32.mrb[0].mxu0
  %v872 = vpop.f32.mrb[0].mxu0
  %873 = vdwg.mxu0
  %v874 = vmax.f32 %v869, 0.0
  %v875 = vpack.c.bf16 %v874, %v874
  %876 = vst [vmem:[%s3] sm:$0x1] %v875
  // Predicated region
  $region14: #{_lambda_.6} parent=0 // pred_check
    _
  $region15: #{_lambda_.6} parent=0 // pred_check_branch
    %878 = sbr.rel (0) target = $region17
  $region16: #{_lambda_.6} parent=0 // pred_region
    _
  $region17: #{_lambda_.6} parent=0 // pred_fallthru
    _
  // Predicated region
  $region18: #{_lambda_.6} parent=0 // pred_check
    _
  $region19: #{_lambda_.6} parent=0 // pred_check_branch
    %880 = sbr.rel (0) target = $region21
  $region20: #{_lambda_.6} parent=0 // pred_region
    _
  $region21: #{_lambda_.6} parent=0 // pred_fallthru
    _

// kernel: _lambda_.7
$region0: #{_lambda_.7}
  #allocation0 [shape = 'u32[]', space=smem, size = 0x4, offset = 0x4, fixed_abs, tag = 'smem constant byte address 0x4 - core index']
  #allocation1 [shape = 'u32[144,128]{1,0:T(1,128)}', space=vmem, size = 0x12000, scoped, tag = 'internal scratch']
  %s0 = inlined_call_operand.vmem [shape: bf16[2,128], index: 0, kind: input, shape index: {}]
  %s1 = inlined_call_operand.vmem [shape: bf16[128,512], index: 1, kind: input, shape index: {}]
  %s2 = inlined_call_operand.vmem [shape: f32[1,512], index: 2, kind: input, shape index: {}]
  %s3 = inlined_call_operand.vmem [shape: bf16[512,384], index: 3, kind: input, shape index: {}]
  %s4 = inlined_call_operand.vmem [shape: f32[1,384], index: 4, kind: input, shape index: {}]
  %s5 = inlined_call_operand.vmem [shape: f32[384,128], index: 5, kind: input, shape index: {}]
  %s6 = inlined_call_operand.vmem [shape: f32[384,128], index: 6, kind: input, shape index: {}]
  %s7 = inlined_call_operand.vmem [shape: f32[2,384], index: 7, kind: output, shape index: {0}]
  %s8 = inlined_call_operand.hbm [shape: f32[2,128], index: 8, kind: output, shape index: {1}]
  %9 = xla_tuple %s7, %s8
  %s10 = sld [smem:[#allocation0]]
  $region46: #{_lambda_.7} parent=0
    _
  %s12 = ssub.s32 1, %s10
  %s13 = scalar_select 0, %s12, %s10
  $region1: #{_lambda_.7} parent=0
    #allocation2 [shape = 'u8[1024]{0}', space=vmem, size = 0x400, scoped, tag = 'output window, operand 1, single buffered']
    #allocation3 [shape = 's32[1]{0}', space=sflag, size = 0x4, scoped, tag = 'scoped memory for _lambda_.7']
    %14 = vsyncpa [#allocation3], 0
    // Predicated region
    $region2: #{_lambda_.7} parent=1 // pred_check
      _
    $region3: #{_lambda_.7} parent=1 // pred_check_branch
      %16 = sbr.rel (0) target = $region5
    $region4: #{_lambda_.7} parent=1 // pred_region
      _
    $region5: #{_lambda_.7} parent=1 // pred_fallthru
      _
    // Predicated region
    $region6: #{_lambda_.7} parent=1 // pred_check
      _
    $region7: #{_lambda_.7} parent=1 // pred_check_branch
      %18 = sbr.rel (0) target = $region9
    $region8: #{_lambda_.7} parent=1 // pred_region
      _
    $region9: #{_lambda_.7} parent=1 // pred_fallthru
      _
    // Predicated region
    $region10: #{_lambda_.7} parent=1 // pred_check
      _
    $region11: #{_lambda_.7} parent=1 // pred_check_branch
      %20 = sbr.rel (0) target = $region13
    $region12: #{_lambda_.7} parent=1 // pred_region
      _
    $region13: #{_lambda_.7} parent=1 // pred_fallthru
      _
    // Predicated region
    $region14: #{_lambda_.7} parent=1 // pred_check
      _
    $region15: #{_lambda_.7} parent=1 // pred_check_branch
      %22 = sbr.rel (0) target = $region17
    $region16: #{_lambda_.7} parent=1 // pred_region
      _
    $region17: #{_lambda_.7} parent=1 // pred_fallthru
      _
    // Predicated region
    $region18: #{_lambda_.7} parent=1 // pred_check
      _
    $region19: #{_lambda_.7} parent=1 // pred_check_branch
      %24 = sbr.rel (0) target = $region21
    $region20: #{_lambda_.7} parent=1 // pred_region
      _
    $region21: #{_lambda_.7} parent=1 // pred_fallthru
      _
    // Predicated region
    $region22: #{_lambda_.7} parent=1 // pred_check
      _
    $region23: #{_lambda_.7} parent=1 // pred_check_branch
      %26 = sbr.rel (0) target = $region25
    $region24: #{_lambda_.7} parent=1 // pred_region
      _
    $region25: #{_lambda_.7} parent=1 // pred_fallthru
      _
    // Predicated region
    $region26: #{_lambda_.7} parent=1 // pred_check
      _
    $region27: #{_lambda_.7} parent=1 // pred_check_branch
      %28 = sbr.rel (0) target = $region29
    $region28: #{_lambda_.7} parent=1 // pred_region
      _
    $region29: #{_lambda_.7} parent=1 // pred_fallthru
      _
    %v30 = vld [vmem:[%s0] sm:$0x1]
    %v31 = vld [vmem:[%s1] sm:$0xff]
    %v32 = vld [vmem:[%s1 + $0x8] sm:$0xff]
    %v33 = vld [vmem:[%s1 + $0x10] sm:$0xff]
    %v34 = vld [vmem:[%s1 + $0x18] sm:$0xff]
    %v35 = vld [vmem:[%s1 + $0x20] sm:$0xff]
    %v36 = vld [vmem:[%s1 + $0x28] sm:$0xff]
    %v37 = vld [vmem:[%s1 + $0x30] sm:$0xff]
    %v38 = vld [vmem:[%s1 + $0x38] sm:$0xff]
    %v39 = vld [vmem:[%s1 + $0x40] sm:$0xff]
    %v40 = vld [vmem:[%s1 + $0x48] sm:$0xff]
    %v41 = vld [vmem:[%s1 + $0x50] sm:$0xff]
    %v42 = vld [vmem:[%s1 + $0x58] sm:$0xff]
    %v43 = vld [vmem:[%s1 + $0x60] sm:$0xff]
    %v44 = vld [vmem:[%s1 + $0x68] sm:$0xff]
    %v45 = vld [vmem:[%s1 + $0x70] sm:$0xff]
    %v46 = vld [vmem:[%s1 + $0x78] sm:$0xff]
    %v47 = vld [vmem:[%s1 + $0x80] sm:$0xff]
    %v48 = vld [vmem:[%s1 + $0x88] sm:$0xff]
    %v49 = vld [vmem:[%s1 + $0x90] sm:$0xff]
    %v50 = vld [vmem:[%s1 + $0x98] sm:$0xff]
    %v51 = vld [vmem:[%s1 + $0xa0] sm:$0xff]
    %v52 = vld [vmem:[%s1 + $0xa8] sm:$0xff]
    %v53 = vld [vmem:[%s1 + $0xb0] sm:$0xff]
    %v54 = vld [vmem:[%s1 + $0xb8] sm:$0xff]
    %v55 = vld [vmem:[%s1 + $0xc0] sm:$0xff]
    %v56 = vld [vmem:[%s1 + $0xc8] sm:$0xff]
    %v57 = vld [vmem:[%s1 + $0xd0] sm:$0xff]
    %v58 = vld [vmem:[%s1 + $0xd8] sm:$0xff]
    %v59 = vld [vmem:[%s1 + $0xe0] sm:$0xff]
    %v60 = vld [vmem:[%s1 + $0xe8] sm:$0xff]
    %v61 = vld [vmem:[%s1 + $0xf0] sm:$0xff]
    %v62 = vld [vmem:[%s1 + $0xf8] sm:$0xff]
    %v63 = vld [vmem:[%s2] sm:$0xf]
    %v65 = vlaneseq
    %v66 = vshrl.u32 %v65, 7
    %v67 = vsub.s32 0, %v66
    %v68 = vrot.slane %v63, %v67
    %v69 = vlaneseq
    %v70 = vshrl.u32 %v69, 7
    %v71 = vsub.s32 1, %v70
    %v72 = vrot.slane %v63, %v71
    %v73 = vlaneseq
    %v74 = vshrl.u32 %v73, 7
    %v75 = vsub.s32 2, %v74
    %v76 = vrot.slane %v63, %v75
    %v77 = vlaneseq
    %v78 = vshrl.u32 %v77, 7
    %v79 = vsub.s32 3, %v78
    %v80 = vrot.slane %v63, %v79
    %v117 = vunpack.c.l.b16 %v31
    %v118 = vunpack.c.h.b16 %v31
    %v119 = vunpack.c.l.b16 %v32
    %v120 = vunpack.c.h.b16 %v32
    %v121 = vunpack.c.l.b16 %v33
    %v122 = vunpack.c.h.b16 %v33
    %v123 = vunpack.c.l.b16 %v34
    %v124 = vunpack.c.h.b16 %v34
    %v125 = vunpack.c.l.b16 %v35
    %v126 = vunpack.c.h.b16 %v35
    %v127 = vunpack.c.l.b16 %v36
    %v128 = vunpack.c.h.b16 %v36
    %v129 = vunpack.c.l.b16 %v37
    %v130 = vunpack.c.h.b16 %v37
    %v131 = vunpack.c.l.b16 %v38
    %v132 = vunpack.c.h.b16 %v38
    %v133 = vunpack.c.l.b16 %v39
    %v134 = vunpack.c.h.b16 %v39
    %v135 = vunpack.c.l.b16 %v40
    %v136 = vunpack.c.h.b16 %v40
    %v137 = vunpack.c.l.b16 %v41
    %v138 = vunpack.c.h.b16 %v41
    %v139 = vunpack.c.l.b16 %v42
    %v140 = vunpack.c.h.b16 %v42
    %v141 = vunpack.c.l.b16 %v43
    %v142 = vunpack.c.h.b16 %v43
    %v143 = vunpack.c.l.b16 %v44
    %v144 = vunpack.c.h.b16 %v44
    %v145 = vunpack.c.l.b16 %v45
    %v146 = vunpack.c.h.b16 %v45
    %v147 = vunpack.c.l.b16 %v46
    %v148 = vunpack.c.h.b16 %v46
    %v149 = vunpack.c.l.b16 %v47
    %v150 = vunpack.c.h.b16 %v47
    %v151 = vunpack.c.l.b16 %v48
    %v152 = vunpack.c.h.b16 %v48
    %v153 = vunpack.c.l.b16 %v49
    %v154 = vunpack.c.h.b16 %v49
    %v155 = vunpack.c.l.b16 %v50
    %v156 = vunpack.c.h.b16 %v50
    %v157 = vunpack.c.l.b16 %v51
    %v158 = vunpack.c.h.b16 %v51
    %v159 = vunpack.c.l.b16 %v52
    %v160 = vunpack.c.h.b16 %v52
    %v161 = vunpack.c.l.b16 %v53
    %v162 = vunpack.c.h.b16 %v53
    %v163 = vunpack.c.l.b16 %v54
    %v164 = vunpack.c.h.b16 %v54
    %v165 = vunpack.c.l.b16 %v55
    %v166 = vunpack.c.h.b16 %v55
    %v167 = vunpack.c.l.b16 %v56
    %v168 = vunpack.c.h.b16 %v56
    %v169 = vunpack.c.l.b16 %v57
    %v170 = vunpack.c.h.b16 %v57
    %v171 = vunpack.c.l.b16 %v58
    %v172 = vunpack.c.h.b16 %v58
    %v173 = vunpack.c.l.b16 %v59
    %v174 = vunpack.c.h.b16 %v59
    %v175 = vunpack.c.l.b16 %v60
    %v176 = vunpack.c.h.b16 %v60
    %v177 = vunpack.c.l.b16 %v61
    %v178 = vunpack.c.h.b16 %v61
    %v179 = vunpack.c.l.b16 %v62
    %v180 = vunpack.c.h.b16 %v62
    %v181 = vpack.c.b16 %v121, %v117
    %v182 = vpack.c.b16 %v122, %v118
    %v183 = vpack.c.b16 %v123, %v119
    %v184 = vpack.c.b16 %v124, %v120
    %v185 = vpack.c.b16 %v129, %v125
    %v186 = vpack.c.b16 %v130, %v126
    %v187 = vpack.c.b16 %v131, %v127
    %v188 = vpack.c.b16 %v132, %v128
    %v189 = vpack.c.b16 %v137, %v133
    %v190 = vpack.c.b16 %v138, %v134
    %v191 = vpack.c.b16 %v139, %v135
    %v192 = vpack.c.b16 %v140, %v136
    %v193 = vpack.c.b16 %v145, %v141
    %v194 = vpack.c.b16 %v146, %v142
    %v195 = vpack.c.b16 %v147, %v143
    %v196 = vpack.c.b16 %v148, %v144
    %v197 = vpack.c.b16 %v153, %v149
    %v198 = vpack.c.b16 %v154, %v150
    %v199 = vpack.c.b16 %v155, %v151
    %v200 = vpack.c.b16 %v156, %v152
    %v201 = vpack.c.b16 %v161, %v157
    %v202 = vpack.c.b16 %v162, %v158
    %v203 = vpack.c.b16 %v163, %v159
    %v204 = vpack.c.b16 %v164, %v160
    %v205 = vpack.c.b16 %v169, %v165
    %v206 = vpack.c.b16 %v170, %v166
    %v207 = vpack.c.b16 %v171, %v167
    %v208 = vpack.c.b16 %v172, %v168
    %v209 = vpack.c.b16 %v177, %v173
    %v210 = vpack.c.b16 %v178, %v174
    %v211 = vpack.c.b16 %v179, %v175
    %v212 = vpack.c.b16 %v180, %v176
    %245 = vmatprep.subr.bf16.mxu0 %v182
    %246 = vmatpush1.bf16.msra.mxu0 %v181
    %247 = vmatprep.subr.bf16.mxu0 %v186
    %248 = vmatpush1.bf16.msra.mxu0 %v185
    %249 = vmatprep.subr.bf16.mxu0 %v190
    %250 = vmatpush1.bf16.msra.mxu0 %v189
    %251 = vmatprep.subr.bf16.mxu0 %v194
    %252 = vmatpush1.bf16.msra.mxu0 %v193
    %253 = vmatprep.subr.bf16.mxu0 %v198
    %254 = vmatpush1.bf16.msra.mxu0 %v197
    %255 = vmatprep.subr.bf16.mxu0 %v202
    %256 = vmatpush1.bf16.msra.mxu0 %v201
    %257 = vmatprep.subr.bf16.mxu0 %v206
    %258 = vmatpush1.bf16.msra.mxu0 %v205
    %259 = vmatprep.subr.bf16.mxu0 %v210
    %260 = vmatpush1.bf16.msra.mxu0 %v209
    %261 = vmatprep.subr.bf16.mxu0 0
    %262 = vmatpush1.bf16.msra.mxu0 0
    %263 = vmatprep.subr.bf16.mxu0 0
    %264 = vmatpush1.bf16.msra.mxu0 0
    %265 = vmatprep.subr.bf16.mxu0 0
    %266 = vmatpush1.bf16.msra.mxu0 0
    %267 = vmatprep.subr.bf16.mxu0 0
    %268 = vmatpush1.bf16.msra.mxu0 0
    %269 = vmatprep.subr.bf16.mxu0 0
    %270 = vmatpush1.bf16.msra.mxu0 0
    %271 = vmatprep.subr.bf16.mxu0 0
    %272 = vmatpush1.bf16.msra.mxu0 0
    %273 = vmatprep.subr.bf16.mxu0 0
    %274 = vmatpush1.bf16.msra.mxu0 0
    %275 = vmatprep.subr.bf16.mxu0 0
    %276 = vmatpush1.bf16.msra.mxu0 0
    %277 = vmatprep.mubr.bf16.mxu0 0
    %278 = vmatmul.mubr.bf16.gmra.mrb[0].mxu0 %v30
    %v279 = vpop.f32.mrb[0].mxu0
    %v280 = vadd.f32 %v68, %v279
    %v281 = vpop.f32.mrb[0].mxu0
    %v282 = vadd.f32 %v72, %v281
    %v283 = vpop.f32.mrb[0].mxu0
    %v284 = vpop.f32.mrb[0].mxu0
    %285 = vdwg.mxu0
    %286 = vmatprep.subr.bf16.mxu0 %v184
    %287 = vmatpush1.bf16.msra.mxu0 %v183
    %288 = vmatprep.subr.bf16.mxu0 %v188
    %289 = vmatpush1.bf16.msra.mxu0 %v187
    %290 = vmatprep.subr.bf16.mxu0 %v192
    %291 = vmatpush1.bf16.msra.mxu0 %v191
    %292 = vmatprep.subr.bf16.mxu0 %v196
    %293 = vmatpush1.bf16.msra.mxu0 %v195
    %294 = vmatprep.subr.bf16.mxu0 %v200
    %295 = vmatpush1.bf16.msra.mxu0 %v199
    %296 = vmatprep.subr.bf16.mxu0 %v204
    %297 = vmatpush1.bf16.msra.mxu0 %v203
    %298 = vmatprep.subr.bf16.mxu0 %v208
    %299 = vmatpush1.bf16.msra.mxu0 %v207
    %300 = vmatprep.subr.bf16.mxu0 %v212
    %301 = vmatpush1.bf16.msra.mxu0 %v211
    %302 = vmatprep.subr.bf16.mxu0 0
    %303 = vmatpush1.bf16.msra.mxu0 0
    %304 = vmatprep.subr.bf16.mxu0 0
    %305 = vmatpush1.bf16.msra.mxu0 0
    %306 = vmatprep.subr.bf16.mxu0 0
    %307 = vmatpush1.bf16.msra.mxu0 0
    %308 = vmatprep.subr.bf16.mxu0 0
    %309 = vmatpush1.bf16.msra.mxu0 0
    %310 = vmatprep.subr.bf16.mxu0 0
    %311 = vmatpush1.bf16.msra.mxu0 0
    %312 = vmatprep.subr.bf16.mxu0 0
    %313 = vmatpush1.bf16.msra.mxu0 0
    %314 = vmatprep.subr.bf16.mxu0 0
    %315 = vmatpush1.bf16.msra.mxu0 0
    %316 = vmatprep.subr.bf16.mxu0 0
    %317 = vmatpush1.bf16.msra.mxu0 0
    %318 = vmatprep.mubr.bf16.mxu0 0
    %319 = vmatmul.mubr.bf16.gmra.mrb[0].mxu0 %v30
    %v320 = vpop.f32.mrb[0].mxu0
    %v321 = vadd.f32 %v76, %v320
    %v322 = vpop.f32.mrb[0].mxu0
    %v323 = vadd.f32 %v80, %v322
    %v324 = vpop.f32.mrb[0].mxu0
    %v325 = vpop.f32.mrb[0].mxu0
    %326 = vdwg.mxu0
    %v327 = vmax.f32 %v280, 0.0
    %v328 = vmax.f32 %v282, 0.0
    %v329 = vmax.f32 %v321, 0.0
    %v330 = vmax.f32 %v323, 0.0
    %v331 = vpack.c.bf16 %v327, %v327
    %v332 = vpack.c.bf16 %v328, %v328
    %v333 = vpack.c.bf16 %v329, %v329
    %v334 = vpack.c.bf16 %v330, %v330
    %v335 = vld [vmem:[%s3] sm:$0xff]
    %v336 = vld [vmem:[%s3 + $0x8] sm:$0xf]
    %v337 = vld [vmem:[%s3 + $0xc] sm:$0xff]
    %v338 = vld [vmem:[%s3 + $0x14] sm:$0xf]
    %v339 = vld [vmem:[%s3 + $0x18] sm:$0xff]
    %v340 = vld [vmem:[%s3 + $0x20] sm:$0xf]
    %v341 = vld [vmem:[%s3 + $0x24] sm:$0xff]
    %v342 = vld [vmem:[%s3 + $0x2c] sm:$0xf]
    %v343 = vld [vmem:[%s3 + $0x30] sm:$0xff]
    %v344 = vld [vmem:[%s3 + $0x38] sm:$0xf]
    %v345 = vld [vmem:[%s3 + $0x3c] sm:$0xff]
    %v346 = vld [vmem:[%s3 + $0x44] sm:$0xf]
    %v347 = vld [vmem:[%s3 + $0x48] sm:$0xff]
    %v348 = vld [vmem:[%s3 + $0x50] sm:$0xf]
    %v349 = vld [vmem:[%s3 + $0x54] sm:$0xff]
    %v350 = vld [vmem:[%s3 + $0x5c] sm:$0xf]
    %v351 = vld [vmem:[%s3 + $0x60] sm:$0xff]
    %v352 = vld [vmem:[%s3 + $0x68] sm:$0xf]
    %v353 = vld [vmem:[%s3 + $0x6c] sm:$0xff]
    %v354 = vld [vmem:[%s3 + $0x74] sm:$0xf]
    %v355 = vld [vmem:[%s3 + $0x78] sm:$0xff]
    %v356 = vld [vmem:[%s3 + $0x80] sm:$0xf]
    %v357 = vld [vmem:[%s3 + $0x84] sm:$0xff]
    %v358 = vld [vmem:[%s3 + $0x8c] sm:$0xf]
    %v359 = vld [vmem:[%s3 + $0x90] sm:$0xff]
    %v360 = vld [vmem:[%s3 + $0x98] sm:$0xf]
    %v361 = vld [vmem:[%s3 + $0x9c] sm:$0xff]
    %v362 = vld [vmem:[%s3 + $0xa4] sm:$0xf]
    %v363 = vld [vmem:[%s3 + $0xa8] sm:$0xff]
    %v364 = vld [vmem:[%s3 + $0xb0] sm:$0xf]
    %v365 = vld [vmem:[%s3 + $0xb4] sm:$0xff]
    %v366 = vld [vmem:[%s3 + $0xbc] sm:$0xf]
    %v367 = vld [vmem:[%s3 + $0xc0] sm:$0xff]
    %v368 = vld [vmem:[%s3 + $0xc8] sm:$0xf]
    %v369 = vld [vmem:[%s3 + $0xcc] sm:$0xff]
    %v370 = vld [vmem:[%s3 + $0xd4] sm:$0xf]
    %v371 = vld [vmem:[%s3 + $0xd8] sm:$0xff]
    %v372 = vld [vmem:[%s3 + $0xe0] sm:$0xf]
    %v373 = vld [vmem:[%s3 + $0xe4] sm:$0xff]
    %v374 = vld [vmem:[%s3 + $0xec] sm:$0xf]
    %v375 = vld [vmem:[%s3 + $0xf0] sm:$0xff]
    %v376 = vld [vmem:[%s3 + $0xf8] sm:$0xf]
    %v377 = vld [vmem:[%s3 + $0xfc] sm:$0xff]
    %v378 = vld [vmem:[%s3 + $0x104] sm:$0xf]
    %v379 = vld [vmem:[%s3 + $0x108] sm:$0xff]
    %v380 = vld [vmem:[%s3 + $0x110] sm:$0xf]
    %v381 = vld [vmem:[%s3 + $0x114] sm:$0xff]
    %v382 = vld [vmem:[%s3 + $0x11c] sm:$0xf]
    %v383 = vld [vmem:[%s3 + $0x120] sm:$0xff]
    %v384 = vld [vmem:[%s3 + $0x128] sm:$0xf]
    %v385 = vld [vmem:[%s3 + $0x12c] sm:$0xff]
    %v386 = vld [vmem:[%s3 + $0x134] sm:$0xf]
    %v387 = vld [vmem:[%s3 + $0x138] sm:$0xff]
    %v388 = vld [vmem:[%s3 + $0x140] sm:$0xf]
    %v389 = vld [vmem:[%s3 + $0x144] sm:$0xff]
    %v390 = vld [vmem:[%s3 + $0x14c] sm:$0xf]
    %v391 = vld [vmem:[%s3 + $0x150] sm:$0xff]
    %v392 = vld [vmem:[%s3 + $0x158] sm:$0xf]
    %v393 = vld [vmem:[%s3 + $0x15c] sm:$0xff]
    %v394 = vld [vmem:[%s3 + $0x164] sm:$0xf]
    %v395 = vld [vmem:[%s3 + $0x168] sm:$0xff]
    %v396 = vld [vmem:[%s3 + $0x170] sm:$0xf]
    %v397 = vld [vmem:[%s3 + $0x174] sm:$0xff]
    %v398 = vld [vmem:[%s3 + $0x17c] sm:$0xf]
    %v399 = vld [vmem:[%s3 + $0x180] sm:$0xff]
    %v400 = vld [vmem:[%s3 + $0x188] sm:$0xf]
    %v401 = vld [vmem:[%s3 + $0x18c] sm:$0xff]
    %v402 = vld [vmem:[%s3 + $0x194] sm:$0xf]
    %v403 = vld [vmem:[%s3 + $0x198] sm:$0xff]
    %v404 = vld [vmem:[%s3 + $0x1a0] sm:$0xf]
    %v405 = vld [vmem:[%s3 + $0x1a4] sm:$0xff]
    %v406 = vld [vmem:[%s3 + $0x1ac] sm:$0xf]
    %v407 = vld [vmem:[%s3 + $0x1b0] sm:$0xff]
    %v408 = vld [vmem:[%s3 + $0x1b8] sm:$0xf]
    %v409 = vld [vmem:[%s3 + $0x1bc] sm:$0xff]
    %v410 = vld [vmem:[%s3 + $0x1c4] sm:$0xf]
    %v411 = vld [vmem:[%s3 + $0x1c8] sm:$0xff]
    %v412 = vld [vmem:[%s3 + $0x1d0] sm:$0xf]
    %v413 = vld [vmem:[%s3 + $0x1d4] sm:$0xff]
    %v414 = vld [vmem:[%s3 + $0x1dc] sm:$0xf]
    %v415 = vld [vmem:[%s3 + $0x1e0] sm:$0xff]
    %v416 = vld [vmem:[%s3 + $0x1e8] sm:$0xf]
    %v417 = vld [vmem:[%s3 + $0x1ec] sm:$0xff]
    %v418 = vld [vmem:[%s3 + $0x1f4] sm:$0xf]
    %v419 = vld [vmem:[%s3 + $0x1f8] sm:$0xff]
    %v420 = vld [vmem:[%s3 + $0x200] sm:$0xf]
    %v421 = vld [vmem:[%s3 + $0x204] sm:$0xff]
    %v422 = vld [vmem:[%s3 + $0x20c] sm:$0xf]
    %v423 = vld [vmem:[%s3 + $0x210] sm:$0xff]
    %v424 = vld [vmem:[%s3 + $0x218] sm:$0xf]
    %v425 = vld [vmem:[%s3 + $0x21c] sm:$0xff]
    %v426 = vld [vmem:[%s3 + $0x224] sm:$0xf]
    %v427 = vld [vmem:[%s3 + $0x228] sm:$0xff]
    %v428 = vld [vmem:[%s3 + $0x230] sm:$0xf]
    %v429 = vld [vmem:[%s3 + $0x234] sm:$0xff]
    %v430 = vld [vmem:[%s3 + $0x23c] sm:$0xf]
    %v431 = vld [vmem:[%s3 + $0x240] sm:$0xff]
    %v432 = vld [vmem:[%s3 + $0x248] sm:$0xf]
    %v433 = vld [vmem:[%s3 + $0x24c] sm:$0xff]
    %v434 = vld [vmem:[%s3 + $0x254] sm:$0xf]
    %v435 = vld [vmem:[%s3 + $0x258] sm:$0xff]
    %v436 = vld [vmem:[%s3 + $0x260] sm:$0xf]
    %v437 = vld [vmem:[%s3 + $0x264] sm:$0xff]
    %v438 = vld [vmem:[%s3 + $0x26c] sm:$0xf]
    %v439 = vld [vmem:[%s3 + $0x270] sm:$0xff]
    %v440 = vld [vmem:[%s3 + $0x278] sm:$0xf]
    %v441 = vld [vmem:[%s3 + $0x27c] sm:$0xff]
    %v442 = vld [vmem:[%s3 + $0x284] sm:$0xf]
    %v443 = vld [vmem:[%s3 + $0x288] sm:$0xff]
    %v444 = vld [vmem:[%s3 + $0x290] sm:$0xf]
    %v445 = vld [vmem:[%s3 + $0x294] sm:$0xff]
    %v446 = vld [vmem:[%s3 + $0x29c] sm:$0xf]
    %v447 = vld [vmem:[%s3 + $0x2a0] sm:$0xff]
    %v448 = vld [vmem:[%s3 + $0x2a8] sm:$0xf]
    %v449 = vld [vmem:[%s3 + $0x2ac] sm:$0xff]
    %v450 = vld [vmem:[%s3 + $0x2b4] sm:$0xf]
    %v451 = vld [vmem:[%s3 + $0x2b8] sm:$0xff]
    %v452 = vld [vmem:[%s3 + $0x2c0] sm:$0xf]
    %v453 = vld [vmem:[%s3 + $0x2c4] sm:$0xff]
    %v454 = vld [vmem:[%s3 + $0x2cc] sm:$0xf]
    %v455 = vld [vmem:[%s3 + $0x2d0] sm:$0xff]
    %v456 = vld [vmem:[%s3 + $0x2d8] sm:$0xf]
    %v457 = vld [vmem:[%s3 + $0x2dc] sm:$0xff]
    %v458 = vld [vmem:[%s3 + $0x2e4] sm:$0xf]
    %v459 = vld [vmem:[%s3 + $0x2e8] sm:$0xff]
    %v460 = vld [vmem:[%s3 + $0x2f0] sm:$0xf]
    %v461 = vld [vmem:[%s3 + $0x2f4] sm:$0xff]
    %v462 = vld [vmem:[%s3 + $0x2fc] sm:$0xf]
    %v463 = vld [vmem:[%s4] sm:$0x7]
    %v465 = vlaneseq
    %v466 = vshrl.u32 %v465, 7
    %v467 = vsub.s32 0, %v466
    %v468 = vrot.slane %v463, %v467
    %v469 = vlaneseq
    %v470 = vshrl.u32 %v469, 7
    %v471 = vsub.s32 1, %v470
    %v472 = vrot.slane %v463, %v471
    %v473 = vlaneseq
    %v474 = vshrl.u32 %v473, 7
    %v475 = vsub.s32 2, %v474
    %v476 = vrot.slane %v463, %v475
    %v608 = vunpack.c.l.b16 %v335
    %v609 = vunpack.c.h.b16 %v335
    %v610 = vunpack.c.l.b16 %v336
    %v611 = vunpack.c.l.b16 %v337
    %v612 = vunpack.c.h.b16 %v337
    %v613 = vunpack.c.l.b16 %v338
    %v614 = vunpack.c.l.b16 %v339
    %v615 = vunpack.c.h.b16 %v339
    %v616 = vunpack.c.l.b16 %v340
    %v617 = vunpack.c.l.b16 %v341
    %v618 = vunpack.c.h.b16 %v341
    %v619 = vunpack.c.l.b16 %v342
    %v620 = vunpack.c.l.b16 %v343
    %v621 = vunpack.c.h.b16 %v343
    %v622 = vunpack.c.l.b16 %v344
    %v623 = vunpack.c.l.b16 %v345
    %v624 = vunpack.c.h.b16 %v345
    %v625 = vunpack.c.l.b16 %v346
    %v626 = vunpack.c.l.b16 %v347
    %v627 = vunpack.c.h.b16 %v347
    %v628 = vunpack.c.l.b16 %v348
    %v629 = vunpack.c.l.b16 %v349
    %v630 = vunpack.c.h.b16 %v349
    %v631 = vunpack.c.l.b16 %v350
    %v632 = vunpack.c.l.b16 %v351
    %v633 = vunpack.c.h.b16 %v351
    %v634 = vunpack.c.l.b16 %v352
    %v635 = vunpack.c.l.b16 %v353
    %v636 = vunpack.c.h.b16 %v353
    %v637 = vunpack.c.l.b16 %v354
    %v638 = vunpack.c.l.b16 %v355
    %v639 = vunpack.c.h.b16 %v355
    %v640 = vunpack.c.l.b16 %v356
    %v641 = vunpack.c.l.b16 %v357
    %v642 = vunpack.c.h.b16 %v357
    %v643 = vunpack.c.l.b16 %v358
    %v644 = vunpack.c.l.b16 %v359
    %v645 = vunpack.c.h.b16 %v359
    %v646 = vunpack.c.l.b16 %v360
    %v647 = vunpack.c.l.b16 %v361
    %v648 = vunpack.c.h.b16 %v361
    %v649 = vunpack.c.l.b16 %v362
    %v650 = vunpack.c.l.b16 %v363
    %v651 = vunpack.c.h.b16 %v363
    %v652 = vunpack.c.l.b16 %v364
    %v653 = vunpack.c.l.b16 %v365
    %v654 = vunpack.c.h.b16 %v365
    %v655 = vunpack.c.l.b16 %v366
    %v656 = vunpack.c.l.b16 %v367
    %v657 = vunpack.c.h.b16 %v367
    %v658 = vunpack.c.l.b16 %v368
    %v659 = vunpack.c.l.b16 %v369
    %v660 = vunpack.c.h.b16 %v369
    %v661 = vunpack.c.l.b16 %v370
    %v662 = vunpack.c.l.b16 %v371
    %v663 = vunpack.c.h.b16 %v371
    %v664 = vunpack.c.l.b16 %v372
    %v665 = vunpack.c.l.b16 %v373
    %v666 = vunpack.c.h.b16 %v373
    %v667 = vunpack.c.l.b16 %v374
    %v668 = vunpack.c.l.b16 %v375
    %v669 = vunpack.c.h.b16 %v375
    %v670 = vunpack.c.l.b16 %v376
    %v671 = vunpack.c.l.b16 %v377
    %v672 = vunpack.c.h.b16 %v377
    %v673 = vunpack.c.l.b16 %v378
    %v674 = vunpack.c.l.b16 %v379
    %v675 = vunpack.c.h.b16 %v379
    %v676 = vunpack.c.l.b16 %v380
    %v677 = vunpack.c.l.b16 %v381
    %v678 = vunpack.c.h.b16 %v381
    %v679 = vunpack.c.l.b16 %v382
    %v680 = vunpack.c.l.b16 %v383
    %v681 = vunpack.c.h.b16 %v383
    %v682 = vunpack.c.l.b16 %v384
    %v683 = vunpack.c.l.b16 %v385
    %v684 = vunpack.c.h.b16 %v385
    %v685 = vunpack.c.l.b16 %v386
    %v686 = vunpack.c.l.b16 %v387
    %v687 = vunpack.c.h.b16 %v387
    %v688 = vunpack.c.l.b16 %v388
    %v689 = vunpack.c.l.b16 %v389
    %v690 = vunpack.c.h.b16 %v389
    %v691 = vunpack.c.l.b16 %v390
    %v692 = vunpack.c.l.b16 %v391
    %v693 = vunpack.c.h.b16 %v391
    %v694 = vunpack.c.l.b16 %v392
    %v695 = vunpack.c.l.b16 %v393
    %v696 = vunpack.c.h.b16 %v393
    %v697 = vunpack.c.l.b16 %v394
    %v698 = vunpack.c.l.b16 %v395
    %v699 = vunpack.c.h.b16 %v395
    %v700 = vunpack.c.l.b16 %v396
    %v701 = vunpack.c.l.b16 %v397
    %v702 = vunpack.c.h.b16 %v397
    %v703 = vunpack.c.l.b16 %v398
    %v704 = vunpack.c.l.b16 %v399
    %v705 = vunpack.c.h.b16 %v399
    %v706 = vunpack.c.l.b16 %v400
    %v707 = vunpack.c.l.b16 %v401
    %v708 = vunpack.c.h.b16 %v401
    %v709 = vunpack.c.l.b16 %v402
    %v710 = vunpack.c.l.b16 %v403
    %v711 = vunpack.c.h.b16 %v403
    %v712 = vunpack.c.l.b16 %v404
    %v713 = vunpack.c.l.b16 %v405
    %v714 = vunpack.c.h.b16 %v405
    %v715 = vunpack.c.l.b16 %v406
    %v716 = vunpack.c.l.b16 %v407
    %v717 = vunpack.c.h.b16 %v407
    %v718 = vunpack.c.l.b16 %v408
    %v719 = vunpack.c.l.b16 %v409
    %v720 = vunpack.c.h.b16 %v409
    %v721 = vunpack.c.l.b16 %v410
    %v722 = vunpack.c.l.b16 %v411
    %v723 = vunpack.c.h.b16 %v411
    %v724 = vunpack.c.l.b16 %v412
    %v725 = vunpack.c.l.b16 %v413
    %v726 = vunpack.c.h.b16 %v413
    %v727 = vunpack.c.l.b16 %v414
    %v728 = vunpack.c.l.b16 %v415
    %v729 = vunpack.c.h.b16 %v415
    %v730 = vunpack.c.l.b16 %v416
    %v731 = vunpack.c.l.b16 %v417
    %v732 = vunpack.c.h.b16 %v417
    %v733 = vunpack.c.l.b16 %v418
    %v734 = vunpack.c.l.b16 %v419
    %v735 = vunpack.c.h.b16 %v419
    %v736 = vunpack.c.l.b16 %v420
    %v737 = vunpack.c.l.b16 %v421
    %v738 = vunpack.c.h.b16 %v421
    %v739 = vunpack.c.l.b16 %v422
    %v740 = vunpack.c.l.b16 %v423
    %v741 = vunpack.c.h.b16 %v423
    %v742 = vunpack.c.l.b16 %v424
    %v743 = vunpack.c.l.b16 %v425
    %v744 = vunpack.c.h.b16 %v425
    %v745 = vunpack.c.l.b16 %v426
    %v746 = vunpack.c.l.b16 %v427
    %v747 = vunpack.c.h.b16 %v427
    %v748 = vunpack.c.l.b16 %v428
    %v749 = vunpack.c.l.b16 %v429
    %v750 = vunpack.c.h.b16 %v429
    %v751 = vunpack.c.l.b16 %v430
    %v752 = vunpack.c.l.b16 %v431
    %v753 = vunpack.c.h.b16 %v431
    %v754 = vunpack.c.l.b16 %v432
    %v755 = vunpack.c.l.b16 %v433
    %v756 = vunpack.c.h.b16 %v433
    %v757 = vunpack.c.l.b16 %v434
    %v758 = vunpack.c.l.b16 %v435
    %v759 = vunpack.c.h.b16 %v435
    %v760 = vunpack.c.l.b16 %v436
    %v761 = vunpack.c.l.b16 %v437
    %v762 = vunpack.c.h.b16 %v437
    %v763 = vunpack.c.l.b16 %v438
    %v764 = vunpack.c.l.b16 %v439
    %v765 = vunpack.c.h.b16 %v439
    %v766 = vunpack.c.l.b16 %v440
    %v767 = vunpack.c.l.b16 %v441
    %v768 = vunpack.c.h.b16 %v441
    %v769 = vunpack.c.l.b16 %v442
    %v770 = vunpack.c.l.b16 %v443
    %v771 = vunpack.c.h.b16 %v443
    %v772 = vunpack.c.l.b16 %v444
    %v773 = vunpack.c.l.b16 %v445
    %v774 = vunpack.c.h.b16 %v445
    %v775 = vunpack.c.l.b16 %v446
    %v776 = vunpack.c.l.b16 %v447
    %v777 = vunpack.c.h.b16 %v447
    %v778 = vunpack.c.l.b16 %v448
    %v779 = vunpack.c.l.b16 %v449
    %v780 = vunpack.c.h.b16 %v449
    %v781 = vunpack.c.l.b16 %v450
    %v782 = vunpack.c.l.b16 %v451
    %v783 = vunpack.c.h.b16 %v451
    %v784 = vunpack.c.l.b16 %v452
    %v785 = vunpack.c.l.b16 %v453
    %v786 = vunpack.c.h.b16 %v453
    %v787 = vunpack.c.l.b16 %v454
    %v788 = vunpack.c.l.b16 %v455
    %v789 = vunpack.c.h.b16 %v455
    %v790 = vunpack.c.l.b16 %v456
    %v791 = vunpack.c.l.b16 %v457
    %v792 = vunpack.c.h.b16 %v457
    %v793 = vunpack.c.l.b16 %v458
    %v794 = vunpack.c.l.b16 %v459
    %v795 = vunpack.c.h.b16 %v459
    %v796 = vunpack.c.l.b16 %v460
    %v797 = vunpack.c.l.b16 %v461
    %v798 = vunpack.c.h.b16 %v461
    %v799 = vunpack.c.l.b16 %v462
    %v800 = vpack.c.b16 %v611, %v608
    %v801 = vpack.c.b16 %v612, %v609
    %v802 = vpack.c.b16 %v613, %v610
    %v803 = vpack.c.b16 %v617, %v614
    %v804 = vpack.c.b16 %v618, %v615
    %v805 = vpack.c.b16 %v619, %v616
    %v806 = vpack.c.b16 %v623, %v620
    %v807 = vpack.c.b16 %v624, %v621
    %v808 = vpack.c.b16 %v625, %v622
    %v809 = vpack.c.b16 %v629, %v626
    %v810 = vpack.c.b16 %v630, %v627
    %v811 = vpack.c.b16 %v631, %v628
    %v812 = vpack.c.b16 %v635, %v632
    %v813 = vpack.c.b16 %v636, %v633
    %v814 = vpack.c.b16 %v637, %v634
    %v815 = vpack.c.b16 %v641, %v638
    %v816 = vpack.c.b16 %v642, %v639
    %v817 = vpack.c.b16 %v643, %v640
    %v818 = vpack.c.b16 %v647, %v644
    %v819 = vpack.c.b16 %v648, %v645
    %v820 = vpack.c.b16 %v649, %v646
    %v821 = vpack.c.b16 %v653, %v650
    %v822 = vpack.c.b16 %v654, %v651
    %v823 = vpack.c.b16 %v655, %v652
    %v824 = vpack.c.b16 %v659, %v656
    %v825 = vpack.c.b16 %v660, %v657
    %v826 = vpack.c.b16 %v661, %v658
    %v827 = vpack.c.b16 %v665, %v662
    %v828 = vpack.c.b16 %v666, %v663
    %v829 = vpack.c.b16 %v667, %v664
    %v830 = vpack.c.b16 %v671, %v668
    %v831 = vpack.c.b16 %v672, %v669
    %v832 = vpack.c.b16 %v673, %v670
    %v833 = vpack.c.b16 %v677, %v674
    %v834 = vpack.c.b16 %v678, %v675
    %v835 = vpack.c.b16 %v679, %v676
    %v836 = vpack.c.b16 %v683, %v680
    %v837 = vpack.c.b16 %v684, %v681
    %v838 = vpack.c.b16 %v685, %v682
    %v839 = vpack.c.b16 %v689, %v686
    %v840 = vpack.c.b16 %v690, %v687
    %v841 = vpack.c.b16 %v691, %v688
    %v842 = vpack.c.b16 %v695, %v692
    %v843 = vpack.c.b16 %v696, %v693
    %v844 = vpack.c.b16 %v697, %v694
    %v845 = vpack.c.b16 %v701, %v698
    %v846 = vpack.c.b16 %v702, %v699
    %v847 = vpack.c.b16 %v703, %v700
    %v848 = vpack.c.b16 %v707, %v704
    %v849 = vpack.c.b16 %v708, %v705
    %v850 = vpack.c.b16 %v709, %v706
    %v851 = vpack.c.b16 %v713, %v710
    %v852 = vpack.c.b16 %v714, %v711
    %v853 = vpack.c.b16 %v715, %v712
    %v854 = vpack.c.b16 %v719, %v716
    %v855 = vpack.c.b16 %v720, %v717
    %v856 = vpack.c.b16 %v721, %v718
    %v857 = vpack.c.b16 %v725, %v722
    %v858 = vpack.c.b16 %v726, %v723
    %v859 = vpack.c.b16 %v727, %v724
    %v860 = vpack.c.b16 %v731, %v728
    %v861 = vpack.c.b16 %v732, %v729
    %v862 = vpack.c.b16 %v733, %v730
    %v863 = vpack.c.b16 %v737, %v734
    %v864 = vpack.c.b16 %v738, %v735
    %v865 = vpack.c.b16 %v739, %v736
    %v866 = vpack.c.b16 %v743, %v740
    %v867 = vpack.c.b16 %v744, %v741
    %v868 = vpack.c.b16 %v745, %v742
    %v869 = vpack.c.b16 %v749, %v746
    %v870 = vpack.c.b16 %v750, %v747
    %v871 = vpack.c.b16 %v751, %v748
    %v872 = vpack.c.b16 %v755, %v752
    %v873 = vpack.c.b16 %v756, %v753
    %v874 = vpack.c.b16 %v757, %v754
    %v875 = vpack.c.b16 %v761, %v758
    %v876 = vpack.c.b16 %v762, %v759
    %v877 = vpack.c.b16 %v763, %v760
    %v878 = vpack.c.b16 %v767, %v764
    %v879 = vpack.c.b16 %v768, %v765
    %v880 = vpack.c.b16 %v769, %v766
    %v881 = vpack.c.b16 %v773, %v770
    %v882 = vpack.c.b16 %v774, %v771
    %v883 = vpack.c.b16 %v775, %v772
    %v884 = vpack.c.b16 %v779, %v776
    %v885 = vpack.c.b16 %v780, %v777
    %v886 = vpack.c.b16 %v781, %v778
    %v887 = vpack.c.b16 %v785, %v782
    %v888 = vpack.c.b16 %v786, %v783
    %v889 = vpack.c.b16 %v787, %v784
    %v890 = vpack.c.b16 %v791, %v788
    %v891 = vpack.c.b16 %v792, %v789
    %v892 = vpack.c.b16 %v793, %v790
    %v893 = vpack.c.b16 %v797, %v794
    %v894 = vpack.c.b16 %v798, %v795
    %v895 = vpack.c.b16 %v799, %v796
    %992 = vmatprep.subr.bf16.mxu0 %v801
    %993 = vmatpush1.bf16.msra.mxu0 %v800
    %994 = vmatprep.subr.bf16.mxu0 %v804
    %995 = vmatpush1.bf16.msra.mxu0 %v803
    %996 = vmatprep.subr.bf16.mxu0 %v807
    %997 = vmatpush1.bf16.msra.mxu0 %v806
    %998 = vmatprep.subr.bf16.mxu0 %v810
    %999 = vmatpush1.bf16.msra.mxu0 %v809
    %1000 = vmatprep.subr.bf16.mxu0 %v813
    %1001 = vmatpush1.bf16.msra.mxu0 %v812
    %1002 = vmatprep.subr.bf16.mxu0 %v816
    %1003 = vmatpush1.bf16.msra.mxu0 %v815
    %1004 = vmatprep.subr.bf16.mxu0 %v819
    %1005 = vmatpush1.bf16.msra.mxu0 %v818
    %1006 = vmatprep.subr.bf16.mxu0 %v822
    %1007 = vmatpush1.bf16.msra.mxu0 %v821
    %1008 = vmatprep.subr.bf16.mxu0 %v825
    %1009 = vmatpush1.bf16.msra.mxu0 %v824
    %1010 = vmatprep.subr.bf16.mxu0 %v828
    %1011 = vmatpush1.bf16.msra.mxu0 %v827
    %1012 = vmatprep.subr.bf16.mxu0 %v831
    %1013 = vmatpush1.bf16.msra.mxu0 %v830
    %1014 = vmatprep.subr.bf16.mxu0 %v834
    %1015 = vmatpush1.bf16.msra.mxu0 %v833
    %1016 = vmatprep.subr.bf16.mxu0 %v837
    %1017 = vmatpush1.bf16.msra.mxu0 %v836
    %1018 = vmatprep.subr.bf16.mxu0 %v840
    %1019 = vmatpush1.bf16.msra.mxu0 %v839
    %1020 = vmatprep.subr.bf16.mxu0 %v843
    %1021 = vmatpush1.bf16.msra.mxu0 %v842
    %1022 = vmatprep.subr.bf16.mxu0 %v846
    %1023 = vmatpush1.bf16.msra.mxu0 %v845
    %1024 = vmatprep.mubr.bf16.mxu0 %v332
    %1025 = vmatmul.mubr.bf16.gmra.mrb[0].mxu0 %v331
    %v1026 = vpop.f32.mrb[0].mxu0
    %v1027 = vadd.f32 %v468, %v1026
    %v1028 = vpop.f32.mrb[0].mxu0
    %v1029 = vadd.f32 %v472, %v1028
    %v1030 = vpop.f32.mrb[0].mxu0
    %v1031 = vpop.f32.mrb[0].mxu0
    %1032 = vdwg.mxu0
    %1033 = vmatprep.subr.bf16.mxu0 %v849
    %1034 = vmatpush1.bf16.msra.mxu0 %v848
    %1035 = vmatprep.subr.bf16.mxu0 %v852
    %1036 = vmatpush1.bf16.msra.mxu0 %v851
    %1037 = vmatprep.subr.bf16.mxu0 %v855
    %1038 = vmatpush1.bf16.msra.mxu0 %v854
    %1039 = vmatprep.subr.bf16.mxu0 %v858
    %1040 = vmatpush1.bf16.msra.mxu0 %v857
    %1041 = vmatprep.subr.bf16.mxu0 %v861
    %1042 = vmatpush1.bf16.msra.mxu0 %v860
    %1043 = vmatprep.subr.bf16.mxu0 %v864
    %1044 = vmatpush1.bf16.msra.mxu0 %v863
    %1045 = vmatprep.subr.bf16.mxu0 %v867
    %1046 = vmatpush1.bf16.msra.mxu0 %v866
    %1047 = vmatprep.subr.bf16.mxu0 %v870
    %1048 = vmatpush1.bf16.msra.mxu0 %v869
    %1049 = vmatprep.subr.bf16.mxu0 %v873
    %1050 = vmatpush1.bf16.msra.mxu0 %v872
    %1051 = vmatprep.subr.bf16.mxu0 %v876
    %1052 = vmatpush1.bf16.msra.mxu0 %v875
    %1053 = vmatprep.subr.bf16.mxu0 %v879
    %1054 = vmatpush1.bf16.msra.mxu0 %v878
    %1055 = vmatprep.subr.bf16.mxu0 %v882
    %1056 = vmatpush1.bf16.msra.mxu0 %v881
    %1057 = vmatprep.subr.bf16.mxu0 %v885
    %1058 = vmatpush1.bf16.msra.mxu0 %v884
    %1059 = vmatprep.subr.bf16.mxu0 %v888
    %1060 = vmatpush1.bf16.msra.mxu0 %v887
    %1061 = vmatprep.subr.bf16.mxu0 %v891
    %1062 = vmatpush1.bf16.msra.mxu0 %v890
    %1063 = vmatprep.subr.bf16.mxu0 %v894
    %1064 = vmatpush1.bf16.msra.mxu0 %v893
    %1065 = vmatprep.mubr.bf16.mxu0 %v334
    %1066 = vmatmul.mubr.bf16.gmra.mrb[0].mxu0 %v333
    %v1067 = vpop.f32.mrb[0].mxu0
    %v1068 = vadd.f32 %v1027, %v1067
    %v1069 = vpop.f32.mrb[0].mxu0
    %v1070 = vadd.f32 %v1029, %v1069
    %v1071 = vpop.f32.mrb[0].mxu0
    %v1072 = vpop.f32.mrb[0].mxu0
    %1073 = vdwg.mxu0
    %1074 = vmatprep.subr.bf16.mxu0 0
    %1075 = vmatpush1.bf16.msra.mxu0 %v802
    %1076 = vmatprep.subr.bf16.mxu0 0
    %1077 = vmatpush1.bf16.msra.mxu0 %v805
    %1078 = vmatprep.subr.bf16.mxu0 0
    %1079 = vmatpush1.bf16.msra.mxu0 %v808
    %1080 = vmatprep.subr.bf16.mxu0 0
    %1081 = vmatpush1.bf16.msra.mxu0 %v811
    %1082 = vmatprep.subr.bf16.mxu0 0
    %1083 = vmatpush1.bf16.msra.mxu0 %v814
    %1084 = vmatprep.subr.bf16.mxu0 0
    %1085 = vmatpush1.bf16.msra.mxu0 %v817
    %1086 = vmatprep.subr.bf16.mxu0 0
    %1087 = vmatpush1.bf16.msra.mxu0 %v820
    %1088 = vmatprep.subr.bf16.mxu0 0
    %1089 = vmatpush1.bf16.msra.mxu0 %v823
    %1090 = vmatprep.subr.bf16.mxu0 0
    %1091 = vmatpush1.bf16.msra.mxu0 %v826
    %1092 = vmatprep.subr.bf16.mxu0 0
    %1093 = vmatpush1.bf16.msra.mxu0 %v829
    %1094 = vmatprep.subr.bf16.mxu0 0
    %1095 = vmatpush1.bf16.msra.mxu0 %v832
    %1096 = vmatprep.subr.bf16.mxu0 0
    %1097 = vmatpush1.bf16.msra.mxu0 %v835
    %1098 = vmatprep.subr.bf16.mxu0 0
    %1099 = vmatpush1.bf16.msra.mxu0 %v838
    %1100 = vmatprep.subr.bf16.mxu0 0
    %1101 = vmatpush1.bf16.msra.mxu0 %v841
    %1102 = vmatprep.subr.bf16.mxu0 0
    %1103 = vmatpush1.bf16.msra.mxu0 %v844
    %1104 = vmatprep.subr.bf16.mxu0 0
    %1105 = vmatpush1.bf16.msra.mxu0 %v847
    %1106 = vmatprep.mubr.bf16.mxu0 %v332
    %1107 = vmatmul.mubr.bf16.gmra.mrb[0].mxu0 %v331
    %v1108 = vpop.f32.mrb[0].mxu0
    %v1109 = vadd.f32 %v476, %v1108
    %v1110 = vpop.f32.mrb[0].mxu0
    %v1111 = vpop.f32.mrb[0].mxu0
    %v1112 = vpop.f32.mrb[0].mxu0
    %1113 = vdwg.mxu0
    %1114 = vmatprep.subr.bf16.mxu0 0
    %1115 = vmatpush1.bf16.msra.mxu0 %v850
    %1116 = vmatprep.subr.bf16.mxu0 0
    %1117 = vmatpush1.bf16.msra.mxu0 %v853
    %1118 = vmatprep.subr.bf16.mxu0 0
    %1119 = vmatpush1.bf16.msra.mxu0 %v856
    %1120 = vmatprep.subr.bf16.mxu0 0
    %1121 = vmatpush1.bf16.msra.mxu0 %v859
    %1122 = vmatprep.subr.bf16.mxu0 0
    %1123 = vmatpush1.bf16.msra.mxu0 %v862
    %1124 = vmatprep.subr.bf16.mxu0 0
    %1125 = vmatpush1.bf16.msra.mxu0 %v865
    %1126 = vmatprep.subr.bf16.mxu0 0
    %1127 = vmatpush1.bf16.msra.mxu0 %v868
    %1128 = vmatprep.subr.bf16.mxu0 0
    %1129 = vmatpush1.bf16.msra.mxu0 %v871
    %1130 = vmatprep.subr.bf16.mxu0 0
    %1131 = vmatpush1.bf16.msra.mxu0 %v874
    %1132 = vmatprep.subr.bf16.mxu0 0
    %1133 = vmatpush1.bf16.msra.mxu0 %v877
    %1134 = vmatprep.subr.bf16.mxu0 0
    %1135 = vmatpush1.bf16.msra.mxu0 %v880
    %1136 = vmatprep.subr.bf16.mxu0 0
    %1137 = vmatpush1.bf16.msra.mxu0 %v883
    %1138 = vmatprep.subr.bf16.mxu0 0
    %1139 = vmatpush1.bf16.msra.mxu0 %v886
    %1140 = vmatprep.subr.bf16.mxu0 0
    %1141 = vmatpush1.bf16.msra.mxu0 %v889
    %1142 = vmatprep.subr.bf16.mxu0 0
    %1143 = vmatpush1.bf16.msra.mxu0 %v892
    %1144 = vmatprep.subr.bf16.mxu0 0
    %1145 = vmatpush1.bf16.msra.mxu0 %v895
    %1146 = vmatprep.mubr.bf16.mxu0 %v334
    %1147 = vmatmul.mubr.bf16.gmra.mrb[0].mxu0 %v333
    %v1148 = vpop.f32.mrb[0].mxu0
    %v1149 = vadd.f32 %v1109, %v1148
    %v1150 = vpop.f32.mrb[0].mxu0
    %v1151 = vpop.f32.mrb[0].mxu0
    %v1152 = vpop.f32.mrb[0].mxu0
    %1153 = vdwg.mxu0
    %v1157 = vcombine.low %v1068, %v1070
    %v1159 = vunpack.c.l.s4 1983009808
    %v1160 = vunpack.c.0.s8 %v1159
    %v1161 = vlaneseq
    %v1162 = vshrl.u32 %v1161, 7
    %v1163 = vsub.s32 %v1160, %v1162
    %v1164 = vrot.slane %v1157, %v1163
    %v1166 = vunpack.c.l.s4 1983009808
    %v1167 = vunpack.c.0.s8 %v1166
    %v1168 = vlaneseq
    %v1169 = vshrl.u32 %v1168, 7
    %v1170 = vsub.s32 %v1167, %v1169
    %v1171 = vrot.slane %v1149, %v1170
    %v1172 = vcombine.low %v1164, %v1171
    %1174 = vst [vmem:[%s7] sm:$0x3f] %v1172
    %vm1175 = vcmask 1041408
    %v1176 = vsel %vm1175, %v1068, -inf
    %v1177 = vsel %vm1175, %v1070, -inf
    %v1178 = vsel %vm1175, %v1149, -inf
    %v1179 = vmax.f32 %v1176, %v1177
    %v1180 = vmax.f32 %v1179, %v1178
    %1181 = vmax.xlane.f32.xlu0 %v1180
    %v1182 = vpop.xlane.xlu0 %1181
    %v1183 = vsub.f32 %v1068, %v1182
    %v1184 = vsub.f32 %v1070, %v1182
    %v1185 = vsub.f32 %v1149, %v1182
    %v1186 = vmul.f32 %v1183, 1.442695
    %v1187 = vpow.pop %v1186
    %v1188 = vmul.f32 %v1184, 1.442695
    %v1189 = vpow.pop %v1188
    %v1190 = vmul.f32 %v1185, 1.442695
    %v1191 = vpow.pop %v1190
    %v1192 = vld [vmem:[%s5] sm:$0xff]
    %v1193 = vld [vmem:[%s5 + $0x8] sm:$0xff]
    %v1194 = vld [vmem:[%s5 + $0x10] sm:$0xff]
    %v1195 = vld [vmem:[%s5 + $0x18] sm:$0xff]
    %v1196 = vld [vmem:[%s5 + $0x20] sm:$0xff]
    %v1197 = vld [vmem:[%s5 + $0x28] sm:$0xff]
    %v1198 = vld [vmem:[%s5 + $0x30] sm:$0xff]
    %v1199 = vld [vmem:[%s5 + $0x38] sm:$0xff]
    %v1200 = vld [vmem:[%s5 + $0x40] sm:$0xff]
    %v1201 = vld [vmem:[%s5 + $0x48] sm:$0xff]
    %v1202 = vld [vmem:[%s5 + $0x50] sm:$0xff]
    %v1203 = vld [vmem:[%s5 + $0x58] sm:$0xff]
    %v1204 = vld [vmem:[%s5 + $0x60] sm:$0xff]
    %v1205 = vld [vmem:[%s5 + $0x68] sm:$0xff]
    %v1206 = vld [vmem:[%s5 + $0x70] sm:$0xff]
    %v1207 = vld [vmem:[%s5 + $0x78] sm:$0xff]
    %v1208 = vld [vmem:[%s5 + $0x80] sm:$0xff]
    %v1209 = vld [vmem:[%s5 + $0x88] sm:$0xff]
    %v1210 = vld [vmem:[%s5 + $0x90] sm:$0xff]
    %v1211 = vld [vmem:[%s5 + $0x98] sm:$0xff]
    %v1212 = vld [vmem:[%s5 + $0xa0] sm:$0xff]
    %v1213 = vld [vmem:[%s5 + $0xa8] sm:$0xff]
    %v1214 = vld [vmem:[%s5 + $0xb0] sm:$0xff]
    %v1215 = vld [vmem:[%s5 + $0xb8] sm:$0xff]
    %v1216 = vld [vmem:[%s5 + $0xc0] sm:$0xff]
    %v1217 = vld [vmem:[%s5 + $0xc8] sm:$0xff]
    %v1218 = vld [vmem:[%s5 + $0xd0] sm:$0xff]
    %v1219 = vld [vmem:[%s5 + $0xd8] sm:$0xff]
    %v1220 = vld [vmem:[%s5 + $0xe0] sm:$0xff]
    %v1221 = vld [vmem:[%s5 + $0xe8] sm:$0xff]
    %v1222 = vld [vmem:[%s5 + $0xf0] sm:$0xff]
    %v1223 = vld [vmem:[%s5 + $0xf8] sm:$0xff]
    %v1224 = vld [vmem:[%s5 + $0x100] sm:$0xff]
    %v1225 = vld [vmem:[%s5 + $0x108] sm:$0xff]
    %v1226 = vld [vmem:[%s5 + $0x110] sm:$0xff]
    %v1227 = vld [vmem:[%s5 + $0x118] sm:$0xff]
    %v1228 = vld [vmem:[%s5 + $0x120] sm:$0xff]
    %v1229 = vld [vmem:[%s5 + $0x128] sm:$0xff]
    %v1230 = vld [vmem:[%s5 + $0x130] sm:$0xff]
    %v1231 = vld [vmem:[%s5 + $0x138] sm:$0xff]
    %v1232 = vld [vmem:[%s5 + $0x140] sm:$0xff]
    %v1233 = vld [vmem:[%s5 + $0x148] sm:$0xff]
    %v1234 = vld [vmem:[%s5 + $0x150] sm:$0xff]
    %v1235 = vld [vmem:[%s5 + $0x158] sm:$0xff]
    %v1236 = vld [vmem:[%s5 + $0x160] sm:$0xff]
    %v1237 = vld [vmem:[%s5 + $0x168] sm:$0xff]
    %v1238 = vld [vmem:[%s5 + $0x170] sm:$0xff]
    %v1239 = vld [vmem:[%s5 + $0x178] sm:$0xff]
    %1240 = vmatprep.subr.mxu0 0.0
    %1241 = vmatpush1.msra.mxu0 %v1192
    %1242 = vmatprep.subr.mxu0 0.0
    %1243 = vmatpush1.msra.mxu0 %v1193
    %1244 = vmatprep.subr.mxu0 0.0
    %1245 = vmatpush1.msra.mxu0 %v1194
    %1246 = vmatprep.subr.mxu0 0.0
    %1247 = vmatpush1.msra.mxu0 %v1195
    %1248 = vmatprep.subr.mxu0 0.0
    %1249 = vmatpush1.msra.mxu0 %v1196
    %1250 = vmatprep.subr.mxu0 0.0
    %1251 = vmatpush1.msra.mxu0 %v1197
    %1252 = vmatprep.subr.mxu0 0.0
    %1253 = vmatpush1.msra.mxu0 %v1198
    %1254 = vmatprep.subr.mxu0 0.0
    %1255 = vmatpush1.msra.mxu0 %v1199
    %1256 = vmatprep.subr.mxu0 0.0
    %1257 = vmatpush1.msra.mxu0 %v1200
    %1258 = vmatprep.subr.mxu0 0.0
    %1259 = vmatpush1.msra.mxu0 %v1201
    %1260 = vmatprep.subr.mxu0 0.0
    %1261 = vmatpush1.msra.mxu0 %v1202
    %1262 = vmatprep.subr.mxu0 0.0
    %1263 = vmatpush1.msra.mxu0 %v1203
    %1264 = vmatprep.subr.mxu0 0.0
    %1265 = vmatpush1.msra.mxu0 %v1204
    %1266 = vmatprep.subr.mxu0 0.0
    %1267 = vmatpush1.msra.mxu0 %v1205
    %1268 = vmatprep.subr.mxu0 0.0
    %1269 = vmatpush1.msra.mxu0 %v1206
    %1270 = vmatprep.subr.mxu0 0.0
    %1271 = vmatpush1.msra.mxu0 %v1207
    %1272 = vmatprep.subr.mxu0 0.0
    %1273 = vmatpush1.msra.mxu0 %v1208
    %1274 = vmatprep.subr.mxu0 0.0
    %1275 = vmatpush1.msra.mxu0 %v1209
    %1276 = vmatprep.subr.mxu0 0.0
    %1277 = vmatpush1.msra.mxu0 %v1210
    %1278 = vmatprep.subr.mxu0 0.0
    %1279 = vmatpush1.msra.mxu0 %v1211
    %1280 = vmatprep.subr.mxu0 0.0
    %1281 = vmatpush1.msra.mxu0 %v1212
    %1282 = vmatprep.subr.mxu0 0.0
    %1283 = vmatpush1.msra.mxu0 %v1213
    %1284 = vmatprep.subr.mxu0 0.0
    %1285 = vmatpush1.msra.mxu0 %v1214
    %1286 = vmatprep.subr.mxu0 0.0
    %1287 = vmatpush1.msra.mxu0 %v1215
    %1288 = vmatprep.subr.mxu0 0.0
    %1289 = vmatpush1.msra.mxu0 %v1216
    %1290 = vmatprep.subr.mxu0 0.0
    %1291 = vmatpush1.msra.mxu0 %v1217
    %1292 = vmatprep.subr.mxu0 0.0
    %1293 = vmatpush1.msra.mxu0 %v1218
    %1294 = vmatprep.subr.mxu0 0.0
    %1295 = vmatpush1.msra.mxu0 %v1219
    %1296 = vmatprep.subr.mxu0 0.0
    %1297 = vmatpush1.msra.mxu0 %v1220
    %1298 = vmatprep.subr.mxu0 0.0
    %1299 = vmatpush1.msra.mxu0 %v1221
    %1300 = vmatprep.subr.mxu0 0.0
    %1301 = vmatpush1.msra.mxu0 %v1222
    %1302 = vmatprep.subr.mxu0 0.0
    %1303 = vmatpush1.msra.mxu0 %v1223
    %1304 = vmatprep.mubr.f32.mxu0 %v1189
    %1305 = vmatmul.mubr.f32.gmra.mrb[0].mxu0 %v1187
    %v1306 = vpop.f32.mrb[0].mxu0
    %v1307 = vadd.f32 0.0, %v1306
    %v1308 = vpop.f32.mrb[0].mxu0
    %1309 = vdwg.mxu0
    %1310 = vmatprep.subr.mxu0 0.0
    %1311 = vmatpush1.msra.mxu0 %v1224
    %1312 = vmatprep.subr.mxu0 0.0
    %1313 = vmatpush1.msra.mxu0 %v1225
    %1314 = vmatprep.subr.mxu0 0.0
    %1315 = vmatpush1.msra.mxu0 %v1226
    %1316 = vmatprep.subr.mxu0 0.0
    %1317 = vmatpush1.msra.mxu0 %v1227
    %1318 = vmatprep.subr.mxu0 0.0
    %1319 = vmatpush1.msra.mxu0 %v1228
    %1320 = vmatprep.subr.mxu0 0.0
    %1321 = vmatpush1.msra.mxu0 %v1229
    %1322 = vmatprep.subr.mxu0 0.0
    %1323 = vmatpush1.msra.mxu0 %v1230
    %1324 = vmatprep.subr.mxu0 0.0
    %1325 = vmatpush1.msra.mxu0 %v1231
    %1326 = vmatprep.subr.mxu0 0.0
    %1327 = vmatpush1.msra.mxu0 %v1232
    %1328 = vmatprep.subr.mxu0 0.0
    %1329 = vmatpush1.msra.mxu0 %v1233
    %1330 = vmatprep.subr.mxu0 0.0
    %1331 = vmatpush1.msra.mxu0 %v1234
    %1332 = vmatprep.subr.mxu0 0.0
    %1333 = vmatpush1.msra.mxu0 %v1235
    %1334 = vmatprep.subr.mxu0 0.0
    %1335 = vmatpush1.msra.mxu0 %v1236
    %1336 = vmatprep.subr.mxu0 0.0
    %1337 = vmatpush1.msra.mxu0 %v1237
    %1338 = vmatprep.subr.mxu0 0.0
    %1339 = vmatpush1.msra.mxu0 %v1238
    %1340 = vmatprep.subr.mxu0 0.0
    %1341 = vmatpush1.msra.mxu0 %v1239
    %1342 = vmatprep.subr.mxu0 0.0
    %1343 = vmatpush1.msra.mxu0 0.0
    %1344 = vmatprep.subr.mxu0 0.0
    %1345 = vmatpush1.msra.mxu0 0.0
    %1346 = vmatprep.subr.mxu0 0.0
    %1347 = vmatpush1.msra.mxu0 0.0
    %1348 = vmatprep.subr.mxu0 0.0
    %1349 = vmatpush1.msra.mxu0 0.0
    %1350 = vmatprep.subr.mxu0 0.0
    %1351 = vmatpush1.msra.mxu0 0.0
    %1352 = vmatprep.subr.mxu0 0.0
    %1353 = vmatpush1.msra.mxu0 0.0
    %1354 = vmatprep.subr.mxu0 0.0
    %1355 = vmatpush1.msra.mxu0 0.0
    %1356 = vmatprep.subr.mxu0 0.0
    %1357 = vmatpush1.msra.mxu0 0.0
    %1358 = vmatprep.subr.mxu0 0.0
    %1359 = vmatpush1.msra.mxu0 0.0
    %1360 = vmatprep.subr.mxu0 0.0
    %1361 = vmatpush1.msra.mxu0 0.0
    %1362 = vmatprep.subr.mxu0 0.0
    %1363 = vmatpush1.msra.mxu0 0.0
    %1364 = vmatprep.subr.mxu0 0.0
    %1365 = vmatpush1.msra.mxu0 0.0
    %1366 = vmatprep.subr.mxu0 0.0
    %1367 = vmatpush1.msra.mxu0 0.0
    %1368 = vmatprep.subr.mxu0 0.0
    %1369 = vmatpush1.msra.mxu0 0.0
    %1370 = vmatprep.subr.mxu0 0.0
    %1371 = vmatpush1.msra.mxu0 0.0
    %1372 = vmatprep.subr.mxu0 0.0
    %1373 = vmatpush1.msra.mxu0 0.0
    %1374 = vmatprep.mubr.f32.mxu0 0.0
    %1375 = vmatmul.mubr.f32.gmra.mrb[0].mxu0 %v1191
    %v1376 = vpop.f32.mrb[0].mxu0
    %v1377 = vadd.f32 %v1307, %v1376
    %v1378 = vpop.f32.mrb[0].mxu0
    %1379 = vdwg.mxu0
    %v1380 = vld [vmem:[%s6] sm:$0xff]
    %v1381 = vld [vmem:[%s6 + $0x8] sm:$0xff]
    %v1382 = vld [vmem:[%s6 + $0x10] sm:$0xff]
    %v1383 = vld [vmem:[%s6 + $0x18] sm:$0xff]
    %v1384 = vld [vmem:[%s6 + $0x20] sm:$0xff]
    %v1385 = vld [vmem:[%s6 + $0x28] sm:$0xff]
    %v1386 = vld [vmem:[%s6 + $0x30] sm:$0xff]
    %v1387 = vld [vmem:[%s6 + $0x38] sm:$0xff]
    %v1388 = vld [vmem:[%s6 + $0x40] sm:$0xff]
    %v1389 = vld [vmem:[%s6 + $0x48] sm:$0xff]
    %v1390 = vld [vmem:[%s6 + $0x50] sm:$0xff]
    %v1391 = vld [vmem:[%s6 + $0x58] sm:$0xff]
    %v1392 = vld [vmem:[%s6 + $0x60] sm:$0xff]
    %v1393 = vld [vmem:[%s6 + $0x68] sm:$0xff]
    %v1394 = vld [vmem:[%s6 + $0x70] sm:$0xff]
    %v1395 = vld [vmem:[%s6 + $0x78] sm:$0xff]
    %v1396 = vld [vmem:[%s6 + $0x80] sm:$0xff]
    %v1397 = vld [vmem:[%s6 + $0x88] sm:$0xff]
    %v1398 = vld [vmem:[%s6 + $0x90] sm:$0xff]
    %v1399 = vld [vmem:[%s6 + $0x98] sm:$0xff]
    %v1400 = vld [vmem:[%s6 + $0xa0] sm:$0xff]
    %v1401 = vld [vmem:[%s6 + $0xa8] sm:$0xff]
    %v1402 = vld [vmem:[%s6 + $0xb0] sm:$0xff]
    %v1403 = vld [vmem:[%s6 + $0xb8] sm:$0xff]
    %v1404 = vld [vmem:[%s6 + $0xc0] sm:$0xff]
    %v1405 = vld [vmem:[%s6 + $0xc8] sm:$0xff]
    %v1406 = vld [vmem:[%s6 + $0xd0] sm:$0xff]
    %v1407 = vld [vmem:[%s6 + $0xd8] sm:$0xff]
    %v1408 = vld [vmem:[%s6 + $0xe0] sm:$0xff]
    %v1409 = vld [vmem:[%s6 + $0xe8] sm:$0xff]
    %v1410 = vld [vmem:[%s6 + $0xf0] sm:$0xff]
    %v1411 = vld [vmem:[%s6 + $0xf8] sm:$0xff]
    %v1412 = vld [vmem:[%s6 + $0x100] sm:$0xff]
    %v1413 = vld [vmem:[%s6 + $0x108] sm:$0xff]
    %v1414 = vld [vmem:[%s6 + $0x110] sm:$0xff]
    %v1415 = vld [vmem:[%s6 + $0x118] sm:$0xff]
    %v1416 = vld [vmem:[%s6 + $0x120] sm:$0xff]
    %v1417 = vld [vmem:[%s6 + $0x128] sm:$0xff]
    %v1418 = vld [vmem:[%s6 + $0x130] sm:$0xff]
    %v1419 = vld [vmem:[%s6 + $0x138] sm:$0xff]
    %v1420 = vld [vmem:[%s6 + $0x140] sm:$0xff]
    %v1421 = vld [vmem:[%s6 + $0x148] sm:$0xff]
    %v1422 = vld [vmem:[%s6 + $0x150] sm:$0xff]
    %v1423 = vld [vmem:[%s6 + $0x158] sm:$0xff]
    %v1424 = vld [vmem:[%s6 + $0x160] sm:$0xff]
    %v1425 = vld [vmem:[%s6 + $0x168] sm:$0xff]
    %v1426 = vld [vmem:[%s6 + $0x170] sm:$0xff]
    %v1427 = vld [vmem:[%s6 + $0x178] sm:$0xff]
    %1428 = vmatprep.subr.mxu0 0.0
    %1429 = vmatpush1.msra.mxu0 %v1380
    %1430 = vmatprep.subr.mxu0 0.0
    %1431 = vmatpush1.msra.mxu0 %v1381
    %1432 = vmatprep.subr.mxu0 0.0
    %1433 = vmatpush1.msra.mxu0 %v1382
    %1434 = vmatprep.subr.mxu0 0.0
    %1435 = vmatpush1.msra.mxu0 %v1383
    %1436 = vmatprep.subr.mxu0 0.0
    %1437 = vmatpush1.msra.mxu0 %v1384
    %1438 = vmatprep.subr.mxu0 0.0
    %1439 = vmatpush1.msra.mxu0 %v1385
    %1440 = vmatprep.subr.mxu0 0.0
    %1441 = vmatpush1.msra.mxu0 %v1386
    %1442 = vmatprep.subr.mxu0 0.0
    %1443 = vmatpush1.msra.mxu0 %v1387
    %1444 = vmatprep.subr.mxu0 0.0
    %1445 = vmatpush1.msra.mxu0 %v1388
    %1446 = vmatprep.subr.mxu0 0.0
    %1447 = vmatpush1.msra.mxu0 %v1389
    %1448 = vmatprep.subr.mxu0 0.0
    %1449 = vmatpush1.msra.mxu0 %v1390
    %1450 = vmatprep.subr.mxu0 0.0
    %1451 = vmatpush1.msra.mxu0 %v1391
    %1452 = vmatprep.subr.mxu0 0.0
    %1453 = vmatpush1.msra.mxu0 %v1392
    %1454 = vmatprep.subr.mxu0 0.0
    %1455 = vmatpush1.msra.mxu0 %v1393
    %1456 = vmatprep.subr.mxu0 0.0
    %1457 = vmatpush1.msra.mxu0 %v1394
    %1458 = vmatprep.subr.mxu0 0.0
    %1459 = vmatpush1.msra.mxu0 %v1395
    %1460 = vmatprep.subr.mxu0 0.0
    %1461 = vmatpush1.msra.mxu0 %v1396
    %1462 = vmatprep.subr.mxu0 0.0
    %1463 = vmatpush1.msra.mxu0 %v1397
    %1464 = vmatprep.subr.mxu0 0.0
    %1465 = vmatpush1.msra.mxu0 %v1398
    %1466 = vmatprep.subr.mxu0 0.0
    %1467 = vmatpush1.msra.mxu0 %v1399
    %1468 = vmatprep.subr.mxu0 0.0
    %1469 = vmatpush1.msra.mxu0 %v1400
    %1470 = vmatprep.subr.mxu0 0.0
    %1471 = vmatpush1.msra.mxu0 %v1401
    %1472 = vmatprep.subr.mxu0 0.0
    %1473 = vmatpush1.msra.mxu0 %v1402
    %1474 = vmatprep.subr.mxu0 0.0
    %1475 = vmatpush1.msra.mxu0 %v1403
    %1476 = vmatprep.subr.mxu0 0.0
    %1477 = vmatpush1.msra.mxu0 %v1404
    %1478 = vmatprep.subr.mxu0 0.0
    %1479 = vmatpush1.msra.mxu0 %v1405
    %1480 = vmatprep.subr.mxu0 0.0
    %1481 = vmatpush1.msra.mxu0 %v1406
    %1482 = vmatprep.subr.mxu0 0.0
    %1483 = vmatpush1.msra.mxu0 %v1407
    %1484 = vmatprep.subr.mxu0 0.0
    %1485 = vmatpush1.msra.mxu0 %v1408
    %1486 = vmatprep.subr.mxu0 0.0
    %1487 = vmatpush1.msra.mxu0 %v1409
    %1488 = vmatprep.subr.mxu0 0.0
    %1489 = vmatpush1.msra.mxu0 %v1410
    %1490 = vmatprep.subr.mxu0 0.0
    %1491 = vmatpush1.msra.mxu0 %v1411
    %1492 = vmatprep.mubr.f32.mxu0 %v1189
    %1493 = vmatmul.mubr.f32.gmra.mrb[0].mxu0 %v1187
    %v1494 = vpop.f32.mrb[0].mxu0
    %v1495 = vadd.f32 0.0, %v1494
    %v1496 = vpop.f32.mrb[0].mxu0
    %1497 = vdwg.mxu0
    %1498 = vmatprep.subr.mxu0 0.0
    %1499 = vmatpush1.msra.mxu0 %v1412
    %1500 = vmatprep.subr.mxu0 0.0
    %1501 = vmatpush1.msra.mxu0 %v1413
    %1502 = vmatprep.subr.mxu0 0.0
    %1503 = vmatpush1.msra.mxu0 %v1414
    %1504 = vmatprep.subr.mxu0 0.0
    %1505 = vmatpush1.msra.mxu0 %v1415
    %1506 = vmatprep.subr.mxu0 0.0
    %1507 = vmatpush1.msra.mxu0 %v1416
    %1508 = vmatprep.subr.mxu0 0.0
    %1509 = vmatpush1.msra.mxu0 %v1417
    %1510 = vmatprep.subr.mxu0 0.0
    %1511 = vmatpush1.msra.mxu0 %v1418
    %1512 = vmatprep.subr.mxu0 0.0
    %1513 = vmatpush1.msra.mxu0 %v1419
    %1514 = vmatprep.subr.mxu0 0.0
    %1515 = vmatpush1.msra.mxu0 %v1420
    %1516 = vmatprep.subr.mxu0 0.0
    %1517 = vmatpush1.msra.mxu0 %v1421
    %1518 = vmatprep.subr.mxu0 0.0
    %1519 = vmatpush1.msra.mxu0 %v1422
    %1520 = vmatprep.subr.mxu0 0.0
    %1521 = vmatpush1.msra.mxu0 %v1423
    %1522 = vmatprep.subr.mxu0 0.0
    %1523 = vmatpush1.msra.mxu0 %v1424
    %1524 = vmatprep.subr.mxu0 0.0
    %1525 = vmatpush1.msra.mxu0 %v1425
    %1526 = vmatprep.subr.mxu0 0.0
    %1527 = vmatpush1.msra.mxu0 %v1426
    %1528 = vmatprep.subr.mxu0 0.0
    %1529 = vmatpush1.msra.mxu0 %v1427
    %1530 = vmatprep.subr.mxu0 0.0
    %1531 = vmatpush1.msra.mxu0 0.0
    %1532 = vmatprep.subr.mxu0 0.0
    %1533 = vmatpush1.msra.mxu0 0.0
    %1534 = vmatprep.subr.mxu0 0.0
    %1535 = vmatpush1.msra.mxu0 0.0
    %1536 = vmatprep.subr.mxu0 0.0
    %1537 = vmatpush1.msra.mxu0 0.0
    %1538 = vmatprep.subr.mxu0 0.0
    %1539 = vmatpush1.msra.mxu0 0.0
    %1540 = vmatprep.subr.mxu0 0.0
    %1541 = vmatpush1.msra.mxu0 0.0
    %1542 = vmatprep.subr.mxu0 0.0
    %1543 = vmatpush1.msra.mxu0 0.0
    %1544 = vmatprep.subr.mxu0 0.0
    %1545 = vmatpush1.msra.mxu0 0.0
    %1546 = vmatprep.subr.mxu0 0.0
    %1547 = vmatpush1.msra.mxu0 0.0
    %1548 = vmatprep.subr.mxu0 0.0
    %1549 = vmatpush1.msra.mxu0 0.0
    %1550 = vmatprep.subr.mxu0 0.0
    %1551 = vmatpush1.msra.mxu0 0.0
    %1552 = vmatprep.subr.mxu0 0.0
    %1553 = vmatpush1.msra.mxu0 0.0
    %1554 = vmatprep.subr.mxu0 0.0
    %1555 = vmatpush1.msra.mxu0 0.0
    %1556 = vmatprep.subr.mxu0 0.0
    %1557 = vmatpush1.msra.mxu0 0.0
    %1558 = vmatprep.subr.mxu0 0.0
    %1559 = vmatpush1.msra.mxu0 0.0
    %1560 = vmatprep.subr.mxu0 0.0
    %1561 = vmatpush1.msra.mxu0 0.0
    %1562 = vmatprep.mubr.f32.mxu0 0.0
    %1563 = vmatmul.mubr.f32.gmra.mrb[0].mxu0 %v1191
    %v1564 = vpop.f32.mrb[0].mxu0
    %v1565 = vadd.f32 %v1495, %v1564
    %v1566 = vpop.f32.mrb[0].mxu0
    %1567 = vdwg.mxu0
    %v1568 = vrcp.pop %v1565
    %v1569 = vmul.f32 %v1377, %v1568
    %1570 = vst [vmem:[#allocation2] sm:$0x3] %v1569
    // Predicated region
    $region30: #{_lambda_.7} parent=1 // pred_check
      _
    $region31: #{_lambda_.7} parent=1 // pred_check_branch
      %1572 = sbr.rel (0) target = $region33
    $region32: #{_lambda_.7} parent=1 // pred_region
      _
    $region33: #{_lambda_.7} parent=1 // pred_fallthru
      _
    // Predicated region
    $region34: #{_lambda_.7} parent=1 // pred_check
      _
    $region35: #{_lambda_.7} parent=1 // pred_check_branch
      %1574 = sbr.rel (0) target = $region37
    $region36: #{_lambda_.7} parent=1 // pred_region
      %s1576 = ssub.s32 32, 32
      %1577 = vsyncadd [#allocation3], %s1576
      %s1579 = sshll.u32 [#allocation2], 4
      %s1580 = int_to_ptr.vmem [resolvable:$true] %s1579
      %1582 = dma.vmem_to_hbm [thread:$0]  %s1580, 32, %s8, [#allocation3]
    $region37: #{_lambda_.7} parent=1 // pred_fallthru
      _
    // Predicated region
    $region38: #{_lambda_.7} parent=1 // pred_check
      _
    $region39: #{_lambda_.7} parent=1 // pred_check_branch
      %1584 = sbr.rel (0) target = $region41
    $region40: #{_lambda_.7} parent=1 // pred_region
      _
    $region41: #{_lambda_.7} parent=1 // pred_fallthru
      _
    // Predicated region
    $region42: #{_lambda_.7} parent=1 // pred_check
      _
    $region43: #{_lambda_.7} parent=1 // pred_check_branch
      %1586 = sbr.rel (0) target = $region45
    $region44: #{_lambda_.7} parent=1 // pred_region
      %1587 = dma.done [#allocation3], 32
    $region45: #{_lambda_.7} parent=1 // pred_fallthru
      _
    %1588 = vsyncpa [#allocation3], 1

</llo_original>
